<compile_context>
chip_gen: v7x
topology: tpu7x:2x2x1
jax: 0.10.0
libtpu: 0.0.40
codegen_flags: <defaults>
</compile_context>

<pallas_src>
import functools
import numpy as np
import jax
import jax.numpy as jnp
from jax.experimental import pallas as pl
from jax.experimental.pallas import tpu as pltpu


def _round_up(x, m):
  return ((x + m - 1) // m) * m


# ----------------------------------------------------------------------------
# Pallas kernel: full SRGNN compute for one batch tile
# ----------------------------------------------------------------------------
def srgnn_kernel(
    a_in_ref, a_out_ref, h0_ref, alias_ref, last_ref, mask_ref,
    we_ref, be_ref, biah_ref, boah_ref,
    wih_in_ref, wih_out_ref, bih_ref, whh_ref, bhh_ref,
    w1_ref, b1_ref, w2_ref, b2_ref, w3_ref, b3_ref,
    wta_ref, wth_ref, bt_ref,
    seqh_out_ref, pred_out_ref, *, n_steps, hp):

  # --- read everything once (weights are grid-resident VMEM blocks) ---------
  A_in = a_in_ref[...]                      # (TB, N, N)
  A_out = a_out_ref[...]                    # (TB, N, N)
  hidden = h0_ref[...]                      # (TB, N, Hp)
  TB, N, H = hidden.shape
  L = alias_ref.shape[1]

  w_e = we_ref[...]; b_e = be_ref[...]                      # (2Hp,Hp), (1,2Hp)
  b_iah = biah_ref[...]; b_oah = boah_ref[...]              # (1,Hp)
  wih_in = wih_in_ref[...]; wih_out = wih_out_ref[...]      # (3Hp,Hp)
  b_ih = bih_ref[...]; whh = whh_ref[...]; b_hh = bhh_ref[...]
  w1 = w1_ref[...]; b1 = b1_ref[...]
  w2 = w2_ref[...]; b2 = b2_ref[...]
  w3 = w3_ref[...]; b3 = b3_ref[...]
  wta = wta_ref[...]; wth = wth_ref[...]; bt = bt_ref[...]

  def matT(x, w):
    # F.linear without bias: x (M, K), w (Nout, K) -> (M, Nout), one MXU matmul
    return jax.lax.dot_general(
        x, w, (((1,), (1,)), ((), ())), preferred_element_type=jnp.float32)

  hid2 = hidden.reshape(TB * N, H)          # tile-aligned -> free view

  for _ in range(n_steps):                  # GNN.step (static unroll)
    # fused edge-in / edge-out linear: one (.,2Hp)-wide matmul
    eh = matT(hid2, w_e) + b_e                                 # (TB*N, 2Hp)
    eh_in = eh[:, :hp].reshape(TB, N, H)
    eh_out = eh[:, hp:].reshape(TB, N, H)
    inp_in = (jnp.einsum('bnm,bmh->bnh', A_in, eh_in,
                         preferred_element_type=jnp.float32)
              + b_iah).reshape(TB * N, H)
    inp_out = (jnp.einsum('bnm,bmh->bnh', A_out, eh_out,
                          preferred_element_type=jnp.float32)
               + b_oah).reshape(TB * N, H)
    # fused gate matmuls: gi / gh each produce all three gates (3Hp wide)
    gi = matT(inp_in, wih_in) + matT(inp_out, wih_out) + b_ih  # (TB*N, 3Hp)
    gh = matT(hid2, whh) + b_hh                                # (TB*N, 3Hp)
    resetgate = jax.nn.sigmoid(gi[:, :hp] + gh[:, :hp])
    inputgate = jax.nn.sigmoid(gi[:, hp:2 * hp] + gh[:, hp:2 * hp])
    newgate = jnp.tanh(gi[:, 2 * hp:] + resetgate * gh[:, 2 * hp:])
    hid2 = newgate + inputgate * (hid2 - newgate)

  hidden = hid2.reshape(TB, N, H)

  # torch.gather(hidden, 1, alias) / get_last_item as one-hot matmuls (MXU)
  # TODO(synk): for large N/L replace one-hots with scalar-prefetched integer
  #             gathers to cut the (B,L,N) HBM traffic further.
  seq_hidden = jnp.einsum('bln,bnh->blh', alias_ref[...], hidden,
                          preferred_element_type=jnp.float32)     # (TB, L, Hp)
  ht = jnp.einsum('bol,blh->boh', last_ref[...], seq_hidden,
                  preferred_element_type=jnp.float32)[:, 0, :]    # (TB, Hp)

  # attention readout
  q1 = matT(ht, w1) + b1                                          # (TB, Hp)
  sh2 = seq_hidden.reshape(TB * L, H)
  q2 = (matT(sh2, w2) + b2).reshape(TB, L, H)
  s = jax.nn.sigmoid(q1[:, None, :] + q2)
  alp = (matT(s.reshape(TB * L, H), w3) + b3).reshape(TB, L, H)
  a = jnp.sum(alp * seq_hidden * mask_ref[...], axis=1)           # (TB, Hp)
  # linear_transform(cat([a, ht])) split into two matmuls (avoids concat)
  pred = matT(a, wta) + matT(ht, wth) + bt                        # (TB, Hp)

  seqh_out_ref[...] = seq_hidden
  pred_out_ref[...] = pred[:, None, :]


# ----------------------------------------------------------------------------
# Host-side glue: _get_slice (numpy, identical semantics to the torch code,
# except alias is always padded to seq_len so the mask broadcast is defined)
# ----------------------------------------------------------------------------
def get_slice(seqs_np, n_items):
  mask = (seqs_np > 0)
  max_n_nodes = seqs_np.shape[1]
  alias_inputs, A_list, items_list = [], [], []
  for seq in seqs_np:
    valid_idx = np.where(seq > 0)[0]
    if len(valid_idx) == 0:
      A_list.append(np.zeros((max_n_nodes, 2 * max_n_nodes), np.float32))
      items_list.append([0] * max_n_nodes)
      alias_inputs.append([0])
      continue
    node = np.unique(seq[valid_idx])
    node = np.clip(node, 0, n_items - 1)
    u_A = np.zeros((max_n_nodes, max_n_nodes), np.float32)
    for i in range(len(valid_idx) - 1):
      cur_item, nxt_item = seq[valid_idx[i]], seq[valid_idx[i + 1]]
      u_c = np.where(node == cur_item)[0]
      v_c = np.where(node == nxt_item)[0]
      if len(u_c) == 0 or len(v_c) == 0:
        continue
      u_A[u_c[0]][v_c[0]] = 1
    u_sum_in = np.sum(u_A, axis=0); u_sum_in[u_sum_in == 0] = 1
    u_A_in = u_A / u_sum_in
    u_sum_out = np.sum(u_A, axis=1); u_sum_out[u_sum_out == 0] = 1
    u_A_out = (u_A.T / u_sum_out).T
    A_list.append(np.concatenate([u_A_in, u_A_out], axis=0).T)
    items_list.append(list(node) + [0] * (max_n_nodes - len(node)))
    alias = []
    for idx_ in valid_idx:
      cand = np.where(node == seq[idx_])[0]
      alias.append(int(cand[0]) if len(cand) > 0 else 0)
    alias_inputs.append(alias)
  # pad alias to seq_len (robust: torch original assumes max_alias_len==seq_len)
  for i in range(len(alias_inputs)):
    if len(alias_inputs[i]) < max_n_nodes:
      alias_inputs[i] = alias_inputs[i] + [0] * (max_n_nodes - len(alias_inputs[i]))
  return (np.array(alias_inputs, np.int32),
          np.stack(A_list).astype(np.float32),
          np.array(items_list, np.int32),
          mask.astype(np.float32))


def mask_correlated_samples(batch_size):
  # Mirrors VICReg.__init__ (not used in forward).
  N = 2 * batch_size
  m = np.ones((N, N), dtype=bool)
  np.fill_diagonal(m, False)
  for i in range(batch_size):
    m[i, batch_size + i] = False
    m[batch_size + i, i] = False
  return m


# ----------------------------------------------------------------------------
# Parameters (deterministic, matches SRGNN._init_weights: U(-stdv, stdv))
# ----------------------------------------------------------------------------
def init_params(key, n_items, H):
  stdv = 1.0 / np.sqrt(H)
  shapes = {
      'emb': (n_items, H),
      'w_ih': (3 * H, 2 * H), 'w_hh': (3 * H, H),
      'b_ih': (3 * H,), 'b_hh': (3 * H,), 'b_iah': (H,), 'b_oah': (H,),
      'w_ein': (H, H), 'b_ein': (H,), 'w_eout': (H, H), 'b_eout': (H,),
      'w1': (H, H), 'b1': (H,), 'w2': (H, H), 'b2': (H,),
      'w3': (H, H), 'b3': (H,), 'wt': (H, 2 * H), 'bt': (H,),
  }
  keys = jax.random.split(key, len(shapes))
  return {name: jax.random.uniform(k, shp, jnp.float32, -stdv, stdv)
          for k, (name, shp) in zip(keys, shapes.items())}


# ----------------------------------------------------------------------------
# Wrapper: pads/packs inputs+weights and calls pallas_call with a batch grid
# ----------------------------------------------------------------------------
def vicreg_forward(params, seqs_np, lengths_np, n_items, H, n_steps, block_b=8):
  alias, A, items, mask = get_slice(seqs_np, n_items)
  B, L = alias.shape                      # L == seq_len (alias padded)
  N = items.shape[1]                      # == seq_len as well

  Hp = _round_up(max(H, 1), 128)          # lane-dense hidden size
  Np = _round_up(N, 8)                    # sublane-aligned node count
  Lp = _round_up(L, 8)                    # sublane-aligned seq length
  TB = max(1, min(block_b, B))            # batch tile
  Bp = _round_up(B, TB)
  n_grid = Bp // TB

  # ---- pad batch-dependent numpy arrays --------------------------------------
  def pad_to(x, shape, dtype):
    out = np.zeros(shape, dtype)
    out[tuple(slice(0, s) for s in x.shape)] = x
    return out

  alias_p = pad_to(alias, (Bp, Lp), np.int32)
  items_p = pad_to(items, (Bp, Np), np.int32)
  mask_p = pad_to(mask, (Bp, Lp), np.float32)
  A_in_np = pad_to(A[:, :, :N], (Bp, Np, Np), np.float32)
  A_out_np = pad_to(A[:, :, N:], (Bp, Np, Np), np.float32)
  lengths_p = np.ones((Bp,), np.int32)
  lengths_p[:B] = np.asarray(lengths_np, np.int32)

  hidden0 = jnp.take(params['emb'], jnp.asarray(items_p), axis=0)       # (Bp,Np,H)
  hidden0 = jnp.pad(hidden0, ((0, 0), (0, 0), (0, Hp - H)))             # (Bp,Np,Hp)
  alias_oh = jax.nn.one_hot(jnp.asarray(alias_p), Np, dtype=jnp.float32)  # (Bp,Lp,Np)
  last_oh = jax.nn.one_hot(jnp.asarray(lengths_p) - 1, Lp,
                           dtype=jnp.float32)[:, None, :]               # (Bp,1,Lp)
  mask_j = jnp.asarray(mask_p)[:, :, None]                              # (Bp,Lp,1)
  A_in_j = jnp.asarray(A_in_np)
  A_out_j = jnp.asarray(A_out_np)

  # ---- pad / fuse weights (zero-padding is exact for this graph) -------------
  def pad2(w, rows, cols):
    return jnp.zeros((rows, cols), jnp.float32).at[:w.shape[0], :w.shape[1]].set(w)

  def pad1(b, cols):
    return jnp.zeros((1, cols), jnp.float32).at[0, :b.shape[0]].set(b)

  # fused edge-in|edge-out linear
  we_p = (jnp.zeros((2 * Hp, Hp), jnp.float32)
          .at[:H, :H].set(params['w_ein'])
          .at[Hp:Hp + H, :H].set(params['w_eout']))
  be_p = (jnp.zeros((1, 2 * Hp), jnp.float32)
          .at[0, :H].set(params['b_ein'])
          .at[0, Hp:Hp + H].set(params['b_eout']))
  biah_p = pad1(params['b_iah'], Hp)
  boah_p = pad1(params['b_oah'], Hp)

  # fused 3-gate weights (per-gate blocks padded to Hp so lane slicing works)
  w_ih, w_hh = params['w_ih'], params['w_hh']
  wih_in_p = jnp.zeros((3 * Hp, Hp), jnp.float32)
  wih_out_p = jnp.zeros((3 * Hp, Hp), jnp.float32)
  whh_p = jnp.zeros((3 * Hp, Hp), jnp.float32)
  bih_p = jnp.zeros((1, 3 * Hp), jnp.float32)
  bhh_p = jnp.zeros((1, 3 * Hp), jnp.float32)
  for g in range(3):
    wih_in_p = wih_in_p.at[g * Hp:g * Hp + H, :H].set(w_ih[g * H:(g + 1) * H, :H])
    wih_out_p = wih_out_p.at[g * Hp:g * Hp + H, :H].set(w_ih[g * H:(g + 1) * H, H:])
    whh_p = whh_p.at[g * Hp:g * Hp + H, :H].set(w_hh[g * H:(g + 1) * H, :])
    bih_p = bih_p.at[0, g * Hp:g * Hp + H].set(params['b_ih'][g * H:(g + 1) * H])
    bhh_p = bhh_p.at[0, g * Hp:g * Hp + H].set(params['b_hh'][g * H:(g + 1) * H])

  w1_p, b1_p = pad2(params['w1'], Hp, Hp), pad1(params['b1'], Hp)
  w2_p, b2_p = pad2(params['w2'], Hp, Hp), pad1(params['b2'], Hp)
  w3_p, b3_p = pad2(params['w3'], Hp, Hp), pad1(params['b3'], Hp)
  wta_p = pad2(params['wt'][:, :H], Hp, Hp)
  wth_p = pad2(params['wt'][:, H:], Hp, Hp)
  bt_p = pad1(params['bt'], Hp)

  batch_args = [A_in_j, A_out_j, hidden0, alias_oh, last_oh, mask_j]
  weight_args = [we_p, be_p, biah_p, boah_p,
                 wih_in_p, wih_out_p, bih_p, whh_p, bhh_p,
                 w1_p, b1_p, w2_p, b2_p, w3_p, b3_p,
                 wta_p, wth_p, bt_p]

  def bspec(shape):
    nd = len(shape)
    return pl.BlockSpec((TB,) + tuple(int(s) for s in shape[1:]),
                        lambda b, nd=nd: (b,) + (0,) * (nd - 1))

  def wspec(shape):
    nd = len(shape)
    return pl.BlockSpec(tuple(int(s) for s in shape),
                        lambda b, nd=nd: (0,) * nd)

  in_specs = ([bspec(a.shape) for a in batch_args]
              + [wspec(a.shape) for a in weight_args])
  out_specs = (pl.BlockSpec((TB, Lp, Hp), lambda b: (b, 0, 0)),
               pl.BlockSpec((TB, 1, Hp), lambda b: (b, 0, 0)))
  out_shape = (jax.ShapeDtypeStruct((Bp, Lp, Hp), jnp.float32),
               jax.ShapeDtypeStruct((Bp, 1, Hp), jnp.float32))

  # advisory cost estimate (helps XLA schedule around the custom call)
  flops_gnn = Bp * n_steps * (22 * Np * Hp * Hp + 4 * Np * Np * Hp)
  flops_read = Bp * (2 * Lp * Np * Hp + 2 * Lp * Hp + (6 + 4 * Lp) * Hp * Hp)
  transc = Bp * (3 * n_steps * Np * Hp + Lp * Hp)
  bytes_acc = (sum(int(np.prod(a.shape)) for a in batch_args + weight_args)
               + Bp * Lp * Hp + Bp * Hp) * 4
  cost = pl.CostEstimate(flops=int(flops_gnn + flops_read),
                         transcendentals=int(transc),
                         bytes_accessed=int(bytes_acc))

  seq_hidden_p, pred_p = pl.pallas_call(
      functools.partial(srgnn_kernel, n_steps=n_steps, hp=Hp),
      grid=(n_grid,),
      in_specs=in_specs,
      out_specs=out_specs,
      out_shape=out_shape,
      compiler_params=pltpu.CompilerParams(
          dimension_semantics=("parallel",),
          vmem_limit_bytes=32 * 1024 * 1024),
      cost_estimate=cost,
  )(*batch_args, *weight_args)

  # strip batch / seq / feature padding
  return seq_hidden_p[:B, :L, :H], pred_p[:B, 0, :H]


# ----------------------------------------------------------------------------
# Pure-JAX reference (mirrors the PyTorch forward) for verification
# ----------------------------------------------------------------------------
def reference_forward(params, seqs_np, lengths_np, n_items, H, n_steps):
  alias, A, items, mask = get_slice(seqs_np, n_items)
  hidden = params['emb'][jnp.asarray(items)]
  B, N, _ = hidden.shape
  A = jnp.asarray(A)
  A_in, A_out = A[:, :, :N], A[:, :, N:]
  for _ in range(n_steps):
    eh_in = hidden @ params['w_ein'].T + params['b_ein']
    eh_out = hidden @ params['w_eout'].T + params['b_eout']
    input_in = jnp.einsum('bnm,bmh->bnh', A_in, eh_in) + params['b_iah']
    input_out = jnp.einsum('bnm,bmh->bnh', A_out, eh_out) + params['b_oah']
    inputs = jnp.concatenate([input_in, input_out], axis=2)
    gi = inputs @ params['w_ih'].T + params['b_ih']
    gh = hidden @ params['w_hh'].T + params['b_hh']
    i_r, i_i, i_n = jnp.split(gi, 3, axis=2)
    h_r, h_i, h_n = jnp.split(gh, 3, axis=2)
    resetgate = jax.nn.sigmoid(i_r + h_r)
    inputgate = jax.nn.sigmoid(i_i + h_i)
    newgate = jnp.tanh(i_n + resetgate * h_n)
    hidden = newgate + inputgate * (hidden - newgate)
  alias_j = jnp.asarray(alias)
  seq_hidden = hidden[jnp.arange(B)[:, None], alias_j]
  ht = seq_hidden[jnp.arange(B), jnp.asarray(lengths_np) - 1]
  q1 = (ht @ params['w1'].T + params['b1'])[:, None, :]
  q2 = seq_hidden @ params['w2'].T + params['b2']
  alp = jax.nn.sigmoid(q1 + q2) @ params['w3'].T + params['b3']
  a = jnp.sum(alp * seq_hidden * jnp.asarray(mask)[:, :, None], axis=1)
  pred = jnp.concatenate([a, ht], axis=1) @ params['wt'].T + params['bt']
  return seq_hidden, pred


if __name__ == "__main__":
  # small, deterministic setup
  n_items = 16
  H = 32              # hidden_size
  n_layers = 1        # GNN steps
  seq_len = 8

  seqs = np.array([[3, 7, 3, 9, 12, 5, 7, 2],
                   [4, 4, 11, 6, 2, 0, 0, 0],
                   [1, 5, 5, 9, 0, 0, 0, 0],
                   [2, 8, 14, 3, 6, 10, 0, 0]], dtype=np.int64)
  lengths = np.array([8, 5, 4, 6], dtype=np.int32)
  B = seqs.shape[0]

  params = init_params(jax.random.PRNGKey(0), n_items, H)
  _ = mask_correlated_samples(batch_size=B)   # init-time artifact, unused in forward

  # block_b=2 -> grid of 2 batch tiles (exercises pipelining / megacore path)
  seq_hidden, seq_output = vicreg_forward(params, seqs, lengths, n_items, H,
                                          n_layers, block_b=2)
  jax.block_until_ready((seq_hidden, seq_output))

  # sanity check vs pure-JAX reference (full-precision matmuls)
  with jax.default_matmul_precision("highest"):
    ref_hidden, ref_output = reference_forward(params, seqs, lengths,
                                               n_items, H, n_layers)
    jax.block_until_ready((ref_hidden, ref_output))

  np.testing.assert_allclose(np.asarray(seq_hidden), np.asarray(ref_hidden),
                             rtol=1e-3, atol=1e-3)
  np.testing.assert_allclose(np.asarray(seq_output), np.asarray(ref_output),
                             rtol=1e-3, atol=1e-3)

  print("KERNEL_OK")
</pallas_src>

<mosaic_0001>
module attributes {stable_mosaic.version = 11 : i64} {
  func.func @srgnn_kernel(%arg0: i32, %arg1: memref<2x8x8xf32, #tpu.memory_space<vmem>>, %arg2: memref<2x8x8xf32, #tpu.memory_space<vmem>>, %arg3: memref<2x8x128xf32, #tpu.memory_space<vmem>>, %arg4: memref<2x8x8xf32, #tpu.memory_space<vmem>>, %arg5: memref<2x1x8xf32, #tpu.memory_space<vmem>>, %arg6: memref<2x8x1xf32, #tpu.memory_space<vmem>>, %arg7: memref<256x128xf32, #tpu.memory_space<vmem>>, %arg8: memref<1x256xf32, #tpu.memory_space<vmem>>, %arg9: memref<1x128xf32, #tpu.memory_space<vmem>>, %arg10: memref<1x128xf32, #tpu.memory_space<vmem>>, %arg11: memref<384x128xf32, #tpu.memory_space<vmem>>, %arg12: memref<384x128xf32, #tpu.memory_space<vmem>>, %arg13: memref<1x384xf32, #tpu.memory_space<vmem>>, %arg14: memref<384x128xf32, #tpu.memory_space<vmem>>, %arg15: memref<1x384xf32, #tpu.memory_space<vmem>>, %arg16: memref<128x128xf32, #tpu.memory_space<vmem>>, %arg17: memref<1x128xf32, #tpu.memory_space<vmem>>, %arg18: memref<128x128xf32, #tpu.memory_space<vmem>>, %arg19: memref<1x128xf32, #tpu.memory_space<vmem>>, %arg20: memref<128x128xf32, #tpu.memory_space<vmem>>, %arg21: memref<1x128xf32, #tpu.memory_space<vmem>>, %arg22: memref<128x128xf32, #tpu.memory_space<vmem>>, %arg23: memref<128x128xf32, #tpu.memory_space<vmem>>, %arg24: memref<1x128xf32, #tpu.memory_space<vmem>>, %arg25: memref<2x8x128xf32, #tpu.memory_space<vmem>>, %arg26: memref<2x1x128xf32, #tpu.memory_space<vmem>>) attributes {dimension_semantics = [#tpu.dimension_semantics<parallel>], iteration_bounds = array<i64: 2>, scalar_prefetch = 0 : i64, scratch_operands = 0 : i64, tpu.core_type = #tpu.core_type<tc>, window_params = [{transform_indices = @transform_0, window_bounds = array<i64: 2, 8, 8>}, {transform_indices = @transform_1, window_bounds = array<i64: 2, 8, 8>}, {transform_indices = @transform_2, window_bounds = array<i64: 2, 8, 128>}, {transform_indices = @transform_3, window_bounds = array<i64: 2, 8, 8>}, {transform_indices = @transform_4, window_bounds = array<i64: 2, 1, 8>}, {transform_indices = @transform_5, window_bounds = array<i64: 2, 8, 1>}, {pipeline_mode = #tpu.pipeline_mode<synchronous>, transform_indices = @transform_6, window_bounds = array<i64: 256, 128>}, {pipeline_mode = #tpu.pipeline_mode<synchronous>, transform_indices = @transform_7, window_bounds = array<i64: 1, 256>}, {pipeline_mode = #tpu.pipeline_mode<synchronous>, transform_indices = @transform_8, window_bounds = array<i64: 1, 128>}, {pipeline_mode = #tpu.pipeline_mode<synchronous>, transform_indices = @transform_9, window_bounds = array<i64: 1, 128>}, {pipeline_mode = #tpu.pipeline_mode<synchronous>, transform_indices = @transform_10, window_bounds = array<i64: 384, 128>}, {pipeline_mode = #tpu.pipeline_mode<synchronous>, transform_indices = @transform_11, window_bounds = array<i64: 384, 128>}, {pipeline_mode = #tpu.pipeline_mode<synchronous>, transform_indices = @transform_12, window_bounds = array<i64: 1, 384>}, {pipeline_mode = #tpu.pipeline_mode<synchronous>, transform_indices = @transform_13, window_bounds = array<i64: 384, 128>}, {pipeline_mode = #tpu.pipeline_mode<synchronous>, transform_indices = @transform_14, window_bounds = array<i64: 1, 384>}, {pipeline_mode = #tpu.pipeline_mode<synchronous>, transform_indices = @transform_15, window_bounds = array<i64: 128, 128>}, {pipeline_mode = #tpu.pipeline_mode<synchronous>, transform_indices = @transform_16, window_bounds = array<i64: 1, 128>}, {pipeline_mode = #tpu.pipeline_mode<synchronous>, transform_indices = @transform_17, window_bounds = array<i64: 128, 128>}, {pipeline_mode = #tpu.pipeline_mode<synchronous>, transform_indices = @transform_18, window_bounds = array<i64: 1, 128>}, {pipeline_mode = #tpu.pipeline_mode<synchronous>, transform_indices = @transform_19, window_bounds = array<i64: 128, 128>}, {pipeline_mode = #tpu.pipeline_mode<synchronous>, transform_indices = @transform_20, window_bounds = array<i64: 1, 128>}, {pipeline_mode = #tpu.pipeline_mode<synchronous>, transform_indices = @transform_21, window_bounds = array<i64: 128, 128>}, {pipeline_mode = #tpu.pipeline_mode<synchronous>, transform_indices = @transform_22, window_bounds = array<i64: 128, 128>}, {pipeline_mode = #tpu.pipeline_mode<synchronous>, transform_indices = @transform_23, window_bounds = array<i64: 1, 128>}, {transform_indices = @transform_24, window_bounds = array<i64: 2, 8, 128>}, {transform_indices = @transform_25, window_bounds = array<i64: 2, 1, 128>}]} {
    %c0 = arith.constant 0 : index
    %c0_0 = arith.constant 0 : index
    %c0_1 = arith.constant 0 : index
    %0 = vector.load %arg1[%c0, %c0_0, %c0_1] : memref<2x8x8xf32, #tpu.memory_space<vmem>>, vector<2x8x8xf32>
    %c0_2 = arith.constant 0 : index
    %c0_3 = arith.constant 0 : index
    %c0_4 = arith.constant 0 : index
    %1 = vector.load %arg2[%c0_2, %c0_3, %c0_4] : memref<2x8x8xf32, #tpu.memory_space<vmem>>, vector<2x8x8xf32>
    %c0_5 = arith.constant 0 : index
    %c0_6 = arith.constant 0 : index
    %c0_7 = arith.constant 0 : index
    %2 = vector.load %arg3[%c0_5, %c0_6, %c0_7] : memref<2x8x128xf32, #tpu.memory_space<vmem>>, vector<2x8x128xf32>
    %c0_8 = arith.constant 0 : index
    %c0_9 = arith.constant 0 : index
    %3 = vector.load %arg7[%c0_8, %c0_9] : memref<256x128xf32, #tpu.memory_space<vmem>>, vector<256x128xf32>
    %c0_10 = arith.constant 0 : index
    %c0_11 = arith.constant 0 : index
    %4 = vector.load %arg8[%c0_10, %c0_11] : memref<1x256xf32, #tpu.memory_space<vmem>>, vector<1x256xf32>
    %c0_12 = arith.constant 0 : index
    %c0_13 = arith.constant 0 : index
    %5 = vector.load %arg9[%c0_12, %c0_13] : memref<1x128xf32, #tpu.memory_space<vmem>>, vector<1x128xf32>
    %c0_14 = arith.constant 0 : index
    %c0_15 = arith.constant 0 : index
    %6 = vector.load %arg10[%c0_14, %c0_15] : memref<1x128xf32, #tpu.memory_space<vmem>>, vector<1x128xf32>
    %c0_16 = arith.constant 0 : index
    %c0_17 = arith.constant 0 : index
    %7 = vector.load %arg11[%c0_16, %c0_17] : memref<384x128xf32, #tpu.memory_space<vmem>>, vector<384x128xf32>
    %c0_18 = arith.constant 0 : index
    %c0_19 = arith.constant 0 : index
    %8 = vector.load %arg12[%c0_18, %c0_19] : memref<384x128xf32, #tpu.memory_space<vmem>>, vector<384x128xf32>
    %c0_20 = arith.constant 0 : index
    %c0_21 = arith.constant 0 : index
    %9 = vector.load %arg13[%c0_20, %c0_21] : memref<1x384xf32, #tpu.memory_space<vmem>>, vector<1x384xf32>
    %c0_22 = arith.constant 0 : index
    %c0_23 = arith.constant 0 : index
    %10 = vector.load %arg14[%c0_22, %c0_23] : memref<384x128xf32, #tpu.memory_space<vmem>>, vector<384x128xf32>
    %c0_24 = arith.constant 0 : index
    %c0_25 = arith.constant 0 : index
    %11 = vector.load %arg15[%c0_24, %c0_25] : memref<1x384xf32, #tpu.memory_space<vmem>>, vector<1x384xf32>
    %c0_26 = arith.constant 0 : index
    %c0_27 = arith.constant 0 : index
    %12 = vector.load %arg16[%c0_26, %c0_27] : memref<128x128xf32, #tpu.memory_space<vmem>>, vector<128x128xf32>
    %c0_28 = arith.constant 0 : index
    %c0_29 = arith.constant 0 : index
    %13 = vector.load %arg17[%c0_28, %c0_29] : memref<1x128xf32, #tpu.memory_space<vmem>>, vector<1x128xf32>
    %c0_30 = arith.constant 0 : index
    %c0_31 = arith.constant 0 : index
    %14 = vector.load %arg18[%c0_30, %c0_31] : memref<128x128xf32, #tpu.memory_space<vmem>>, vector<128x128xf32>
    %c0_32 = arith.constant 0 : index
    %c0_33 = arith.constant 0 : index
    %15 = vector.load %arg19[%c0_32, %c0_33] : memref<1x128xf32, #tpu.memory_space<vmem>>, vector<1x128xf32>
    %c0_34 = arith.constant 0 : index
    %c0_35 = arith.constant 0 : index
    %16 = vector.load %arg20[%c0_34, %c0_35] : memref<128x128xf32, #tpu.memory_space<vmem>>, vector<128x128xf32>
    %c0_36 = arith.constant 0 : index
    %c0_37 = arith.constant 0 : index
    %17 = vector.load %arg21[%c0_36, %c0_37] : memref<1x128xf32, #tpu.memory_space<vmem>>, vector<1x128xf32>
    %c0_38 = arith.constant 0 : index
    %c0_39 = arith.constant 0 : index
    %18 = vector.load %arg22[%c0_38, %c0_39] : memref<128x128xf32, #tpu.memory_space<vmem>>, vector<128x128xf32>
    %c0_40 = arith.constant 0 : index
    %c0_41 = arith.constant 0 : index
    %19 = vector.load %arg23[%c0_40, %c0_41] : memref<128x128xf32, #tpu.memory_space<vmem>>, vector<128x128xf32>
    %c0_42 = arith.constant 0 : index
    %c0_43 = arith.constant 0 : index
    %20 = vector.load %arg24[%c0_42, %c0_43] : memref<1x128xf32, #tpu.memory_space<vmem>>, vector<1x128xf32>
    %21 = vector.shape_cast %2 : vector<2x8x128xf32> to vector<16x128xf32>
    %cst = arith.constant dense<0.000000e+00> : vector<16x256xf32>
    %22 = tpu.matmul %21, %3, %cst {dimension_numbers = #tpu.dot_dimension_numbers<[1], [1], [0], [0], [0, 0, 1, 0], [], []>} : vector<16x128xf32>, vector<256x128xf32>, vector<16x256xf32> -> vector<16x256xf32>
    %23 = vector.broadcast %4 : vector<1x256xf32> to vector<16x256xf32>
    %24 = arith.addf %22, %23 : vector<16x256xf32>
    %25 = vector.extract_strided_slice %24 {offsets = [0, 0], sizes = [16, 128], strides = [1, 1]} : vector<16x256xf32> to vector<16x128xf32>
    %26 = vector.shape_cast %25 : vector<16x128xf32> to vector<2x8x128xf32>
    %27 = vector.extract_strided_slice %24 {offsets = [0, 128], sizes = [16, 128], strides = [1, 1]} : vector<16x256xf32> to vector<16x128xf32>
    %28 = vector.shape_cast %27 : vector<16x128xf32> to vector<2x8x128xf32>
    "tpu.trace_start"() <{level = 10 : i32, message = "bnm,bmh->bnh"}> : () -> ()
    %cst_44 = arith.constant dense<0.000000e+00> : vector<2x8x128xf32>
    %29 = tpu.matmul %0, %26, %cst_44 {dimension_numbers = #tpu.dot_dimension_numbers<[2], [1], [1], [2], [0, 0, 0, 1, 1, 2], [0], [0]>} : vector<2x8x8xf32>, vector<2x8x128xf32>, vector<2x8x128xf32> -> vector<2x8x128xf32>
    "tpu.trace_stop"() : () -> ()
    %30 = vector.shape_cast %5 : vector<1x128xf32> to vector<1x1x128xf32>
    %31 = vector.broadcast %30 : vector<1x1x128xf32> to vector<2x8x128xf32>
    %32 = arith.addf %29, %31 : vector<2x8x128xf32>
    %33 = vector.shape_cast %32 : vector<2x8x128xf32> to vector<16x128xf32>
    "tpu.trace_start"() <{level = 10 : i32, message = "bnm,bmh->bnh"}> : () -> ()
    %cst_45 = arith.constant dense<0.000000e+00> : vector<2x8x128xf32>
    %34 = tpu.matmul %1, %28, %cst_45 {dimension_numbers = #tpu.dot_dimension_numbers<[2], [1], [1], [2], [0, 0, 0, 1, 1, 2], [0], [0]>} : vector<2x8x8xf32>, vector<2x8x128xf32>, vector<2x8x128xf32> -> vector<2x8x128xf32>
    "tpu.trace_stop"() : () -> ()
    %35 = vector.shape_cast %6 : vector<1x128xf32> to vector<1x1x128xf32>
    %36 = vector.broadcast %35 : vector<1x1x128xf32> to vector<2x8x128xf32>
    %37 = arith.addf %34, %36 : vector<2x8x128xf32>
    %38 = vector.shape_cast %37 : vector<2x8x128xf32> to vector<16x128xf32>
    %cst_46 = arith.constant dense<0.000000e+00> : vector<16x384xf32>
    %39 = tpu.matmul %33, %7, %cst_46 {dimension_numbers = #tpu.dot_dimension_numbers<[1], [1], [0], [0], [0, 0, 1, 0], [], []>} : vector<16x128xf32>, vector<384x128xf32>, vector<16x384xf32> -> vector<16x384xf32>
    %cst_47 = arith.constant dense<0.000000e+00> : vector<16x384xf32>
    %40 = tpu.matmul %38, %8, %cst_47 {dimension_numbers = #tpu.dot_dimension_numbers<[1], [1], [0], [0], [0, 0, 1, 0], [], []>} : vector<16x128xf32>, vector<384x128xf32>, vector<16x384xf32> -> vector<16x384xf32>
    %41 = arith.addf %39, %40 : vector<16x384xf32>
    %42 = vector.broadcast %9 : vector<1x384xf32> to vector<16x384xf32>
    %43 = arith.addf %41, %42 : vector<16x384xf32>
    %cst_48 = arith.constant dense<0.000000e+00> : vector<16x384xf32>
    %44 = tpu.matmul %21, %10, %cst_48 {dimension_numbers = #tpu.dot_dimension_numbers<[1], [1], [0], [0], [0, 0, 1, 0], [], []>} : vector<16x128xf32>, vector<384x128xf32>, vector<16x384xf32> -> vector<16x384xf32>
    %45 = vector.broadcast %11 : vector<1x384xf32> to vector<16x384xf32>
    %46 = arith.addf %44, %45 : vector<16x384xf32>
    %47 = vector.extract_strided_slice %43 {offsets = [0, 0], sizes = [16, 128], strides = [1, 1]} : vector<16x384xf32> to vector<16x128xf32>
    %48 = vector.extract_strided_slice %46 {offsets = [0, 0], sizes = [16, 128], strides = [1, 1]} : vector<16x384xf32> to vector<16x128xf32>
    %49 = arith.addf %47, %48 : vector<16x128xf32>
    %50 = arith.negf %49 : vector<16x128xf32>
    %51 = math.exp %50 : vector<16x128xf32>
    %cst_49 = arith.constant 1.000000e+00 : f32
    %52 = vector.broadcast %cst_49 : f32 to vector<16x128xf32>
    %53 = arith.addf %52, %51 : vector<16x128xf32>
    %54 = arith.divf %52, %53 : vector<16x128xf32>
    %55 = vector.extract_strided_slice %43 {offsets = [0, 128], sizes = [16, 128], strides = [1, 1]} : vector<16x384xf32> to vector<16x128xf32>
    %56 = vector.extract_strided_slice %46 {offsets = [0, 128], sizes = [16, 128], strides = [1, 1]} : vector<16x384xf32> to vector<16x128xf32>
    %57 = arith.addf %55, %56 : vector<16x128xf32>
    %58 = arith.negf %57 : vector<16x128xf32>
    %59 = math.exp %58 : vector<16x128xf32>
    %cst_50 = arith.constant 1.000000e+00 : f32
    %60 = vector.broadcast %cst_50 : f32 to vector<16x128xf32>
    %61 = arith.addf %60, %59 : vector<16x128xf32>
    %62 = arith.divf %60, %61 : vector<16x128xf32>
    %63 = vector.extract_strided_slice %43 {offsets = [0, 256], sizes = [16, 128], strides = [1, 1]} : vector<16x384xf32> to vector<16x128xf32>
    %64 = vector.extract_strided_slice %46 {offsets = [0, 256], sizes = [16, 128], strides = [1, 1]} : vector<16x384xf32> to vector<16x128xf32>
    %65 = arith.mulf %54, %64 : vector<16x128xf32>
    %66 = arith.addf %63, %65 : vector<16x128xf32>
    %67 = math.tanh %66 : vector<16x128xf32>
    %68 = arith.subf %21, %67 : vector<16x128xf32>
    %69 = arith.mulf %62, %68 : vector<16x128xf32>
    %70 = arith.addf %67, %69 : vector<16x128xf32>
    %71 = vector.shape_cast %70 : vector<16x128xf32> to vector<2x8x128xf32>
    %c0_51 = arith.constant 0 : index
    %c0_52 = arith.constant 0 : index
    %c0_53 = arith.constant 0 : index
    %72 = vector.load %arg4[%c0_51, %c0_52, %c0_53] : memref<2x8x8xf32, #tpu.memory_space<vmem>>, vector<2x8x8xf32>
    "tpu.trace_start"() <{level = 10 : i32, message = "bln,bnh->blh"}> : () -> ()
    %cst_54 = arith.constant dense<0.000000e+00> : vector<2x8x128xf32>
    %73 = tpu.matmul %72, %71, %cst_54 {dimension_numbers = #tpu.dot_dimension_numbers<[2], [1], [1], [2], [0, 0, 0, 1, 1, 2], [0], [0]>} : vector<2x8x8xf32>, vector<2x8x128xf32>, vector<2x8x128xf32> -> vector<2x8x128xf32>
    "tpu.trace_stop"() : () -> ()
    %c0_55 = arith.constant 0 : index
    %c0_56 = arith.constant 0 : index
    %c0_57 = arith.constant 0 : index
    %74 = vector.load %arg5[%c0_55, %c0_56, %c0_57] : memref<2x1x8xf32, #tpu.memory_space<vmem>>, vector<2x1x8xf32>
    "tpu.trace_start"() <{level = 10 : i32, message = "bol,blh->boh"}> : () -> ()
    %cst_58 = arith.constant dense<0.000000e+00> : vector<2x1x128xf32>
    %75 = tpu.matmul %74, %73, %cst_58 {dimension_numbers = #tpu.dot_dimension_numbers<[2], [1], [1], [2], [0, 0, 0, 1, 1, 2], [0], [0]>} : vector<2x1x8xf32>, vector<2x8x128xf32>, vector<2x1x128xf32> -> vector<2x1x128xf32>
    "tpu.trace_stop"() : () -> ()
    %76 = vector.shape_cast %75 : vector<2x1x128xf32> to vector<2x128xf32>
    %cst_59 = arith.constant dense<0.000000e+00> : vector<2x128xf32>
    %77 = tpu.matmul %76, %12, %cst_59 {dimension_numbers = #tpu.dot_dimension_numbers<[1], [1], [0], [0], [0, 0, 1, 0], [], []>} : vector<2x128xf32>, vector<128x128xf32>, vector<2x128xf32> -> vector<2x128xf32>
    %78 = vector.broadcast %13 : vector<1x128xf32> to vector<2x128xf32>
    %79 = arith.addf %77, %78 : vector<2x128xf32>
    %80 = vector.shape_cast %73 : vector<2x8x128xf32> to vector<16x128xf32>
    %cst_60 = arith.constant dense<0.000000e+00> : vector<16x128xf32>
    %81 = tpu.matmul %80, %14, %cst_60 {dimension_numbers = #tpu.dot_dimension_numbers<[1], [1], [0], [0], [0, 0, 1, 0], [], []>} : vector<16x128xf32>, vector<128x128xf32>, vector<16x128xf32> -> vector<16x128xf32>
    %82 = vector.broadcast %15 : vector<1x128xf32> to vector<16x128xf32>
    %83 = arith.addf %81, %82 : vector<16x128xf32>
    %84 = vector.shape_cast %83 : vector<16x128xf32> to vector<2x8x128xf32>
    %85 = vector.shape_cast %79 : vector<2x128xf32> to vector<2x1x128xf32>
    %86 = vector.broadcast %85 : vector<2x1x128xf32> to vector<2x8x128xf32>
    %87 = arith.addf %86, %84 : vector<2x8x128xf32>
    %88 = arith.negf %87 : vector<2x8x128xf32>
    %89 = math.exp %88 : vector<2x8x128xf32>
    %cst_61 = arith.constant 1.000000e+00 : f32
    %90 = vector.broadcast %cst_61 : f32 to vector<2x8x128xf32>
    %91 = arith.addf %90, %89 : vector<2x8x128xf32>
    %92 = arith.divf %90, %91 : vector<2x8x128xf32>
    %93 = vector.shape_cast %92 : vector<2x8x128xf32> to vector<16x128xf32>
    %cst_62 = arith.constant dense<0.000000e+00> : vector<16x128xf32>
    %94 = tpu.matmul %93, %16, %cst_62 {dimension_numbers = #tpu.dot_dimension_numbers<[1], [1], [0], [0], [0, 0, 1, 0], [], []>} : vector<16x128xf32>, vector<128x128xf32>, vector<16x128xf32> -> vector<16x128xf32>
    %95 = vector.broadcast %17 : vector<1x128xf32> to vector<16x128xf32>
    %96 = arith.addf %94, %95 : vector<16x128xf32>
    %97 = vector.shape_cast %96 : vector<16x128xf32> to vector<2x8x128xf32>
    %98 = arith.mulf %97, %73 : vector<2x8x128xf32>
    %c0_63 = arith.constant 0 : index
    %c0_64 = arith.constant 0 : index
    %c0_65 = arith.constant 0 : index
    %99 = vector.load %arg6[%c0_63, %c0_64, %c0_65] : memref<2x8x1xf32, #tpu.memory_space<vmem>>, vector<2x8x1xf32>
    %100 = vector.broadcast %99 : vector<2x8x1xf32> to vector<2x8x128xf32>
    %101 = arith.mulf %98, %100 : vector<2x8x128xf32>
    %cst_66 = arith.constant dense<0.000000e+00> : vector<2x128xf32>
    %102 = vector.multi_reduction <add>, %101, %cst_66 [1] : vector<2x8x128xf32> to vector<2x128xf32>
    %cst_67 = arith.constant dense<0.000000e+00> : vector<2x128xf32>
    %103 = tpu.matmul %102, %18, %cst_67 {dimension_numbers = #tpu.dot_dimension_numbers<[1], [1], [0], [0], [0, 0, 1, 0], [], []>} : vector<2x128xf32>, vector<128x128xf32>, vector<2x128xf32> -> vector<2x128xf32>
    %cst_68 = arith.constant dense<0.000000e+00> : vector<2x128xf32>
    %104 = tpu.matmul %76, %19, %cst_68 {dimension_numbers = #tpu.dot_dimension_numbers<[1], [1], [0], [0], [0, 0, 1, 0], [], []>} : vector<2x128xf32>, vector<128x128xf32>, vector<2x128xf32> -> vector<2x128xf32>
    %105 = arith.addf %103, %104 : vector<2x128xf32>
    %106 = vector.broadcast %20 : vector<1x128xf32> to vector<2x128xf32>
    %107 = arith.addf %105, %106 : vector<2x128xf32>
    %c0_69 = arith.constant 0 : index
    %c0_70 = arith.constant 0 : index
    %c0_71 = arith.constant 0 : index
    %108 = vector.load %arg25[%c0_69, %c0_70, %c0_71] : memref<2x8x128xf32, #tpu.memory_space<vmem>>, vector<2x8x128xf32>
    tpu.vector_store %arg25[%c0_69, %c0_70, %c0_71], %73 {strides = array<i32>} : memref<2x8x128xf32, #tpu.memory_space<vmem>>, vector<2x8x128xf32>,
    %109 = vector.shape_cast %107 : vector<2x128xf32> to vector<2x1x128xf32>
    %c0_72 = arith.constant 0 : index
    %c0_73 = arith.constant 0 : index
    %c0_74 = arith.constant 0 : index
    %110 = vector.load %arg26[%c0_72, %c0_73, %c0_74] : memref<2x1x128xf32, #tpu.memory_space<vmem>>, vector<2x1x128xf32>
    tpu.vector_store %arg26[%c0_72, %c0_73, %c0_74], %109 {strides = array<i32>} : memref<2x1x128xf32, #tpu.memory_space<vmem>>, vector<2x1x128xf32>,
    return
  }
  func.func @transform_0(%arg0: i32) -> (i32, i32, i32) {
    %c0_i32 = arith.constant 0 : i32
    %c0_i32_0 = arith.constant 0 : i32
    %c0_i32_1 = arith.constant 0 : i32
    return %arg0, %c0_i32, %c0_i32_0 : i32, i32, i32
  }
  func.func @transform_1(%arg0: i32) -> (i32, i32, i32) {
    %c0_i32 = arith.constant 0 : i32
    %c0_i32_0 = arith.constant 0 : i32
    %c0_i32_1 = arith.constant 0 : i32
    return %arg0, %c0_i32, %c0_i32_0 : i32, i32, i32
  }
  func.func @transform_2(%arg0: i32) -> (i32, i32, i32) {
    %c0_i32 = arith.constant 0 : i32
    %c0_i32_0 = arith.constant 0 : i32
    %c0_i32_1 = arith.constant 0 : i32
    return %arg0, %c0_i32, %c0_i32_0 : i32, i32, i32
  }
  func.func @transform_3(%arg0: i32) -> (i32, i32, i32) {
    %c0_i32 = arith.constant 0 : i32
    %c0_i32_0 = arith.constant 0 : i32
    %c0_i32_1 = arith.constant 0 : i32
    return %arg0, %c0_i32, %c0_i32_0 : i32, i32, i32
  }
  func.func @transform_4(%arg0: i32) -> (i32, i32, i32) {
    %c0_i32 = arith.constant 0 : i32
    %c0_i32_0 = arith.constant 0 : i32
    %c0_i32_1 = arith.constant 0 : i32
    return %arg0, %c0_i32, %c0_i32_0 : i32, i32, i32
  }
  func.func @transform_5(%arg0: i32) -> (i32, i32, i32) {
    %c0_i32 = arith.constant 0 : i32
    %c0_i32_0 = arith.constant 0 : i32
    %c0_i32_1 = arith.constant 0 : i32
    return %arg0, %c0_i32, %c0_i32_0 : i32, i32, i32
  }
  func.func @transform_6(%arg0: i32) -> (i32, i32) {
    %c0_i32 = arith.constant 0 : i32
    %c0_i32_0 = arith.constant 0 : i32
    %c0_i32_1 = arith.constant 0 : i32
    return %c0_i32, %c0_i32_0 : i32, i32
  }
  func.func @transform_7(%arg0: i32) -> (i32, i32) {
    %c0_i32 = arith.constant 0 : i32
    %c0_i32_0 = arith.constant 0 : i32
    %c0_i32_1 = arith.constant 0 : i32
    return %c0_i32, %c0_i32_0 : i32, i32
  }
  func.func @transform_8(%arg0: i32) -> (i32, i32) {
    %c0_i32 = arith.constant 0 : i32
    %c0_i32_0 = arith.constant 0 : i32
    %c0_i32_1 = arith.constant 0 : i32
    return %c0_i32, %c0_i32_0 : i32, i32
  }
  func.func @transform_9(%arg0: i32) -> (i32, i32) {
    %c0_i32 = arith.constant 0 : i32
    %c0_i32_0 = arith.constant 0 : i32
    %c0_i32_1 = arith.constant 0 : i32
    return %c0_i32, %c0_i32_0 : i32, i32
  }
  func.func @transform_10(%arg0: i32) -> (i32, i32) {
    %c0_i32 = arith.constant 0 : i32
    %c0_i32_0 = arith.constant 0 : i32
    %c0_i32_1 = arith.constant 0 : i32
    return %c0_i32, %c0_i32_0 : i32, i32
  }
  func.func @transform_11(%arg0: i32) -> (i32, i32) {
    %c0_i32 = arith.constant 0 : i32
    %c0_i32_0 = arith.constant 0 : i32
    %c0_i32_1 = arith.constant 0 : i32
    return %c0_i32, %c0_i32_0 : i32, i32
  }
  func.func @transform_12(%arg0: i32) -> (i32, i32) {
    %c0_i32 = arith.constant 0 : i32
    %c0_i32_0 = arith.constant 0 : i32
    %c0_i32_1 = arith.constant 0 : i32
    return %c0_i32, %c0_i32_0 : i32, i32
  }
  func.func @transform_13(%arg0: i32) -> (i32, i32) {
    %c0_i32 = arith.constant 0 : i32
    %c0_i32_0 = arith.constant 0 : i32
    %c0_i32_1 = arith.constant 0 : i32
    return %c0_i32, %c0_i32_0 : i32, i32
  }
  func.func @transform_14(%arg0: i32) -> (i32, i32) {
    %c0_i32 = arith.constant 0 : i32
    %c0_i32_0 = arith.constant 0 : i32
    %c0_i32_1 = arith.constant 0 : i32
    return %c0_i32, %c0_i32_0 : i32, i32
  }
  func.func @transform_15(%arg0: i32) -> (i32, i32) {
    %c0_i32 = arith.constant 0 : i32
    %c0_i32_0 = arith.constant 0 : i32
    %c0_i32_1 = arith.constant 0 : i32
    return %c0_i32, %c0_i32_0 : i32, i32
  }
  func.func @transform_16(%arg0: i32) -> (i32, i32) {
    %c0_i32 = arith.constant 0 : i32
    %c0_i32_0 = arith.constant 0 : i32
    %c0_i32_1 = arith.constant 0 : i32
    return %c0_i32, %c0_i32_0 : i32, i32
  }
  func.func @transform_17(%arg0: i32) -> (i32, i32) {
    %c0_i32 = arith.constant 0 : i32
    %c0_i32_0 = arith.constant 0 : i32
    %c0_i32_1 = arith.constant 0 : i32
    return %c0_i32, %c0_i32_0 : i32, i32
  }
  func.func @transform_18(%arg0: i32) -> (i32, i32) {
    %c0_i32 = arith.constant 0 : i32
    %c0_i32_0 = arith.constant 0 : i32
    %c0_i32_1 = arith.constant 0 : i32
    return %c0_i32, %c0_i32_0 : i32, i32
  }
  func.func @transform_19(%arg0: i32) -> (i32, i32) {
    %c0_i32 = arith.constant 0 : i32
    %c0_i32_0 = arith.constant 0 : i32
    %c0_i32_1 = arith.constant 0 : i32
    return %c0_i32, %c0_i32_0 : i32, i32
  }
  func.func @transform_20(%arg0: i32) -> (i32, i32) {
    %c0_i32 = arith.constant 0 : i32
    %c0_i32_0 = arith.constant 0 : i32
    %c0_i32_1 = arith.constant 0 : i32
    return %c0_i32, %c0_i32_0 : i32, i32
  }
  func.func @transform_21(%arg0: i32) -> (i32, i32) {
    %c0_i32 = arith.constant 0 : i32
    %c0_i32_0 = arith.constant 0 : i32
    %c0_i32_1 = arith.constant 0 : i32
    return %c0_i32, %c0_i32_0 : i32, i32
  }
  func.func @transform_22(%arg0: i32) -> (i32, i32) {
    %c0_i32 = arith.constant 0 : i32
    %c0_i32_0 = arith.constant 0 : i32
    %c0_i32_1 = arith.constant 0 : i32
    return %c0_i32, %c0_i32_0 : i32, i32
  }
  func.func @transform_23(%arg0: i32) -> (i32, i32) {
    %c0_i32 = arith.constant 0 : i32
    %c0_i32_0 = arith.constant 0 : i32
    %c0_i32_1 = arith.constant 0 : i32
    return %c0_i32, %c0_i32_0 : i32, i32
  }
  func.func @transform_24(%arg0: i32) -> (i32, i32, i32) {
    %c0_i32 = arith.constant 0 : i32
    %c0_i32_0 = arith.constant 0 : i32
    %c0_i32_1 = arith.constant 0 : i32
    return %arg0, %c0_i32, %c0_i32_0 : i32, i32, i32
  }
  func.func @transform_25(%arg0: i32) -> (i32, i32, i32) {
    %c0_i32 = arith.constant 0 : i32
    %c0_i32_0 = arith.constant 0 : i32
    %c0_i32_1 = arith.constant 0 : i32
    return %arg0, %c0_i32, %c0_i32_0 : i32, i32, i32
  }
}

</mosaic_0001>

<llo_original>
// kernel: tpu_custom_call.1
$region0: #{tpu_custom_call.1}
  #allocation0 [shape = 'u32[]', space=smem, size = 0x4, offset = 0x4, fixed_abs, tag = 'smem constant byte address 0x4 - core index']
  #allocation1 [shape = 'u32[144,128]{1,0:T(1,128)}', space=vmem, size = 0x12000, scoped, tag = 'internal scratch']
  %s0 = inlined_call_operand.vmem [shape: f32[4,8,8], index: 0, kind: input, shape index: {}]
  %s1 = inlined_call_operand.hbm [shape: f32[4,8,8], index: 1, kind: input, shape index: {}]
  %s2 = inlined_call_operand.hbm [shape: f32[4,8,128], index: 2, kind: input, shape index: {}]
  %s3 = inlined_call_operand.hbm [shape: f32[4,8,8], index: 3, kind: input, shape index: {}]
  %s4 = inlined_call_operand.vmem [shape: f32[4,1,8], index: 4, kind: input, shape index: {}]
  %s5 = inlined_call_operand.vmem [shape: f32[4,8,1], index: 5, kind: input, shape index: {}]
  %s6 = inlined_call_operand.hbm [shape: f32[256,128], index: 6, kind: input, shape index: {}]
  %s7 = inlined_call_operand.vmem [shape: f32[1,256], index: 7, kind: input, shape index: {}]
  %s8 = inlined_call_operand.vmem [shape: f32[1,128], index: 8, kind: input, shape index: {}]
  %s9 = inlined_call_operand.vmem [shape: f32[1,128], index: 9, kind: input, shape index: {}]
  %s10 = inlined_call_operand.hbm [shape: f32[384,128], index: 10, kind: input, shape index: {}]
  %s11 = inlined_call_operand.hbm [shape: f32[384,128], index: 11, kind: input, shape index: {}]
  %s12 = inlined_call_operand.vmem [shape: f32[1,384], index: 12, kind: input, shape index: {}]
  %s13 = inlined_call_operand.hbm [shape: f32[384,128], index: 13, kind: input, shape index: {}]
  %s14 = inlined_call_operand.vmem [shape: f32[1,384], index: 14, kind: input, shape index: {}]
  %s15 = inlined_call_operand.hbm [shape: f32[128,128], index: 15, kind: input, shape index: {}]
  %s16 = inlined_call_operand.vmem [shape: f32[1,128], index: 16, kind: input, shape index: {}]
  %s17 = inlined_call_operand.hbm [shape: f32[128,128], index: 17, kind: input, shape index: {}]
  %s18 = inlined_call_operand.vmem [shape: f32[1,128], index: 18, kind: input, shape index: {}]
  %s19 = inlined_call_operand.hbm [shape: f32[128,128], index: 19, kind: input, shape index: {}]
  %s20 = inlined_call_operand.vmem [shape: f32[1,128], index: 20, kind: input, shape index: {}]
  %s21 = inlined_call_operand.hbm [shape: f32[128,128], index: 21, kind: input, shape index: {}]
  %s22 = inlined_call_operand.hbm [shape: f32[128,128], index: 22, kind: input, shape index: {}]
  %s23 = inlined_call_operand.vmem [shape: f32[1,128], index: 23, kind: input, shape index: {}]
  %s24 = inlined_call_operand.hbm [shape: f32[4,8,128], index: 24, kind: output, shape index: {0}]
  %s25 = inlined_call_operand.hbm [shape: f32[4,1,128], index: 25, kind: output, shape index: {1}]
  %26 = xla_tuple %s24, %s25
  %s27 = sld [smem:[#allocation0]]
  $region185: #{tpu_custom_call.1} parent=0
    _
  %s29 = ssub.s32 1, %s27
  %s30 = scalar_select 0, %s29, %s27
  $region1: #{tpu_custom_call.1} parent=0
    #allocation2 [shape = 'u8[16384]{0}', space=vmem, size = 0x4000, scoped, tag = 'input window, operand 1']
    #allocation3 [shape = 's32[2]{0}', space=sflag, size = 0x8, scoped, tag = 'scoped memory for tpu_custom_call.1']
    #allocation4 [shape = 's32[2]{0}', space=sflag, size = 0x8, scoped, tag = 'scoped memory for tpu_custom_call.1']
    #allocation5 [shape = 'u8[16384]{0}', space=vmem, size = 0x4000, scoped, tag = 'input window, operand 2']
    #allocation6 [shape = 's32[2]{0}', space=sflag, size = 0x8, scoped, tag = 'scoped memory for tpu_custom_call.1']
    #allocation7 [shape = 'u8[16384]{0}', space=vmem, size = 0x4000, scoped, tag = 'input window, operand 3']
    #allocation8 [shape = 'u8[131072]{0}', space=vmem, size = 0x20000, scoped, tag = 'input window, operand 6, single buffered']
    #allocation9 [shape = 's32[1]{0}', space=sflag, size = 0x4, scoped, tag = 'scoped memory for tpu_custom_call.1']
    #allocation10 [shape = 'u8[196608]{0}', space=vmem, size = 0x30000, scoped, tag = 'input window, operand 10, single buffered']
    #allocation11 [shape = 'u8[196608]{0}', space=vmem, size = 0x30000, scoped, tag = 'input window, operand 11, single buffered']
    #allocation12 [shape = 's32[1]{0}', space=sflag, size = 0x4, scoped, tag = 'scoped memory for tpu_custom_call.1']
    #allocation13 [shape = 'u8[196608]{0}', space=vmem, size = 0x30000, scoped, tag = 'input window, operand 13, single buffered']
    #allocation14 [shape = 'u8[65536]{0}', space=vmem, size = 0x10000, scoped, tag = 'input window, operand 15, single buffered']
    #allocation15 [shape = 's32[1]{0}', space=sflag, size = 0x4, scoped, tag = 'scoped memory for tpu_custom_call.1']
    #allocation16 [shape = 'u8[65536]{0}', space=vmem, size = 0x10000, scoped, tag = 'input window, operand 17, single buffered']
    #allocation17 [shape = 'u8[65536]{0}', space=vmem, size = 0x10000, scoped, tag = 'input window, operand 19, single buffered']
    #allocation18 [shape = 's32[1]{0}', space=sflag, size = 0x4, scoped, tag = 'scoped memory for tpu_custom_call.1']
    #allocation19 [shape = 'u8[65536]{0}', space=vmem, size = 0x10000, scoped, tag = 'input window, operand 21, single buffered']
    #allocation20 [shape = 'u8[65536]{0}', space=vmem, size = 0x10000, scoped, tag = 'input window, operand 22, single buffered']
    #allocation21 [shape = 's32[1]{0}', space=sflag, size = 0x4, scoped, tag = 'scoped memory for tpu_custom_call.1']
    #allocation22 [shape = 'u8[16384]{0}', space=vmem, size = 0x4000, scoped, tag = 'output window, operand 0']
    #allocation23 [shape = 'u8[2048]{0}', space=vmem, size = 0x800, scoped, tag = 'output window, operand 1']
    #allocation24 [shape = 's32[2]{0}', space=sflag, size = 0x8, scoped, tag = 'scoped memory for tpu_custom_call.1']
    %31 = vsyncpa [#allocation3], 0
    %s32 = scalar_lea.sflag [#allocation3], 1
    %33 = vsyncpa %s32, 0
    %34 = vsyncpa [#allocation6], 0
    %s35 = scalar_lea.sflag [#allocation6], 1
    %36 = vsyncpa %s35, 0
    %37 = vsyncpa [#allocation9], 0
    %38 = vsyncpa [#allocation12], 0
    %39 = vsyncpa [#allocation15], 0
    %40 = vsyncpa [#allocation18], 0
    %41 = vsyncpa [#allocation21], 0
    %42 = vsyncpa [#allocation4], 0
    %s43 = scalar_lea.sflag [#allocation4], 1
    %44 = vsyncpa %s43, 0
    %45 = vsyncpa [#allocation24], 0
    %s46 = scalar_lea.sflag [#allocation24], 1
    %47 = vsyncpa %s46, 0
    loop: start=0, step=1, limit=4
    $region2: #{tpu_custom_call.1} parent=1 // loop_pre_header
      _
    $region3: #{tpu_custom_call.1} parent=1 // loop_header
      %s49 = sphi 0, %s53
      %p50 = scmp.ge.s32.totalorder %s49, 4
      %s59 = sphi 0, %s61
      %s62 = sphi 0, %s59
      %s63 = sphi 0, %s62
      %s79 = sphi 0, %s63
      %s85 = sphi 0, %s87
      %s88 = sphi 0, %s85
      %s89 = sphi 0, %s88
      %s105 = sphi 0, %s89
      %s111 = sphi 0, %s113
      %s114 = sphi 0, %s111
      %s115 = sphi 0, %s114
      %s131 = sphi 0, %s115
      %s137 = sphi 0, %s139
      %s140 = sphi 0, %s137
      %s141 = sphi 0, %s140
      %s157 = sphi 0, %s141
      %s163 = sphi 0, %s165
      %s166 = sphi 0, %s163
      %s167 = sphi 0, %s166
      %s183 = sphi 0, %s167
      %s189 = sphi 0, %s191
      %s192 = sphi 0, %s189
      %s193 = sphi 0, %s192
      %s209 = sphi 0, %s193
      %s213 = sphi 0, %s213
      %s215 = sphi 0, %s213
      %s216 = sphi 0, %s215
      %s230 = sphi 0, %s216
      %s234 = sphi 0, %s234
      %s236 = sphi 0, %s234
      %s237 = sphi 0, %s236
      %s251 = sphi 0, %s237
      %s255 = sphi 0, %s255
      %s257 = sphi 0, %s255
      %s258 = sphi 0, %s257
      %s272 = sphi 0, %s258
      %s276 = sphi 0, %s276
      %s278 = sphi 0, %s276
      %s279 = sphi 0, %s278
      %s293 = sphi 0, %s279
      %s297 = sphi 0, %s297
      %s299 = sphi 0, %s297
      %s300 = sphi 0, %s299
      %s314 = sphi 0, %s300
      %s318 = sphi 0, %s318
      %s320 = sphi 0, %s318
      %s321 = sphi 0, %s320
      %s335 = sphi 0, %s321
      %s339 = sphi 0, %s339
      %s341 = sphi 0, %s339
      %s342 = sphi 0, %s341
      %s356 = sphi 0, %s342
      %s360 = sphi 0, %s360
      %s362 = sphi 0, %s360
      %s363 = sphi 0, %s362
      %s377 = sphi 0, %s363
      %s381 = sphi 0, %s381
      %s383 = sphi 0, %s381
      %s384 = sphi 0, %s383
      %s398 = sphi 0, %s384
      %s402 = sphi 0, %s402
      %s404 = sphi 0, %s402
      %s405 = sphi 0, %s404
      %s419 = sphi 0, %s405
      %s423 = sphi 0, %s423
      %s425 = sphi 0, %s423
      %s426 = sphi 0, %s425
      %s440 = sphi 0, %s426
      %s444 = sphi 0, %s444
      %s446 = sphi 0, %s444
      %s447 = sphi 0, %s446
      %s461 = sphi 0, %s447
      %s465 = sphi 0, %s465
      %s467 = sphi 0, %s465
      %s468 = sphi 0, %s467
      %s482 = sphi 0, %s468
      %s486 = sphi 0, %s486
      %s488 = sphi 0, %s486
      %s489 = sphi 0, %s488
      %s503 = sphi 0, %s489
      %s507 = sphi 0, %s507
      %s509 = sphi 0, %s507
      %s510 = sphi 0, %s509
      %s524 = sphi 0, %s510
      %s528 = sphi 0, %s528
      %s530 = sphi 0, %s528
      %s531 = sphi 0, %s530
      %s545 = sphi 0, %s531
      %s549 = sphi 0, %s549
      %s551 = sphi 0, %s549
      %s552 = sphi 0, %s551
      %s566 = sphi 0, %s552
      %s570 = sphi 0, %s570
      %s572 = sphi 0, %s570
      %s573 = sphi 0, %s572
      %s587 = sphi 0, %s573
      %s593 = sphi 0, %s595
      %s596 = sphi 0, %s593
      %s597 = sphi 0, %s596
      %s613 = sphi 0, %s597
      %s619 = sphi 0, %s621
      %s622 = sphi 0, %s619
      %s623 = sphi 0, %s622
      %s639 = sphi 0, %s623
    $region4: #{tpu_custom_call.1} parent=1 // loop_header_branch
      %52 = sbr.rel (%p50) target = $region8
    $region5: #{tpu_custom_call.1} parent=1 // loop_body
      %s54 = ssub.s32 %s49, 1
      %s55 = ssub.s32 %s49, 2
      %s56 = sadd.s32 %s49, 1
      %s57 = ssub.s32 %s49, %s56
      %p58 = scmp.eq.s32.totalorder %s57, 0
      %s60 = sadd.s32 %s59, 1
      %s61 = scalar_select %p58, %s59, %s60
      %p64 = pneg %p58
      %p65 = scmp.eq.s32.totalorder %s49, 1
      %p66 = por %p64, %p65
      %p67 = scmp.ne.s32.totalorder %s59, %s62
      %p68 = scmp.eq.s32.totalorder %s49, 0
      %p69 = por %p67, %p68
      %p70 = scmp.ne.s32.totalorder %s59, %s62
      %p71 = scmp.eq.s32.totalorder %s54, 1
      %p72 = por %p70, %p71
      %p73 = scmp.ne.s32.totalorder %s62, %s63
      %p74 = scmp.eq.s32.totalorder %s54, 0
      %p75 = por %p73, %p74
      %p76 = scmp.ne.s32.totalorder %s62, %s63
      %p77 = scmp.eq.s32.totalorder %s55, 1
      %p78 = por %p76, %p77
      %p80 = scmp.ne.s32.totalorder %s63, %s79
      %p81 = scmp.eq.s32.totalorder %s55, 0
      %p82 = por %p80, %p81
      %s83 = ssub.s32 %s49, %s56
      %p84 = scmp.eq.s32.totalorder %s83, 0
      %s86 = sadd.s32 %s85, 1
      %s87 = scalar_select %p84, %s85, %s86
      %p90 = pneg %p84
      %p91 = scmp.eq.s32.totalorder %s49, 1
      %p92 = por %p90, %p91
      %p93 = scmp.ne.s32.totalorder %s85, %s88
      %p94 = scmp.eq.s32.totalorder %s49, 0
      %p95 = por %p93, %p94
      %p96 = scmp.ne.s32.totalorder %s85, %s88
      %p97 = scmp.eq.s32.totalorder %s54, 1
      %p98 = por %p96, %p97
      %p99 = scmp.ne.s32.totalorder %s88, %s89
      %p100 = scmp.eq.s32.totalorder %s54, 0
      %p101 = por %p99, %p100
      %p102 = scmp.ne.s32.totalorder %s88, %s89
      %p103 = scmp.eq.s32.totalorder %s55, 1
      %p104 = por %p102, %p103
      %p106 = scmp.ne.s32.totalorder %s89, %s105
      %p107 = scmp.eq.s32.totalorder %s55, 0
      %p108 = por %p106, %p107
      %s109 = ssub.s32 %s49, %s56
      %p110 = scmp.eq.s32.totalorder %s109, 0
      %s112 = sadd.s32 %s111, 1
      %s113 = scalar_select %p110, %s111, %s112
      %p116 = pneg %p110
      %p117 = scmp.eq.s32.totalorder %s49, 1
      %p118 = por %p116, %p117
      %p119 = scmp.ne.s32.totalorder %s111, %s114
      %p120 = scmp.eq.s32.totalorder %s49, 0
      %p121 = por %p119, %p120
      %p122 = scmp.ne.s32.totalorder %s111, %s114
      %p123 = scmp.eq.s32.totalorder %s54, 1
      %p124 = por %p122, %p123
      %p125 = scmp.ne.s32.totalorder %s114, %s115
      %p126 = scmp.eq.s32.totalorder %s54, 0
      %p127 = por %p125, %p126
      %p128 = scmp.ne.s32.totalorder %s114, %s115
      %p129 = scmp.eq.s32.totalorder %s55, 1
      %p130 = por %p128, %p129
      %p132 = scmp.ne.s32.totalorder %s115, %s131
      %p133 = scmp.eq.s32.totalorder %s55, 0
      %p134 = por %p132, %p133
      %s135 = ssub.s32 %s49, %s56
      %p136 = scmp.eq.s32.totalorder %s135, 0
      %s138 = sadd.s32 %s137, 1
      %s139 = scalar_select %p136, %s137, %s138
      %p142 = pneg %p136
      %p143 = scmp.eq.s32.totalorder %s49, 1
      %p144 = por %p142, %p143
      %p145 = scmp.ne.s32.totalorder %s137, %s140
      %p146 = scmp.eq.s32.totalorder %s49, 0
      %p147 = por %p145, %p146
      %p148 = scmp.ne.s32.totalorder %s137, %s140
      %p149 = scmp.eq.s32.totalorder %s54, 1
      %p150 = por %p148, %p149
      %p151 = scmp.ne.s32.totalorder %s140, %s141
      %p152 = scmp.eq.s32.totalorder %s54, 0
      %p153 = por %p151, %p152
      %p154 = scmp.ne.s32.totalorder %s140, %s141
      %p155 = scmp.eq.s32.totalorder %s55, 1
      %p156 = por %p154, %p155
      %p158 = scmp.ne.s32.totalorder %s141, %s157
      %p159 = scmp.eq.s32.totalorder %s55, 0
      %p160 = por %p158, %p159
      %s161 = ssub.s32 %s49, %s56
      %p162 = scmp.eq.s32.totalorder %s161, 0
      %s164 = sadd.s32 %s163, 1
      %s165 = scalar_select %p162, %s163, %s164
      %p168 = pneg %p162
      %p169 = scmp.eq.s32.totalorder %s49, 1
      %p170 = por %p168, %p169
      %p171 = scmp.ne.s32.totalorder %s163, %s166
      %p172 = scmp.eq.s32.totalorder %s49, 0
      %p173 = por %p171, %p172
      %p174 = scmp.ne.s32.totalorder %s163, %s166
      %p175 = scmp.eq.s32.totalorder %s54, 1
      %p176 = por %p174, %p175
      %p177 = scmp.ne.s32.totalorder %s166, %s167
      %p178 = scmp.eq.s32.totalorder %s54, 0
      %p179 = por %p177, %p178
      %p180 = scmp.ne.s32.totalorder %s166, %s167
      %p181 = scmp.eq.s32.totalorder %s55, 1
      %p182 = por %p180, %p181
      %p184 = scmp.ne.s32.totalorder %s167, %s183
      %p185 = scmp.eq.s32.totalorder %s55, 0
      %p186 = por %p184, %p185
      %s187 = ssub.s32 %s49, %s56
      %p188 = scmp.eq.s32.totalorder %s187, 0
      %s190 = sadd.s32 %s189, 1
      %s191 = scalar_select %p188, %s189, %s190
      %p194 = pneg %p188
      %p195 = scmp.eq.s32.totalorder %s49, 1
      %p196 = por %p194, %p195
      %p197 = scmp.ne.s32.totalorder %s189, %s192
      %p198 = scmp.eq.s32.totalorder %s49, 0
      %p199 = por %p197, %p198
      %p200 = scmp.ne.s32.totalorder %s189, %s192
      %p201 = scmp.eq.s32.totalorder %s54, 1
      %p202 = por %p200, %p201
      %p203 = scmp.ne.s32.totalorder %s192, %s193
      %p204 = scmp.eq.s32.totalorder %s54, 0
      %p205 = por %p203, %p204
      %p206 = scmp.ne.s32.totalorder %s192, %s193
      %p207 = scmp.eq.s32.totalorder %s55, 1
      %p208 = por %p206, %p207
      %p210 = scmp.ne.s32.totalorder %s193, %s209
      %p211 = scmp.eq.s32.totalorder %s55, 0
      %p212 = por %p210, %p211
      %s214 = sadd.s32 %s213, 1
      %p217 = scmp.eq.s32.totalorder %s49, 1
      %p218 = scmp.ne.s32.totalorder %s213, %s215
      %p219 = scmp.eq.s32.totalorder %s49, 0
      %p220 = por %p218, %p219
      %p221 = scmp.ne.s32.totalorder %s213, %s215
      %p222 = scmp.eq.s32.totalorder %s54, 1
      %p223 = por %p221, %p222
      %p224 = scmp.ne.s32.totalorder %s215, %s216
      %p225 = scmp.eq.s32.totalorder %s54, 0
      %p226 = por %p224, %p225
      %p227 = scmp.ne.s32.totalorder %s215, %s216
      %p228 = scmp.eq.s32.totalorder %s55, 1
      %p229 = por %p227, %p228
      %p231 = scmp.ne.s32.totalorder %s216, %s230
      %p232 = scmp.eq.s32.totalorder %s55, 0
      %p233 = por %p231, %p232
      %s235 = sadd.s32 %s234, 1
      %p238 = scmp.eq.s32.totalorder %s49, 1
      %p239 = scmp.ne.s32.totalorder %s234, %s236
      %p240 = scmp.eq.s32.totalorder %s49, 0
      %p241 = por %p239, %p240
      %p242 = scmp.ne.s32.totalorder %s234, %s236
      %p243 = scmp.eq.s32.totalorder %s54, 1
      %p244 = por %p242, %p243
      %p245 = scmp.ne.s32.totalorder %s236, %s237
      %p246 = scmp.eq.s32.totalorder %s54, 0
      %p247 = por %p245, %p246
      %p248 = scmp.ne.s32.totalorder %s236, %s237
      %p249 = scmp.eq.s32.totalorder %s55, 1
      %p250 = por %p248, %p249
      %p252 = scmp.ne.s32.totalorder %s237, %s251
      %p253 = scmp.eq.s32.totalorder %s55, 0
      %p254 = por %p252, %p253
      %s256 = sadd.s32 %s255, 1
      %p259 = scmp.eq.s32.totalorder %s49, 1
      %p260 = scmp.ne.s32.totalorder %s255, %s257
      %p261 = scmp.eq.s32.totalorder %s49, 0
      %p262 = por %p260, %p261
      %p263 = scmp.ne.s32.totalorder %s255, %s257
      %p264 = scmp.eq.s32.totalorder %s54, 1
      %p265 = por %p263, %p264
      %p266 = scmp.ne.s32.totalorder %s257, %s258
      %p267 = scmp.eq.s32.totalorder %s54, 0
      %p268 = por %p266, %p267
      %p269 = scmp.ne.s32.totalorder %s257, %s258
      %p270 = scmp.eq.s32.totalorder %s55, 1
      %p271 = por %p269, %p270
      %p273 = scmp.ne.s32.totalorder %s258, %s272
      %p274 = scmp.eq.s32.totalorder %s55, 0
      %p275 = por %p273, %p274
      %s277 = sadd.s32 %s276, 1
      %p280 = scmp.eq.s32.totalorder %s49, 1
      %p281 = scmp.ne.s32.totalorder %s276, %s278
      %p282 = scmp.eq.s32.totalorder %s49, 0
      %p283 = por %p281, %p282
      %p284 = scmp.ne.s32.totalorder %s276, %s278
      %p285 = scmp.eq.s32.totalorder %s54, 1
      %p286 = por %p284, %p285
      %p287 = scmp.ne.s32.totalorder %s278, %s279
      %p288 = scmp.eq.s32.totalorder %s54, 0
      %p289 = por %p287, %p288
      %p290 = scmp.ne.s32.totalorder %s278, %s279
      %p291 = scmp.eq.s32.totalorder %s55, 1
      %p292 = por %p290, %p291
      %p294 = scmp.ne.s32.totalorder %s279, %s293
      %p295 = scmp.eq.s32.totalorder %s55, 0
      %p296 = por %p294, %p295
      %s298 = sadd.s32 %s297, 1
      %p301 = scmp.eq.s32.totalorder %s49, 1
      %p302 = scmp.ne.s32.totalorder %s297, %s299
      %p303 = scmp.eq.s32.totalorder %s49, 0
      %p304 = por %p302, %p303
      %p305 = scmp.ne.s32.totalorder %s297, %s299
      %p306 = scmp.eq.s32.totalorder %s54, 1
      %p307 = por %p305, %p306
      %p308 = scmp.ne.s32.totalorder %s299, %s300
      %p309 = scmp.eq.s32.totalorder %s54, 0
      %p310 = por %p308, %p309
      %p311 = scmp.ne.s32.totalorder %s299, %s300
      %p312 = scmp.eq.s32.totalorder %s55, 1
      %p313 = por %p311, %p312
      %p315 = scmp.ne.s32.totalorder %s300, %s314
      %p316 = scmp.eq.s32.totalorder %s55, 0
      %p317 = por %p315, %p316
      %s319 = sadd.s32 %s318, 1
      %p322 = scmp.eq.s32.totalorder %s49, 1
      %p323 = scmp.ne.s32.totalorder %s318, %s320
      %p324 = scmp.eq.s32.totalorder %s49, 0
      %p325 = por %p323, %p324
      %p326 = scmp.ne.s32.totalorder %s318, %s320
      %p327 = scmp.eq.s32.totalorder %s54, 1
      %p328 = por %p326, %p327
      %p329 = scmp.ne.s32.totalorder %s320, %s321
      %p330 = scmp.eq.s32.totalorder %s54, 0
      %p331 = por %p329, %p330
      %p332 = scmp.ne.s32.totalorder %s320, %s321
      %p333 = scmp.eq.s32.totalorder %s55, 1
      %p334 = por %p332, %p333
      %p336 = scmp.ne.s32.totalorder %s321, %s335
      %p337 = scmp.eq.s32.totalorder %s55, 0
      %p338 = por %p336, %p337
      %s340 = sadd.s32 %s339, 1
      %p343 = scmp.eq.s32.totalorder %s49, 1
      %p344 = scmp.ne.s32.totalorder %s339, %s341
      %p345 = scmp.eq.s32.totalorder %s49, 0
      %p346 = por %p344, %p345
      %p347 = scmp.ne.s32.totalorder %s339, %s341
      %p348 = scmp.eq.s32.totalorder %s54, 1
      %p349 = por %p347, %p348
      %p350 = scmp.ne.s32.totalorder %s341, %s342
      %p351 = scmp.eq.s32.totalorder %s54, 0
      %p352 = por %p350, %p351
      %p353 = scmp.ne.s32.totalorder %s341, %s342
      %p354 = scmp.eq.s32.totalorder %s55, 1
      %p355 = por %p353, %p354
      %p357 = scmp.ne.s32.totalorder %s342, %s356
      %p358 = scmp.eq.s32.totalorder %s55, 0
      %p359 = por %p357, %p358
      %s361 = sadd.s32 %s360, 1
      %p364 = scmp.eq.s32.totalorder %s49, 1
      %p365 = scmp.ne.s32.totalorder %s360, %s362
      %p366 = scmp.eq.s32.totalorder %s49, 0
      %p367 = por %p365, %p366
      %p368 = scmp.ne.s32.totalorder %s360, %s362
      %p369 = scmp.eq.s32.totalorder %s54, 1
      %p370 = por %p368, %p369
      %p371 = scmp.ne.s32.totalorder %s362, %s363
      %p372 = scmp.eq.s32.totalorder %s54, 0
      %p373 = por %p371, %p372
      %p374 = scmp.ne.s32.totalorder %s362, %s363
      %p375 = scmp.eq.s32.totalorder %s55, 1
      %p376 = por %p374, %p375
      %p378 = scmp.ne.s32.totalorder %s363, %s377
      %p379 = scmp.eq.s32.totalorder %s55, 0
      %p380 = por %p378, %p379
      %s382 = sadd.s32 %s381, 1
      %p385 = scmp.eq.s32.totalorder %s49, 1
      %p386 = scmp.ne.s32.totalorder %s381, %s383
      %p387 = scmp.eq.s32.totalorder %s49, 0
      %p388 = por %p386, %p387
      %p389 = scmp.ne.s32.totalorder %s381, %s383
      %p390 = scmp.eq.s32.totalorder %s54, 1
      %p391 = por %p389, %p390
      %p392 = scmp.ne.s32.totalorder %s383, %s384
      %p393 = scmp.eq.s32.totalorder %s54, 0
      %p394 = por %p392, %p393
      %p395 = scmp.ne.s32.totalorder %s383, %s384
      %p396 = scmp.eq.s32.totalorder %s55, 1
      %p397 = por %p395, %p396
      %p399 = scmp.ne.s32.totalorder %s384, %s398
      %p400 = scmp.eq.s32.totalorder %s55, 0
      %p401 = por %p399, %p400
      %s403 = sadd.s32 %s402, 1
      %p406 = scmp.eq.s32.totalorder %s49, 1
      %p407 = scmp.ne.s32.totalorder %s402, %s404
      %p408 = scmp.eq.s32.totalorder %s49, 0
      %p409 = por %p407, %p408
      %p410 = scmp.ne.s32.totalorder %s402, %s404
      %p411 = scmp.eq.s32.totalorder %s54, 1
      %p412 = por %p410, %p411
      %p413 = scmp.ne.s32.totalorder %s404, %s405
      %p414 = scmp.eq.s32.totalorder %s54, 0
      %p415 = por %p413, %p414
      %p416 = scmp.ne.s32.totalorder %s404, %s405
      %p417 = scmp.eq.s32.totalorder %s55, 1
      %p418 = por %p416, %p417
      %p420 = scmp.ne.s32.totalorder %s405, %s419
      %p421 = scmp.eq.s32.totalorder %s55, 0
      %p422 = por %p420, %p421
      %s424 = sadd.s32 %s423, 1
      %p427 = scmp.eq.s32.totalorder %s49, 1
      %p428 = scmp.ne.s32.totalorder %s423, %s425
      %p429 = scmp.eq.s32.totalorder %s49, 0
      %p430 = por %p428, %p429
      %p431 = scmp.ne.s32.totalorder %s423, %s425
      %p432 = scmp.eq.s32.totalorder %s54, 1
      %p433 = por %p431, %p432
      %p434 = scmp.ne.s32.totalorder %s425, %s426
      %p435 = scmp.eq.s32.totalorder %s54, 0
      %p436 = por %p434, %p435
      %p437 = scmp.ne.s32.totalorder %s425, %s426
      %p438 = scmp.eq.s32.totalorder %s55, 1
      %p439 = por %p437, %p438
      %p441 = scmp.ne.s32.totalorder %s426, %s440
      %p442 = scmp.eq.s32.totalorder %s55, 0
      %p443 = por %p441, %p442
      %s445 = sadd.s32 %s444, 1
      %p448 = scmp.eq.s32.totalorder %s49, 1
      %p449 = scmp.ne.s32.totalorder %s444, %s446
      %p450 = scmp.eq.s32.totalorder %s49, 0
      %p451 = por %p449, %p450
      %p452 = scmp.ne.s32.totalorder %s444, %s446
      %p453 = scmp.eq.s32.totalorder %s54, 1
      %p454 = por %p452, %p453
      %p455 = scmp.ne.s32.totalorder %s446, %s447
      %p456 = scmp.eq.s32.totalorder %s54, 0
      %p457 = por %p455, %p456
      %p458 = scmp.ne.s32.totalorder %s446, %s447
      %p459 = scmp.eq.s32.totalorder %s55, 1
      %p460 = por %p458, %p459
      %p462 = scmp.ne.s32.totalorder %s447, %s461
      %p463 = scmp.eq.s32.totalorder %s55, 0
      %p464 = por %p462, %p463
      %s466 = sadd.s32 %s465, 1
      %p469 = scmp.eq.s32.totalorder %s49, 1
      %p470 = scmp.ne.s32.totalorder %s465, %s467
      %p471 = scmp.eq.s32.totalorder %s49, 0
      %p472 = por %p470, %p471
      %p473 = scmp.ne.s32.totalorder %s465, %s467
      %p474 = scmp.eq.s32.totalorder %s54, 1
      %p475 = por %p473, %p474
      %p476 = scmp.ne.s32.totalorder %s467, %s468
      %p477 = scmp.eq.s32.totalorder %s54, 0
      %p478 = por %p476, %p477
      %p479 = scmp.ne.s32.totalorder %s467, %s468
      %p480 = scmp.eq.s32.totalorder %s55, 1
      %p481 = por %p479, %p480
      %p483 = scmp.ne.s32.totalorder %s468, %s482
      %p484 = scmp.eq.s32.totalorder %s55, 0
      %p485 = por %p483, %p484
      %s487 = sadd.s32 %s486, 1
      %p490 = scmp.eq.s32.totalorder %s49, 1
      %p491 = scmp.ne.s32.totalorder %s486, %s488
      %p492 = scmp.eq.s32.totalorder %s49, 0
      %p493 = por %p491, %p492
      %p494 = scmp.ne.s32.totalorder %s486, %s488
      %p495 = scmp.eq.s32.totalorder %s54, 1
      %p496 = por %p494, %p495
      %p497 = scmp.ne.s32.totalorder %s488, %s489
      %p498 = scmp.eq.s32.totalorder %s54, 0
      %p499 = por %p497, %p498
      %p500 = scmp.ne.s32.totalorder %s488, %s489
      %p501 = scmp.eq.s32.totalorder %s55, 1
      %p502 = por %p500, %p501
      %p504 = scmp.ne.s32.totalorder %s489, %s503
      %p505 = scmp.eq.s32.totalorder %s55, 0
      %p506 = por %p504, %p505
      %s508 = sadd.s32 %s507, 1
      %p511 = scmp.eq.s32.totalorder %s49, 1
      %p512 = scmp.ne.s32.totalorder %s507, %s509
      %p513 = scmp.eq.s32.totalorder %s49, 0
      %p514 = por %p512, %p513
      %p515 = scmp.ne.s32.totalorder %s507, %s509
      %p516 = scmp.eq.s32.totalorder %s54, 1
      %p517 = por %p515, %p516
      %p518 = scmp.ne.s32.totalorder %s509, %s510
      %p519 = scmp.eq.s32.totalorder %s54, 0
      %p520 = por %p518, %p519
      %p521 = scmp.ne.s32.totalorder %s509, %s510
      %p522 = scmp.eq.s32.totalorder %s55, 1
      %p523 = por %p521, %p522
      %p525 = scmp.ne.s32.totalorder %s510, %s524
      %p526 = scmp.eq.s32.totalorder %s55, 0
      %p527 = por %p525, %p526
      %s529 = sadd.s32 %s528, 1
      %p532 = scmp.eq.s32.totalorder %s49, 1
      %p533 = scmp.ne.s32.totalorder %s528, %s530
      %p534 = scmp.eq.s32.totalorder %s49, 0
      %p535 = por %p533, %p534
      %p536 = scmp.ne.s32.totalorder %s528, %s530
      %p537 = scmp.eq.s32.totalorder %s54, 1
      %p538 = por %p536, %p537
      %p539 = scmp.ne.s32.totalorder %s530, %s531
      %p540 = scmp.eq.s32.totalorder %s54, 0
      %p541 = por %p539, %p540
      %p542 = scmp.ne.s32.totalorder %s530, %s531
      %p543 = scmp.eq.s32.totalorder %s55, 1
      %p544 = por %p542, %p543
      %p546 = scmp.ne.s32.totalorder %s531, %s545
      %p547 = scmp.eq.s32.totalorder %s55, 0
      %p548 = por %p546, %p547
      %s550 = sadd.s32 %s549, 1
      %p553 = scmp.eq.s32.totalorder %s49, 1
      %p554 = scmp.ne.s32.totalorder %s549, %s551
      %p555 = scmp.eq.s32.totalorder %s49, 0
      %p556 = por %p554, %p555
      %p557 = scmp.ne.s32.totalorder %s549, %s551
      %p558 = scmp.eq.s32.totalorder %s54, 1
      %p559 = por %p557, %p558
      %p560 = scmp.ne.s32.totalorder %s551, %s552
      %p561 = scmp.eq.s32.totalorder %s54, 0
      %p562 = por %p560, %p561
      %p563 = scmp.ne.s32.totalorder %s551, %s552
      %p564 = scmp.eq.s32.totalorder %s55, 1
      %p565 = por %p563, %p564
      %p567 = scmp.ne.s32.totalorder %s552, %s566
      %p568 = scmp.eq.s32.totalorder %s55, 0
      %p569 = por %p567, %p568
      %s571 = sadd.s32 %s570, 1
      %p574 = scmp.eq.s32.totalorder %s49, 1
      %p575 = scmp.ne.s32.totalorder %s570, %s572
      %p576 = scmp.eq.s32.totalorder %s49, 0
      %p577 = por %p575, %p576
      %p578 = scmp.ne.s32.totalorder %s570, %s572
      %p579 = scmp.eq.s32.totalorder %s54, 1
      %p580 = por %p578, %p579
      %p581 = scmp.ne.s32.totalorder %s572, %s573
      %p582 = scmp.eq.s32.totalorder %s54, 0
      %p583 = por %p581, %p582
      %p584 = scmp.ne.s32.totalorder %s572, %s573
      %p585 = scmp.eq.s32.totalorder %s55, 1
      %p586 = por %p584, %p585
      %p588 = scmp.ne.s32.totalorder %s573, %s587
      %p589 = scmp.eq.s32.totalorder %s55, 0
      %p590 = por %p588, %p589
      %s591 = ssub.s32 %s49, %s56
      %p592 = scmp.eq.s32.totalorder %s591, 0
      %s594 = sadd.s32 %s593, 1
      %s595 = scalar_select %p592, %s593, %s594
      %p598 = pneg %p592
      %p599 = scmp.eq.s32.totalorder %s49, 1
      %p600 = por %p598, %p599
      %p601 = scmp.ne.s32.totalorder %s593, %s596
      %p602 = scmp.eq.s32.totalorder %s49, 0
      %p603 = por %p601, %p602
      %p604 = scmp.ne.s32.totalorder %s593, %s596
      %p605 = scmp.eq.s32.totalorder %s54, 1
      %p606 = por %p604, %p605
      %p607 = scmp.ne.s32.totalorder %s596, %s597
      %p608 = scmp.eq.s32.totalorder %s54, 0
      %p609 = por %p607, %p608
      %p610 = scmp.ne.s32.totalorder %s596, %s597
      %p611 = scmp.eq.s32.totalorder %s55, 1
      %p612 = por %p610, %p611
      %p614 = scmp.ne.s32.totalorder %s597, %s613
      %p615 = scmp.eq.s32.totalorder %s55, 0
      %p616 = por %p614, %p615
      %s617 = ssub.s32 %s49, %s56
      %p618 = scmp.eq.s32.totalorder %s617, 0
      %s620 = sadd.s32 %s619, 1
      %s621 = scalar_select %p618, %s619, %s620
      %p624 = pneg %p618
      %p625 = scmp.eq.s32.totalorder %s49, 1
      %p626 = por %p624, %p625
      %p627 = scmp.ne.s32.totalorder %s619, %s622
      %p628 = scmp.eq.s32.totalorder %s49, 0
      %p629 = por %p627, %p628
      %p630 = scmp.ne.s32.totalorder %s619, %s622
      %p631 = scmp.eq.s32.totalorder %s54, 1
      %p632 = por %p630, %p631
      %p633 = scmp.ne.s32.totalorder %s622, %s623
      %p634 = scmp.eq.s32.totalorder %s54, 0
      %p635 = por %p633, %p634
      %p636 = scmp.ne.s32.totalorder %s622, %s623
      %p637 = scmp.eq.s32.totalorder %s55, 1
      %p638 = por %p636, %p637
      %p640 = scmp.ne.s32.totalorder %s623, %s639
      %p641 = scmp.eq.s32.totalorder %s55, 0
      %p642 = por %p640, %p641
      %p643 = scmp.le.s32.totalorder 1, %s49
      %p644 = scmp.lt.s32.totalorder %s49, 3
      %p645 = pnand %p643, %p644
      %p646 = pneg %p645
      // Predicated region
      $region9: #{tpu_custom_call.1} parent=5 // pred_check
        _
      $region10: #{tpu_custom_call.1} parent=5 // pred_check_branch
        %648 = sbr.rel (%p645) target = $region12
      $region11: #{tpu_custom_call.1} parent=5 // pred_region
        %s649 = ssub.s32 %s49, 1
        // Predicated region
        $region13: #{tpu_custom_call.1} parent=11 // pred_check
          %p650 = pneg %p226
        $region14: #{tpu_custom_call.1} parent=11 // pred_check_branch
          %652 = sbr.rel (%p650) target = $region16
        $region15: #{tpu_custom_call.1} parent=11 // pred_region
          %s654 = ssub.s32 4096, 4096
          %655 = vsyncadd [#allocation9], %s654
          %s656 = sshll.u32 [#allocation8], 4
          %s657 = int_to_ptr.vmem [resolvable:$true] %s656
          %662 = dma.hbm_to_vmem [thread:$0]  %s6, 4096, %s657, [#allocation9], 128, 128, 8
        $region16: #{tpu_custom_call.1} parent=11 // pred_fallthru
          _
        // Predicated region
        $region17: #{tpu_custom_call.1} parent=11 // pred_check
          %p663 = pneg %p247
        $region18: #{tpu_custom_call.1} parent=11 // pred_check_branch
          %665 = sbr.rel (%p663) target = $region20
        $region19: #{tpu_custom_call.1} parent=11 // pred_region
          _
        $region20: #{tpu_custom_call.1} parent=11 // pred_fallthru
          _
        // Predicated region
        $region21: #{tpu_custom_call.1} parent=11 // pred_check
          %p666 = pneg %p268
        $region22: #{tpu_custom_call.1} parent=11 // pred_check_branch
          %668 = sbr.rel (%p666) target = $region24
        $region23: #{tpu_custom_call.1} parent=11 // pred_region
          _
        $region24: #{tpu_custom_call.1} parent=11 // pred_fallthru
          _
        // Predicated region
        $region25: #{tpu_custom_call.1} parent=11 // pred_check
          %p669 = pneg %p289
        $region26: #{tpu_custom_call.1} parent=11 // pred_check_branch
          %671 = sbr.rel (%p669) target = $region28
        $region27: #{tpu_custom_call.1} parent=11 // pred_region
          _
        $region28: #{tpu_custom_call.1} parent=11 // pred_fallthru
          _
        // Predicated region
        $region29: #{tpu_custom_call.1} parent=11 // pred_check
          %p672 = pneg %p310
        $region30: #{tpu_custom_call.1} parent=11 // pred_check_branch
          %674 = sbr.rel (%p672) target = $region32
        $region31: #{tpu_custom_call.1} parent=11 // pred_region
          %s676 = ssub.s32 6144, 6144
          %677 = vsyncadd [#allocation9], %s676
          %s678 = sshll.u32 [#allocation10], 4
          %s679 = int_to_ptr.vmem [resolvable:$true] %s678
          %684 = dma.hbm_to_vmem [thread:$0]  %s10, 6144, %s679, [#allocation9], 128, 128, 8
        $region32: #{tpu_custom_call.1} parent=11 // pred_fallthru
          _
        // Predicated region
        $region33: #{tpu_custom_call.1} parent=11 // pred_check
          %p685 = pneg %p331
        $region34: #{tpu_custom_call.1} parent=11 // pred_check_branch
          %687 = sbr.rel (%p685) target = $region36
        $region35: #{tpu_custom_call.1} parent=11 // pred_region
          %s689 = ssub.s32 6144, 6144
          %690 = vsyncadd [#allocation12], %s689
          %s691 = sshll.u32 [#allocation11], 4
          %s692 = int_to_ptr.vmem [resolvable:$true] %s691
          %697 = dma.hbm_to_vmem [thread:$0]  %s11, 6144, %s692, [#allocation12], 128, 128, 8
        $region36: #{tpu_custom_call.1} parent=11 // pred_fallthru
          _
        // Predicated region
        $region37: #{tpu_custom_call.1} parent=11 // pred_check
          %p698 = pneg %p352
        $region38: #{tpu_custom_call.1} parent=11 // pred_check_branch
          %700 = sbr.rel (%p698) target = $region40
        $region39: #{tpu_custom_call.1} parent=11 // pred_region
          _
        $region40: #{tpu_custom_call.1} parent=11 // pred_fallthru
          _
        // Predicated region
        $region41: #{tpu_custom_call.1} parent=11 // pred_check
          %p701 = pneg %p373
        $region42: #{tpu_custom_call.1} parent=11 // pred_check_branch
          %703 = sbr.rel (%p701) target = $region44
        $region43: #{tpu_custom_call.1} parent=11 // pred_region
          %s705 = ssub.s32 6144, 6144
          %706 = vsyncadd [#allocation12], %s705
          %s707 = sshll.u32 [#allocation13], 4
          %s708 = int_to_ptr.vmem [resolvable:$true] %s707
          %713 = dma.hbm_to_vmem [thread:$0]  %s13, 6144, %s708, [#allocation12], 128, 128, 8
        $region44: #{tpu_custom_call.1} parent=11 // pred_fallthru
          _
        // Predicated region
        $region45: #{tpu_custom_call.1} parent=11 // pred_check
          %p714 = pneg %p394
        $region46: #{tpu_custom_call.1} parent=11 // pred_check_branch
          %716 = sbr.rel (%p714) target = $region48
        $region47: #{tpu_custom_call.1} parent=11 // pred_region
          _
        $region48: #{tpu_custom_call.1} parent=11 // pred_fallthru
          _
        // Predicated region
        $region49: #{tpu_custom_call.1} parent=11 // pred_check
          %p717 = pneg %p415
        $region50: #{tpu_custom_call.1} parent=11 // pred_check_branch
          %719 = sbr.rel (%p717) target = $region52
        $region51: #{tpu_custom_call.1} parent=11 // pred_region
          %s721 = ssub.s32 2048, 2048
          %722 = vsyncadd [#allocation15], %s721
          %s723 = sshll.u32 [#allocation14], 4
          %s724 = int_to_ptr.vmem [resolvable:$true] %s723
          %729 = dma.hbm_to_vmem [thread:$0]  %s15, 2048, %s724, [#allocation15], 128, 128, 8
        $region52: #{tpu_custom_call.1} parent=11 // pred_fallthru
          _
        // Predicated region
        $region53: #{tpu_custom_call.1} parent=11 // pred_check
          %p730 = pneg %p436
        $region54: #{tpu_custom_call.1} parent=11 // pred_check_branch
          %732 = sbr.rel (%p730) target = $region56
        $region55: #{tpu_custom_call.1} parent=11 // pred_region
          _
        $region56: #{tpu_custom_call.1} parent=11 // pred_fallthru
          _
        // Predicated region
        $region57: #{tpu_custom_call.1} parent=11 // pred_check
          %p733 = pneg %p457
        $region58: #{tpu_custom_call.1} parent=11 // pred_check_branch
          %735 = sbr.rel (%p733) target = $region60
        $region59: #{tpu_custom_call.1} parent=11 // pred_region
          %s737 = ssub.s32 2048, 2048
          %738 = vsyncadd [#allocation15], %s737
          %s739 = sshll.u32 [#allocation16], 4
          %s740 = int_to_ptr.vmem [resolvable:$true] %s739
          %745 = dma.hbm_to_vmem [thread:$0]  %s17, 2048, %s740, [#allocation15], 128, 128, 8
        $region60: #{tpu_custom_call.1} parent=11 // pred_fallthru
          _
        // Predicated region
        $region61: #{tpu_custom_call.1} parent=11 // pred_check
          %p746 = pneg %p478
        $region62: #{tpu_custom_call.1} parent=11 // pred_check_branch
          %748 = sbr.rel (%p746) target = $region64
        $region63: #{tpu_custom_call.1} parent=11 // pred_region
          _
        $region64: #{tpu_custom_call.1} parent=11 // pred_fallthru
          _
        // Predicated region
        $region65: #{tpu_custom_call.1} parent=11 // pred_check
          %p749 = pneg %p499
        $region66: #{tpu_custom_call.1} parent=11 // pred_check_branch
          %751 = sbr.rel (%p749) target = $region68
        $region67: #{tpu_custom_call.1} parent=11 // pred_region
          %s753 = ssub.s32 2048, 2048
          %754 = vsyncadd [#allocation18], %s753
          %s755 = sshll.u32 [#allocation17], 4
          %s756 = int_to_ptr.vmem [resolvable:$true] %s755
          %761 = dma.hbm_to_vmem [thread:$0]  %s19, 2048, %s756, [#allocation18], 128, 128, 8
        $region68: #{tpu_custom_call.1} parent=11 // pred_fallthru
          _
        // Predicated region
        $region69: #{tpu_custom_call.1} parent=11 // pred_check
          %p762 = pneg %p520
        $region70: #{tpu_custom_call.1} parent=11 // pred_check_branch
          %764 = sbr.rel (%p762) target = $region72
        $region71: #{tpu_custom_call.1} parent=11 // pred_region
          _
        $region72: #{tpu_custom_call.1} parent=11 // pred_fallthru
          _
        // Predicated region
        $region73: #{tpu_custom_call.1} parent=11 // pred_check
          %p765 = pneg %p541
        $region74: #{tpu_custom_call.1} parent=11 // pred_check_branch
          %767 = sbr.rel (%p765) target = $region76
        $region75: #{tpu_custom_call.1} parent=11 // pred_region
          %s769 = ssub.s32 2048, 2048
          %770 = vsyncadd [#allocation18], %s769
          %s771 = sshll.u32 [#allocation19], 4
          %s772 = int_to_ptr.vmem [resolvable:$true] %s771
          %777 = dma.hbm_to_vmem [thread:$0]  %s21, 2048, %s772, [#allocation18], 128, 128, 8
        $region76: #{tpu_custom_call.1} parent=11 // pred_fallthru
          _
        // Predicated region
        $region77: #{tpu_custom_call.1} parent=11 // pred_check
          %p778 = pneg %p562
        $region78: #{tpu_custom_call.1} parent=11 // pred_check_branch
          %780 = sbr.rel (%p778) target = $region80
        $region79: #{tpu_custom_call.1} parent=11 // pred_region
          %s782 = ssub.s32 2048, 2048
          %783 = vsyncadd [#allocation21], %s782
          %s784 = sshll.u32 [#allocation20], 4
          %s785 = int_to_ptr.vmem [resolvable:$true] %s784
          %790 = dma.hbm_to_vmem [thread:$0]  %s22, 2048, %s785, [#allocation21], 128, 128, 8
        $region80: #{tpu_custom_call.1} parent=11 // pred_fallthru
          _
        // Predicated region
        $region81: #{tpu_custom_call.1} parent=11 // pred_check
          %p791 = pneg %p583
        $region82: #{tpu_custom_call.1} parent=11 // pred_check_branch
          %793 = sbr.rel (%p791) target = $region84
        $region83: #{tpu_custom_call.1} parent=11 // pred_region
          _
        $region84: #{tpu_custom_call.1} parent=11 // pred_fallthru
          _
      $region12: #{tpu_custom_call.1} parent=5 // pred_fallthru
        _
      %p794 = scmp.lt.s32.totalorder %s49, 2
      // Predicated region
      $region85: #{tpu_custom_call.1} parent=5 // pred_check
        %p795 = pneg %p794
      $region86: #{tpu_custom_call.1} parent=5 // pred_check_branch
        %797 = sbr.rel (%p795) target = $region88
      $region87: #{tpu_custom_call.1} parent=5 // pred_region
        // Predicated region
        $region89: #{tpu_custom_call.1} parent=87 // pred_check
          %p798 = pneg %p69
        $region90: #{tpu_custom_call.1} parent=87 // pred_check_branch
          %800 = sbr.rel (%p798) target = $region92
        $region91: #{tpu_custom_call.1} parent=87 // pred_region
          %s801 = smul.u32 2, %s49
          %p802 = scmp.lt.s32.totalorder %s801, 3
          %s803 = scalar_select %p802, %s801, 3
          %s804 = smul.addr %s803, 8
          %s805 = scalar_lea.vmem %s0, %s804
          %s806 = smul.u32 2, %s49
        $region92: #{tpu_custom_call.1} parent=87 // pred_fallthru
          _
        // Predicated region
        $region93: #{tpu_custom_call.1} parent=87 // pred_check
          %p807 = pneg %p95
        $region94: #{tpu_custom_call.1} parent=87 // pred_check_branch
          %809 = sbr.rel (%p807) target = $region96
        $region95: #{tpu_custom_call.1} parent=87 // pred_region
          %s810 = sand.u32 %s85, 1
          %s811 = scalar_lea.sflag [#allocation3], %s810
          %s812 = sand.u32 %s85, 1
          %s813 = smul.addr %s812, 16
          %s814 = scalar_lea.vmem [#allocation2], %s813
          %s815 = smul.u32 2, %s49
          %s817 = ssub.s32 256, 256
          %818 = vsyncadd %s811, %s817
          %s819 = smul.addr %s815, 128
          %s820 = scalar_lea.hbm %s1, %s819
          %s821 = sshll.u32 %s814, 4
          %s822 = int_to_ptr.vmem [resolvable:$true] %s821
          %827 = dma.hbm_to_vmem [thread:$0]  %s820, 256, %s822, %s811, 128, 128, 8
        $region96: #{tpu_custom_call.1} parent=87 // pred_fallthru
          _
        // Predicated region
        $region97: #{tpu_custom_call.1} parent=87 // pred_check
          %p828 = pneg %p121
        $region98: #{tpu_custom_call.1} parent=87 // pred_check_branch
          %830 = sbr.rel (%p828) target = $region100
        $region99: #{tpu_custom_call.1} parent=87 // pred_region
          %s831 = sand.u32 %s49, 1
          %s832 = scalar_lea.sflag [#allocation6], %s831
          %s833 = sand.u32 %s111, 1
          %s834 = smul.addr %s833, 16
          %s835 = scalar_lea.vmem [#allocation5], %s834
          %s836 = smul.u32 2, %s49
          %s838 = ssub.s32 256, 256
          %839 = vsyncadd %s832, %s838
          %s840 = smul.addr %s836, 128
          %s841 = scalar_lea.hbm %s2, %s840
          %s842 = sshll.u32 %s835, 4
          %s843 = int_to_ptr.vmem [resolvable:$true] %s842
          %848 = dma.hbm_to_vmem [thread:$0]  %s841, 256, %s843, %s832, 128, 128, 8
        $region100: #{tpu_custom_call.1} parent=87 // pred_fallthru
          _
        // Predicated region
        $region101: #{tpu_custom_call.1} parent=87 // pred_check
          %p849 = pneg %p147
        $region102: #{tpu_custom_call.1} parent=87 // pred_check_branch
          %851 = sbr.rel (%p849) target = $region104
        $region103: #{tpu_custom_call.1} parent=87 // pred_region
          %s852 = sand.u32 %s49, 1
          %s853 = scalar_lea.sflag [#allocation6], %s852
          %s854 = sand.u32 %s137, 1
          %s855 = smul.addr %s854, 16
          %s856 = scalar_lea.vmem [#allocation7], %s855
          %s857 = smul.u32 2, %s49
          %s859 = ssub.s32 256, 256
          %860 = vsyncadd %s853, %s859
          %s861 = smul.addr %s857, 128
          %s862 = scalar_lea.hbm %s3, %s861
          %s863 = sshll.u32 %s856, 4
          %s864 = int_to_ptr.vmem [resolvable:$true] %s863
          %869 = dma.hbm_to_vmem [thread:$0]  %s862, 256, %s864, %s853, 128, 128, 8
        $region104: #{tpu_custom_call.1} parent=87 // pred_fallthru
          _
        // Predicated region
        $region105: #{tpu_custom_call.1} parent=87 // pred_check
          %p870 = pneg %p173
        $region106: #{tpu_custom_call.1} parent=87 // pred_check_branch
          %872 = sbr.rel (%p870) target = $region108
        $region107: #{tpu_custom_call.1} parent=87 // pred_region
          %s873 = smul.u32 2, %s49
          %p874 = scmp.lt.s32.totalorder %s873, 3
          %s875 = scalar_select %p874, %s873, 3
          %s876 = scalar_lea.vmem %s4, %s875
          %s877 = smul.u32 2, %s49
        $region108: #{tpu_custom_call.1} parent=87 // pred_fallthru
          _
        // Predicated region
        $region109: #{tpu_custom_call.1} parent=87 // pred_check
          %p878 = pneg %p199
        $region110: #{tpu_custom_call.1} parent=87 // pred_check_branch
          %880 = sbr.rel (%p878) target = $region112
        $region111: #{tpu_custom_call.1} parent=87 // pred_region
          %s881 = smul.u32 2, %s49
          %p882 = scmp.lt.s32.totalorder %s881, 3
          %s883 = scalar_select %p882, %s881, 3
          %s884 = smul.addr %s883, 8
          %s885 = scalar_lea.vmem %s5, %s884
          %s886 = smul.u32 2, %s49
        $region112: #{tpu_custom_call.1} parent=87 // pred_fallthru
          _
      $region88: #{tpu_custom_call.1} parent=5 // pred_fallthru
        _
      %p887 = scmp.le.s32.totalorder 1, %s49
      %p888 = scmp.lt.s32.totalorder %s49, 3
      %p889 = pnand %p887, %p888
      %p890 = pneg %p889
      // Predicated region
      $region113: #{tpu_custom_call.1} parent=5 // pred_check
        _
      $region114: #{tpu_custom_call.1} parent=5 // pred_check_branch
        %892 = sbr.rel (%p889) target = $region116
      $region115: #{tpu_custom_call.1} parent=5 // pred_region
        %s893 = ssub.s32 %s49, 1
        %s894 = sand.u32 %s88, 1
        %s895 = scalar_lea.sflag [#allocation3], %s894
        %s896 = sand.u32 %s88, 1
        %s897 = smul.addr %s896, 16
        %s898 = scalar_lea.vmem [#allocation2], %s897
        // Predicated region
        $region117: #{tpu_custom_call.1} parent=115 // pred_check
          %p899 = pneg %p101
        $region118: #{tpu_custom_call.1} parent=115 // pred_check_branch
          %901 = sbr.rel (%p899) target = $region120
        $region119: #{tpu_custom_call.1} parent=115 // pred_region
          %902 = dma.done %s895, 256
        $region120: #{tpu_custom_call.1} parent=115 // pred_fallthru
          _
        %s903 = sand.u32 %s54, 1
        %s904 = scalar_lea.sflag [#allocation6], %s903
        %s905 = sand.u32 %s114, 1
        %s906 = smul.addr %s905, 16
        %s907 = scalar_lea.vmem [#allocation5], %s906
        // Predicated region
        $region121: #{tpu_custom_call.1} parent=115 // pred_check
          %p908 = pneg %p127
        $region122: #{tpu_custom_call.1} parent=115 // pred_check_branch
          %910 = sbr.rel (%p908) target = $region124
        $region123: #{tpu_custom_call.1} parent=115 // pred_region
          %911 = dma.done %s904, 256
        $region124: #{tpu_custom_call.1} parent=115 // pred_fallthru
          _
        %s912 = sand.u32 %s54, 1
        %s913 = scalar_lea.sflag [#allocation6], %s912
        %s914 = sand.u32 %s140, 1
        %s915 = smul.addr %s914, 16
        %s916 = scalar_lea.vmem [#allocation7], %s915
        // Predicated region
        $region125: #{tpu_custom_call.1} parent=115 // pred_check
          %p917 = pneg %p153
        $region126: #{tpu_custom_call.1} parent=115 // pred_check_branch
          %919 = sbr.rel (%p917) target = $region128
        $region127: #{tpu_custom_call.1} parent=115 // pred_region
          %920 = dma.done %s913, 256
        $region128: #{tpu_custom_call.1} parent=115 // pred_fallthru
          _
        // Predicated region
        $region129: #{tpu_custom_call.1} parent=115 // pred_check
          %p921 = pneg %p226
        $region130: #{tpu_custom_call.1} parent=115 // pred_check_branch
          %923 = sbr.rel (%p921) target = $region132
        $region131: #{tpu_custom_call.1} parent=115 // pred_region
          %924 = dma.done [#allocation9], 4096
        $region132: #{tpu_custom_call.1} parent=115 // pred_fallthru
          _
        // Predicated region
        $region133: #{tpu_custom_call.1} parent=115 // pred_check
          %p925 = pneg %p310
        $region134: #{tpu_custom_call.1} parent=115 // pred_check_branch
          %927 = sbr.rel (%p925) target = $region136
        $region135: #{tpu_custom_call.1} parent=115 // pred_region
          %928 = dma.done [#allocation9], 6144
        $region136: #{tpu_custom_call.1} parent=115 // pred_fallthru
          _
        // Predicated region
        $region137: #{tpu_custom_call.1} parent=115 // pred_check
          %p929 = pneg %p331
        $region138: #{tpu_custom_call.1} parent=115 // pred_check_branch
          %931 = sbr.rel (%p929) target = $region140
        $region139: #{tpu_custom_call.1} parent=115 // pred_region
          %932 = dma.done [#allocation12], 6144
        $region140: #{tpu_custom_call.1} parent=115 // pred_fallthru
          _
        // Predicated region
        $region141: #{tpu_custom_call.1} parent=115 // pred_check
          %p933 = pneg %p373
        $region142: #{tpu_custom_call.1} parent=115 // pred_check_branch
          %935 = sbr.rel (%p933) target = $region144
        $region143: #{tpu_custom_call.1} parent=115 // pred_region
          %936 = dma.done [#allocation12], 6144
        $region144: #{tpu_custom_call.1} parent=115 // pred_fallthru
          _
        // Predicated region
        $region145: #{tpu_custom_call.1} parent=115 // pred_check
          %p937 = pneg %p415
        $region146: #{tpu_custom_call.1} parent=115 // pred_check_branch
          %939 = sbr.rel (%p937) target = $region148
        $region147: #{tpu_custom_call.1} parent=115 // pred_region
          %940 = dma.done [#allocation15], 2048
        $region148: #{tpu_custom_call.1} parent=115 // pred_fallthru
          _
        // Predicated region
        $region149: #{tpu_custom_call.1} parent=115 // pred_check
          %p941 = pneg %p457
        $region150: #{tpu_custom_call.1} parent=115 // pred_check_branch
          %943 = sbr.rel (%p941) target = $region152
        $region151: #{tpu_custom_call.1} parent=115 // pred_region
          %944 = dma.done [#allocation15], 2048
        $region152: #{tpu_custom_call.1} parent=115 // pred_fallthru
          _
        // Predicated region
        $region153: #{tpu_custom_call.1} parent=115 // pred_check
          %p945 = pneg %p499
        $region154: #{tpu_custom_call.1} parent=115 // pred_check_branch
          %947 = sbr.rel (%p945) target = $region156
        $region155: #{tpu_custom_call.1} parent=115 // pred_region
          %948 = dma.done [#allocation18], 2048
        $region156: #{tpu_custom_call.1} parent=115 // pred_fallthru
          _
        // Predicated region
        $region157: #{tpu_custom_call.1} parent=115 // pred_check
          %p949 = pneg %p541
        $region158: #{tpu_custom_call.1} parent=115 // pred_check_branch
          %951 = sbr.rel (%p949) target = $region160
        $region159: #{tpu_custom_call.1} parent=115 // pred_region
          %952 = dma.done [#allocation18], 2048
        $region160: #{tpu_custom_call.1} parent=115 // pred_fallthru
          _
        // Predicated region
        $region161: #{tpu_custom_call.1} parent=115 // pred_check
          %p953 = pneg %p562
        $region162: #{tpu_custom_call.1} parent=115 // pred_check_branch
          %955 = sbr.rel (%p953) target = $region164
        $region163: #{tpu_custom_call.1} parent=115 // pred_region
          %956 = dma.done [#allocation21], 2048
        $region164: #{tpu_custom_call.1} parent=115 // pred_fallthru
          _
        %s957 = smul.u32 2, %s54
        %p958 = scmp.lt.s32.totalorder %s957, 3
        %s959 = scalar_select %p958, %s957, 3
        %s960 = smul.addr %s959, 8
        %s961 = scalar_lea.vmem %s0, %s960
        %p962 = pneg %p75
        %p963 = pneg %p72
        %s964 = sand.u32 %s88, 1
        %s965 = scalar_lea.sflag [#allocation3], %s964
        %s966 = sand.u32 %s88, 1
        %s967 = smul.addr %s966, 16
        %s968 = scalar_lea.vmem [#allocation2], %s967
        %p969 = pneg %p101
        %p970 = pneg %p98
        %s971 = sand.u32 %s54, 1
        %s972 = scalar_lea.sflag [#allocation6], %s971
        %s973 = sand.u32 %s114, 1
        %s974 = smul.addr %s973, 16
        %s975 = scalar_lea.vmem [#allocation5], %s974
        %p976 = pneg %p127
        %p977 = pneg %p124
        %s978 = sand.u32 %s54, 1
        %s979 = scalar_lea.sflag [#allocation6], %s978
        %s980 = sand.u32 %s140, 1
        %s981 = smul.addr %s980, 16
        %s982 = scalar_lea.vmem [#allocation7], %s981
        %p983 = pneg %p153
        %p984 = pneg %p150
        %s985 = smul.u32 2, %s54
        %p986 = scmp.lt.s32.totalorder %s985, 3
        %s987 = scalar_select %p986, %s985, 3
        %s988 = scalar_lea.vmem %s4, %s987
        %p989 = pneg %p179
        %p990 = pneg %p176
        %s991 = smul.u32 2, %s54
        %p992 = scmp.lt.s32.totalorder %s991, 3
        %s993 = scalar_select %p992, %s991, 3
        %s994 = smul.addr %s993, 8
        %s995 = scalar_lea.vmem %s5, %s994
        %p996 = pneg %p205
        %p997 = pneg %p202
        %p998 = pneg %p226
        %p999 = pneg %p223
        %p1000 = pneg %p247
        %p1001 = pneg %p244
        %p1002 = pneg %p268
        %p1003 = pneg %p265
        %p1004 = pneg %p289
        %p1005 = pneg %p286
        %p1006 = pneg %p310
        %p1007 = pneg %p307
        %p1008 = pneg %p331
        %p1009 = pneg %p328
        %p1010 = pneg %p352
        %p1011 = pneg %p349
        %p1012 = pneg %p373
        %p1013 = pneg %p370
        %p1014 = pneg %p394
        %p1015 = pneg %p391
        %p1016 = pneg %p415
        %p1017 = pneg %p412
        %p1018 = pneg %p436
        %p1019 = pneg %p433
        %p1020 = pneg %p457
        %p1021 = pneg %p454
        %p1022 = pneg %p478
        %p1023 = pneg %p475
        %p1024 = pneg %p499
        %p1025 = pneg %p496
        %p1026 = pneg %p520
        %p1027 = pneg %p517
        %p1028 = pneg %p541
        %p1029 = pneg %p538
        %p1030 = pneg %p562
        %p1031 = pneg %p559
        %p1032 = pneg %p583
        %p1033 = pneg %p580
        %p1034 = pneg %p609
        %p1035 = pneg %p606
        %s1036 = sand.u32 %s596, 1
        %s1037 = scalar_lea.sflag [#allocation4], %s1036
        %s1038 = sand.u32 %s596, 1
        %s1039 = smul.addr %s1038, 16
        %s1040 = scalar_lea.vmem [#allocation22], %s1039
        %p1041 = pneg %p635
        %p1042 = pneg %p632
        %s1043 = sand.u32 %s622, 1
        %s1044 = scalar_lea.sflag [#allocation24], %s1043
        %s1045 = sand.u32 %s622, 1
        %s1046 = smul.addr %s1045, 2
        %s1047 = scalar_lea.vmem [#allocation23], %s1046
        %s1048 = smul.u32 2, %s54
        %p1049 = scmp.lt.s32.totalorder %s1048, 3
        %s1050 = scalar_select %p1049, %s1048, 3
        %s1051 = smul.addr %s1050, 8
        %s1052 = scalar_lea.vmem %s0, %s1051
        %s1053 = smul.u32 2, %s54
        %s1054 = smul.u32 2, %s54
        %s1055 = smul.u32 2, %s54
        %s1056 = smul.u32 2, %s54
        %s1057 = smul.u32 2, %s54
        %p1058 = scmp.lt.s32.totalorder %s1057, 3
        %s1059 = scalar_select %p1058, %s1057, 3
        %s1060 = scalar_lea.vmem %s4, %s1059
        %s1061 = smul.u32 2, %s54
        %s1062 = smul.u32 2, %s54
        %p1063 = scmp.lt.s32.totalorder %s1062, 3
        %s1064 = scalar_select %p1063, %s1062, 3
        %s1065 = smul.addr %s1064, 8
        %s1066 = scalar_lea.vmem %s5, %s1065
        %s1067 = smul.u32 2, %s54
        %s1068 = smul.u32 2, %s54
        %s1069 = smul.u32 2, %s54
        %v1070 = vld [vmem:[%s1052] sm:$0xff]
        %v1071 = vld [vmem:[%s1052 + $0x8] sm:$0xff]
        %v1072 = vld [vmem:[%s898] sm:$0xff]
        %v1073 = vld [vmem:[%s898 + $0x8] sm:$0xff]
        %v1074 = vld [vmem:[%s907] sm:$0xff]
        %v1075 = vld [vmem:[%s907 + $0x8] sm:$0xff]
        %v1076 = vld [vmem:[#allocation8] sm:$0xff]
        %v1077 = vld [vmem:[#allocation8 + $0x8] sm:$0xff]
        %v1078 = vld [vmem:[#allocation8 + $0x10] sm:$0xff]
        %v1079 = vld [vmem:[#allocation8 + $0x18] sm:$0xff]
        %v1080 = vld [vmem:[#allocation8 + $0x20] sm:$0xff]
        %v1081 = vld [vmem:[#allocation8 + $0x28] sm:$0xff]
        %v1082 = vld [vmem:[#allocation8 + $0x30] sm:$0xff]
        %v1083 = vld [vmem:[#allocation8 + $0x38] sm:$0xff]
        %v1084 = vld [vmem:[#allocation8 + $0x40] sm:$0xff]
        %v1085 = vld [vmem:[#allocation8 + $0x48] sm:$0xff]
        %v1086 = vld [vmem:[#allocation8 + $0x50] sm:$0xff]
        %v1087 = vld [vmem:[#allocation8 + $0x58] sm:$0xff]
        %v1088 = vld [vmem:[#allocation8 + $0x60] sm:$0xff]
        %v1089 = vld [vmem:[#allocation8 + $0x68] sm:$0xff]
        %v1090 = vld [vmem:[#allocation8 + $0x70] sm:$0xff]
        %v1091 = vld [vmem:[#allocation8 + $0x78] sm:$0xff]
        %v1092 = vld [vmem:[#allocation8 + $0x80] sm:$0xff]
        %v1093 = vld [vmem:[#allocation8 + $0x88] sm:$0xff]
        %v1094 = vld [vmem:[#allocation8 + $0x90] sm:$0xff]
        %v1095 = vld [vmem:[#allocation8 + $0x98] sm:$0xff]
        %v1096 = vld [vmem:[#allocation8 + $0xa0] sm:$0xff]
        %v1097 = vld [vmem:[#allocation8 + $0xa8] sm:$0xff]
        %v1098 = vld [vmem:[#allocation8 + $0xb0] sm:$0xff]
        %v1099 = vld [vmem:[#allocation8 + $0xb8] sm:$0xff]
        %v1100 = vld [vmem:[#allocation8 + $0xc0] sm:$0xff]
        %v1101 = vld [vmem:[#allocation8 + $0xc8] sm:$0xff]
        %v1102 = vld [vmem:[#allocation8 + $0xd0] sm:$0xff]
        %v1103 = vld [vmem:[#allocation8 + $0xd8] sm:$0xff]
        %v1104 = vld [vmem:[#allocation8 + $0xe0] sm:$0xff]
        %v1105 = vld [vmem:[#allocation8 + $0xe8] sm:$0xff]
        %v1106 = vld [vmem:[#allocation8 + $0xf0] sm:$0xff]
        %v1107 = vld [vmem:[#allocation8 + $0xf8] sm:$0xff]
        %v1108 = vld [vmem:[%s7] sm:$0x3]
        %v1109 = vld [vmem:[%s8] sm:$0x1]
        %v1110 = vld [vmem:[%s9] sm:$0x1]
        %v1111 = vld [vmem:[#allocation10] sm:$0xff]
        %v1112 = vld [vmem:[#allocation10 + $0x8] sm:$0xff]
        %v1113 = vld [vmem:[#allocation10 + $0x10] sm:$0xff]
        %v1114 = vld [vmem:[#allocation10 + $0x18] sm:$0xff]
        %v1115 = vld [vmem:[#allocation10 + $0x20] sm:$0xff]
        %v1116 = vld [vmem:[#allocation10 + $0x28] sm:$0xff]
        %v1117 = vld [vmem:[#allocation10 + $0x30] sm:$0xff]
        %v1118 = vld [vmem:[#allocation10 + $0x38] sm:$0xff]
        %v1119 = vld [vmem:[#allocation10 + $0x40] sm:$0xff]
        %v1120 = vld [vmem:[#allocation10 + $0x48] sm:$0xff]
        %v1121 = vld [vmem:[#allocation10 + $0x50] sm:$0xff]
        %v1122 = vld [vmem:[#allocation10 + $0x58] sm:$0xff]
        %v1123 = vld [vmem:[#allocation10 + $0x60] sm:$0xff]
        %v1124 = vld [vmem:[#allocation10 + $0x68] sm:$0xff]
        %v1125 = vld [vmem:[#allocation10 + $0x70] sm:$0xff]
        %v1126 = vld [vmem:[#allocation10 + $0x78] sm:$0xff]
        %v1127 = vld [vmem:[#allocation10 + $0x80] sm:$0xff]
        %v1128 = vld [vmem:[#allocation10 + $0x88] sm:$0xff]
        %v1129 = vld [vmem:[#allocation10 + $0x90] sm:$0xff]
        %v1130 = vld [vmem:[#allocation10 + $0x98] sm:$0xff]
        %v1131 = vld [vmem:[#allocation10 + $0xa0] sm:$0xff]
        %v1132 = vld [vmem:[#allocation10 + $0xa8] sm:$0xff]
        %v1133 = vld [vmem:[#allocation10 + $0xb0] sm:$0xff]
        %v1134 = vld [vmem:[#allocation10 + $0xb8] sm:$0xff]
        %v1135 = vld [vmem:[#allocation10 + $0xc0] sm:$0xff]
        %v1136 = vld [vmem:[#allocation10 + $0xc8] sm:$0xff]
        %v1137 = vld [vmem:[#allocation10 + $0xd0] sm:$0xff]
        %v1138 = vld [vmem:[#allocation10 + $0xd8] sm:$0xff]
        %v1139 = vld [vmem:[#allocation10 + $0xe0] sm:$0xff]
        %v1140 = vld [vmem:[#allocation10 + $0xe8] sm:$0xff]
        %v1141 = vld [vmem:[#allocation10 + $0xf0] sm:$0xff]
        %v1142 = vld [vmem:[#allocation10 + $0xf8] sm:$0xff]
        %v1143 = vld [vmem:[#allocation10 + $0x100] sm:$0xff]
        %v1144 = vld [vmem:[#allocation10 + $0x108] sm:$0xff]
        %v1145 = vld [vmem:[#allocation10 + $0x110] sm:$0xff]
        %v1146 = vld [vmem:[#allocation10 + $0x118] sm:$0xff]
        %v1147 = vld [vmem:[#allocation10 + $0x120] sm:$0xff]
        %v1148 = vld [vmem:[#allocation10 + $0x128] sm:$0xff]
        %v1149 = vld [vmem:[#allocation10 + $0x130] sm:$0xff]
        %v1150 = vld [vmem:[#allocation10 + $0x138] sm:$0xff]
        %v1151 = vld [vmem:[#allocation10 + $0x140] sm:$0xff]
        %v1152 = vld [vmem:[#allocation10 + $0x148] sm:$0xff]
        %v1153 = vld [vmem:[#allocation10 + $0x150] sm:$0xff]
        %v1154 = vld [vmem:[#allocation10 + $0x158] sm:$0xff]
        %v1155 = vld [vmem:[#allocation10 + $0x160] sm:$0xff]
        %v1156 = vld [vmem:[#allocation10 + $0x168] sm:$0xff]
        %v1157 = vld [vmem:[#allocation10 + $0x170] sm:$0xff]
        %v1158 = vld [vmem:[#allocation10 + $0x178] sm:$0xff]
        %v1159 = vld [vmem:[#allocation11] sm:$0xff]
        %v1160 = vld [vmem:[#allocation11 + $0x8] sm:$0xff]
        %v1161 = vld [vmem:[#allocation11 + $0x10] sm:$0xff]
        %v1162 = vld [vmem:[#allocation11 + $0x18] sm:$0xff]
        %v1163 = vld [vmem:[#allocation11 + $0x20] sm:$0xff]
        %v1164 = vld [vmem:[#allocation11 + $0x28] sm:$0xff]
        %v1165 = vld [vmem:[#allocation11 + $0x30] sm:$0xff]
        %v1166 = vld [vmem:[#allocation11 + $0x38] sm:$0xff]
        %v1167 = vld [vmem:[#allocation11 + $0x40] sm:$0xff]
        %v1168 = vld [vmem:[#allocation11 + $0x48] sm:$0xff]
        %v1169 = vld [vmem:[#allocation11 + $0x50] sm:$0xff]
        %v1170 = vld [vmem:[#allocation11 + $0x58] sm:$0xff]
        %v1171 = vld [vmem:[#allocation11 + $0x60] sm:$0xff]
        %v1172 = vld [vmem:[#allocation11 + $0x68] sm:$0xff]
        %v1173 = vld [vmem:[#allocation11 + $0x70] sm:$0xff]
        %v1174 = vld [vmem:[#allocation11 + $0x78] sm:$0xff]
        %v1175 = vld [vmem:[#allocation11 + $0x80] sm:$0xff]
        %v1176 = vld [vmem:[#allocation11 + $0x88] sm:$0xff]
        %v1177 = vld [vmem:[#allocation11 + $0x90] sm:$0xff]
        %v1178 = vld [vmem:[#allocation11 + $0x98] sm:$0xff]
        %v1179 = vld [vmem:[#allocation11 + $0xa0] sm:$0xff]
        %v1180 = vld [vmem:[#allocation11 + $0xa8] sm:$0xff]
        %v1181 = vld [vmem:[#allocation11 + $0xb0] sm:$0xff]
        %v1182 = vld [vmem:[#allocation11 + $0xb8] sm:$0xff]
        %v1183 = vld [vmem:[#allocation11 + $0xc0] sm:$0xff]
        %v1184 = vld [vmem:[#allocation11 + $0xc8] sm:$0xff]
        %v1185 = vld [vmem:[#allocation11 + $0xd0] sm:$0xff]
        %v1186 = vld [vmem:[#allocation11 + $0xd8] sm:$0xff]
        %v1187 = vld [vmem:[#allocation11 + $0xe0] sm:$0xff]
        %v1188 = vld [vmem:[#allocation11 + $0xe8] sm:$0xff]
        %v1189 = vld [vmem:[#allocation11 + $0xf0] sm:$0xff]
        %v1190 = vld [vmem:[#allocation11 + $0xf8] sm:$0xff]
        %v1191 = vld [vmem:[#allocation11 + $0x100] sm:$0xff]
        %v1192 = vld [vmem:[#allocation11 + $0x108] sm:$0xff]
        %v1193 = vld [vmem:[#allocation11 + $0x110] sm:$0xff]
        %v1194 = vld [vmem:[#allocation11 + $0x118] sm:$0xff]
        %v1195 = vld [vmem:[#allocation11 + $0x120] sm:$0xff]
        %v1196 = vld [vmem:[#allocation11 + $0x128] sm:$0xff]
        %v1197 = vld [vmem:[#allocation11 + $0x130] sm:$0xff]
        %v1198 = vld [vmem:[#allocation11 + $0x138] sm:$0xff]
        %v1199 = vld [vmem:[#allocation11 + $0x140] sm:$0xff]
        %v1200 = vld [vmem:[#allocation11 + $0x148] sm:$0xff]
        %v1201 = vld [vmem:[#allocation11 + $0x150] sm:$0xff]
        %v1202 = vld [vmem:[#allocation11 + $0x158] sm:$0xff]
        %v1203 = vld [vmem:[#allocation11 + $0x160] sm:$0xff]
        %v1204 = vld [vmem:[#allocation11 + $0x168] sm:$0xff]
        %v1205 = vld [vmem:[#allocation11 + $0x170] sm:$0xff]
        %v1206 = vld [vmem:[#allocation11 + $0x178] sm:$0xff]
        %v1207 = vld [vmem:[%s12] sm:$0x7]
        %v1208 = vld [vmem:[#allocation13] sm:$0xff]
        %v1209 = vld [vmem:[#allocation13 + $0x8] sm:$0xff]
        %v1210 = vld [vmem:[#allocation13 + $0x10] sm:$0xff]
        %v1211 = vld [vmem:[#allocation13 + $0x18] sm:$0xff]
        %v1212 = vld [vmem:[#allocation13 + $0x20] sm:$0xff]
        %v1213 = vld [vmem:[#allocation13 + $0x28] sm:$0xff]
        %v1214 = vld [vmem:[#allocation13 + $0x30] sm:$0xff]
        %v1215 = vld [vmem:[#allocation13 + $0x38] sm:$0xff]
        %v1216 = vld [vmem:[#allocation13 + $0x40] sm:$0xff]
        %v1217 = vld [vmem:[#allocation13 + $0x48] sm:$0xff]
        %v1218 = vld [vmem:[#allocation13 + $0x50] sm:$0xff]
        %v1219 = vld [vmem:[#allocation13 + $0x58] sm:$0xff]
        %v1220 = vld [vmem:[#allocation13 + $0x60] sm:$0xff]
        %v1221 = vld [vmem:[#allocation13 + $0x68] sm:$0xff]
        %v1222 = vld [vmem:[#allocation13 + $0x70] sm:$0xff]
        %v1223 = vld [vmem:[#allocation13 + $0x78] sm:$0xff]
        %v1224 = vld [vmem:[#allocation13 + $0x80] sm:$0xff]
        %v1225 = vld [vmem:[#allocation13 + $0x88] sm:$0xff]
        %v1226 = vld [vmem:[#allocation13 + $0x90] sm:$0xff]
        %v1227 = vld [vmem:[#allocation13 + $0x98] sm:$0xff]
        %v1228 = vld [vmem:[#allocation13 + $0xa0] sm:$0xff]
        %v1229 = vld [vmem:[#allocation13 + $0xa8] sm:$0xff]
        %v1230 = vld [vmem:[#allocation13 + $0xb0] sm:$0xff]
        %v1231 = vld [vmem:[#allocation13 + $0xb8] sm:$0xff]
        %v1232 = vld [vmem:[#allocation13 + $0xc0] sm:$0xff]
        %v1233 = vld [vmem:[#allocation13 + $0xc8] sm:$0xff]
        %v1234 = vld [vmem:[#allocation13 + $0xd0] sm:$0xff]
        %v1235 = vld [vmem:[#allocation13 + $0xd8] sm:$0xff]
        %v1236 = vld [vmem:[#allocation13 + $0xe0] sm:$0xff]
        %v1237 = vld [vmem:[#allocation13 + $0xe8] sm:$0xff]
        %v1238 = vld [vmem:[#allocation13 + $0xf0] sm:$0xff]
        %v1239 = vld [vmem:[#allocation13 + $0xf8] sm:$0xff]
        %v1240 = vld [vmem:[#allocation13 + $0x100] sm:$0xff]
        %v1241 = vld [vmem:[#allocation13 + $0x108] sm:$0xff]
        %v1242 = vld [vmem:[#allocation13 + $0x110] sm:$0xff]
        %v1243 = vld [vmem:[#allocation13 + $0x118] sm:$0xff]
        %v1244 = vld [vmem:[#allocation13 + $0x120] sm:$0xff]
        %v1245 = vld [vmem:[#allocation13 + $0x128] sm:$0xff]
        %v1246 = vld [vmem:[#allocation13 + $0x130] sm:$0xff]
        %v1247 = vld [vmem:[#allocation13 + $0x138] sm:$0xff]
        %v1248 = vld [vmem:[#allocation13 + $0x140] sm:$0xff]
        %v1249 = vld [vmem:[#allocation13 + $0x148] sm:$0xff]
        %v1250 = vld [vmem:[#allocation13 + $0x150] sm:$0xff]
        %v1251 = vld [vmem:[#allocation13 + $0x158] sm:$0xff]
        %v1252 = vld [vmem:[#allocation13 + $0x160] sm:$0xff]
        %v1253 = vld [vmem:[#allocation13 + $0x168] sm:$0xff]
        %v1254 = vld [vmem:[#allocation13 + $0x170] sm:$0xff]
        %v1255 = vld [vmem:[#allocation13 + $0x178] sm:$0xff]
        %v1256 = vld [vmem:[%s14] sm:$0x7]
        %v1257 = vld [vmem:[#allocation14] sm:$0xff]
        %v1258 = vld [vmem:[#allocation14 + $0x8] sm:$0xff]
        %v1259 = vld [vmem:[#allocation14 + $0x10] sm:$0xff]
        %v1260 = vld [vmem:[#allocation14 + $0x18] sm:$0xff]
        %v1261 = vld [vmem:[#allocation14 + $0x20] sm:$0xff]
        %v1262 = vld [vmem:[#allocation14 + $0x28] sm:$0xff]
        %v1263 = vld [vmem:[#allocation14 + $0x30] sm:$0xff]
        %v1264 = vld [vmem:[#allocation14 + $0x38] sm:$0xff]
        %v1265 = vld [vmem:[#allocation14 + $0x40] sm:$0xff]
        %v1266 = vld [vmem:[#allocation14 + $0x48] sm:$0xff]
        %v1267 = vld [vmem:[#allocation14 + $0x50] sm:$0xff]
        %v1268 = vld [vmem:[#allocation14 + $0x58] sm:$0xff]
        %v1269 = vld [vmem:[#allocation14 + $0x60] sm:$0xff]
        %v1270 = vld [vmem:[#allocation14 + $0x68] sm:$0xff]
        %v1271 = vld [vmem:[#allocation14 + $0x70] sm:$0xff]
        %v1272 = vld [vmem:[#allocation14 + $0x78] sm:$0xff]
        %v1273 = vld [vmem:[%s16] sm:$0x1]
        %v1274 = vld [vmem:[#allocation16] sm:$0xff]
        %v1275 = vld [vmem:[#allocation16 + $0x8] sm:$0xff]
        %v1276 = vld [vmem:[#allocation16 + $0x10] sm:$0xff]
        %v1277 = vld [vmem:[#allocation16 + $0x18] sm:$0xff]
        %v1278 = vld [vmem:[#allocation16 + $0x20] sm:$0xff]
        %v1279 = vld [vmem:[#allocation16 + $0x28] sm:$0xff]
        %v1280 = vld [vmem:[#allocation16 + $0x30] sm:$0xff]
        %v1281 = vld [vmem:[#allocation16 + $0x38] sm:$0xff]
        %v1282 = vld [vmem:[#allocation16 + $0x40] sm:$0xff]
        %v1283 = vld [vmem:[#allocation16 + $0x48] sm:$0xff]
        %v1284 = vld [vmem:[#allocation16 + $0x50] sm:$0xff]
        %v1285 = vld [vmem:[#allocation16 + $0x58] sm:$0xff]
        %v1286 = vld [vmem:[#allocation16 + $0x60] sm:$0xff]
        %v1287 = vld [vmem:[#allocation16 + $0x68] sm:$0xff]
        %v1288 = vld [vmem:[#allocation16 + $0x70] sm:$0xff]
        %v1289 = vld [vmem:[#allocation16 + $0x78] sm:$0xff]
        %v1290 = vld [vmem:[%s18] sm:$0x1]
        %v1291 = vld [vmem:[#allocation17] sm:$0xff]
        %v1292 = vld [vmem:[#allocation17 + $0x8] sm:$0xff]
        %v1293 = vld [vmem:[#allocation17 + $0x10] sm:$0xff]
        %v1294 = vld [vmem:[#allocation17 + $0x18] sm:$0xff]
        %v1295 = vld [vmem:[#allocation17 + $0x20] sm:$0xff]
        %v1296 = vld [vmem:[#allocation17 + $0x28] sm:$0xff]
        %v1297 = vld [vmem:[#allocation17 + $0x30] sm:$0xff]
        %v1298 = vld [vmem:[#allocation17 + $0x38] sm:$0xff]
        %v1299 = vld [vmem:[#allocation17 + $0x40] sm:$0xff]
        %v1300 = vld [vmem:[#allocation17 + $0x48] sm:$0xff]
        %v1301 = vld [vmem:[#allocation17 + $0x50] sm:$0xff]
        %v1302 = vld [vmem:[#allocation17 + $0x58] sm:$0xff]
        %v1303 = vld [vmem:[#allocation17 + $0x60] sm:$0xff]
        %v1304 = vld [vmem:[#allocation17 + $0x68] sm:$0xff]
        %v1305 = vld [vmem:[#allocation17 + $0x70] sm:$0xff]
        %v1306 = vld [vmem:[#allocation17 + $0x78] sm:$0xff]
        %v1307 = vld [vmem:[%s20] sm:$0x1]
        %v1308 = vld [vmem:[#allocation19] sm:$0xff]
        %v1309 = vld [vmem:[#allocation19 + $0x8] sm:$0xff]
        %v1310 = vld [vmem:[#allocation19 + $0x10] sm:$0xff]
        %v1311 = vld [vmem:[#allocation19 + $0x18] sm:$0xff]
        %v1312 = vld [vmem:[#allocation19 + $0x20] sm:$0xff]
        %v1313 = vld [vmem:[#allocation19 + $0x28] sm:$0xff]
        %v1314 = vld [vmem:[#allocation19 + $0x30] sm:$0xff]
        %v1315 = vld [vmem:[#allocation19 + $0x38] sm:$0xff]
        %v1316 = vld [vmem:[#allocation19 + $0x40] sm:$0xff]
        %v1317 = vld [vmem:[#allocation19 + $0x48] sm:$0xff]
        %v1318 = vld [vmem:[#allocation19 + $0x50] sm:$0xff]
        %v1319 = vld [vmem:[#allocation19 + $0x58] sm:$0xff]
        %v1320 = vld [vmem:[#allocation19 + $0x60] sm:$0xff]
        %v1321 = vld [vmem:[#allocation19 + $0x68] sm:$0xff]
        %v1322 = vld [vmem:[#allocation19 + $0x70] sm:$0xff]
        %v1323 = vld [vmem:[#allocation19 + $0x78] sm:$0xff]
        %v1324 = vld [vmem:[#allocation20] sm:$0xff]
        %v1325 = vld [vmem:[#allocation20 + $0x8] sm:$0xff]
        %v1326 = vld [vmem:[#allocation20 + $0x10] sm:$0xff]
        %v1327 = vld [vmem:[#allocation20 + $0x18] sm:$0xff]
        %v1328 = vld [vmem:[#allocation20 + $0x20] sm:$0xff]
        %v1329 = vld [vmem:[#allocation20 + $0x28] sm:$0xff]
        %v1330 = vld [vmem:[#allocation20 + $0x30] sm:$0xff]
        %v1331 = vld [vmem:[#allocation20 + $0x38] sm:$0xff]
        %v1332 = vld [vmem:[#allocation20 + $0x40] sm:$0xff]
        %v1333 = vld [vmem:[#allocation20 + $0x48] sm:$0xff]
        %v1334 = vld [vmem:[#allocation20 + $0x50] sm:$0xff]
        %v1335 = vld [vmem:[#allocation20 + $0x58] sm:$0xff]
        %v1336 = vld [vmem:[#allocation20 + $0x60] sm:$0xff]
        %v1337 = vld [vmem:[#allocation20 + $0x68] sm:$0xff]
        %v1338 = vld [vmem:[#allocation20 + $0x70] sm:$0xff]
        %v1339 = vld [vmem:[#allocation20 + $0x78] sm:$0xff]
        %v1340 = vld [vmem:[%s23] sm:$0x1]
        %v1342 = vlaneseq
        %v1343 = vshrl.u32 %v1342, 7
        %v1344 = vsub.s32 0, %v1343
        %v1345 = vrot.slane %v1108, %v1344
        %v1346 = vlaneseq
        %v1347 = vshrl.u32 %v1346, 7
        %v1348 = vsub.s32 1, %v1347
        %v1349 = vrot.slane %v1108, %v1348
        %1352 = vmatprep.subr.mxu0 0.0
        %1353 = vmatpush1.xpose.msra.mxu0 %v1076
        %1354 = vmatprep.subr.mxu0 0.0
        %1355 = vmatpush1.xpose.msra.mxu0 %v1077
        %1356 = vmatprep.subr.mxu0 0.0
        %1357 = vmatpush1.xpose.msra.mxu0 %v1078
        %1358 = vmatprep.subr.mxu0 0.0
        %1359 = vmatpush1.xpose.msra.mxu0 %v1079
        %1360 = vmatprep.subr.mxu0 0.0
        %1361 = vmatpush1.xpose.msra.mxu0 %v1080
        %1362 = vmatprep.subr.mxu0 0.0
        %1363 = vmatpush1.xpose.msra.mxu0 %v1081
        %1364 = vmatprep.subr.mxu0 0.0
        %1365 = vmatpush1.xpose.msra.mxu0 %v1082
        %1366 = vmatprep.subr.mxu0 0.0
        %1367 = vmatpush1.xpose.msra.mxu0 %v1083
        %1368 = vmatprep.subr.mxu0 0.0
        %1369 = vmatpush1.xpose.msra.mxu0 %v1084
        %1370 = vmatprep.subr.mxu0 0.0
        %1371 = vmatpush1.xpose.msra.mxu0 %v1085
        %1372 = vmatprep.subr.mxu0 0.0
        %1373 = vmatpush1.xpose.msra.mxu0 %v1086
        %1374 = vmatprep.subr.mxu0 0.0
        %1375 = vmatpush1.xpose.msra.mxu0 %v1087
        %1376 = vmatprep.subr.mxu0 0.0
        %1377 = vmatpush1.xpose.msra.mxu0 %v1088
        %1378 = vmatprep.subr.mxu0 0.0
        %1379 = vmatpush1.xpose.msra.mxu0 %v1089
        %1380 = vmatprep.subr.mxu0 0.0
        %1381 = vmatpush1.xpose.msra.mxu0 %v1090
        %1382 = vmatprep.subr.mxu0 0.0
        %1383 = vmatpush1.xpose.msra.mxu0 %v1091
        %1384 = vmatprep.subr.mxu0 0.0
        %1385 = vmatpush1.xpose.msra.mxu0 %v1092
        %1386 = vmatprep.subr.mxu0 0.0
        %1387 = vmatpush1.xpose.msra.mxu0 %v1093
        %1388 = vmatprep.subr.mxu0 0.0
        %1389 = vmatpush1.xpose.msra.mxu0 %v1094
        %1390 = vmatprep.subr.mxu0 0.0
        %1391 = vmatpush1.xpose.msra.mxu0 %v1095
        %1392 = vmatprep.subr.mxu0 0.0
        %1393 = vmatpush1.xpose.msra.mxu0 %v1096
        %1394 = vmatprep.subr.mxu0 0.0
        %1395 = vmatpush1.xpose.msra.mxu0 %v1097
        %1396 = vmatprep.subr.mxu0 0.0
        %1397 = vmatpush1.xpose.msra.mxu0 %v1098
        %1398 = vmatprep.subr.mxu0 0.0
        %1399 = vmatpush1.xpose.msra.mxu0 %v1099
        %1400 = vmatprep.subr.mxu0 0.0
        %1401 = vmatpush1.xpose.msra.mxu0 %v1100
        %1402 = vmatprep.subr.mxu0 0.0
        %1403 = vmatpush1.xpose.msra.mxu0 %v1101
        %1404 = vmatprep.subr.mxu0 0.0
        %1405 = vmatpush1.xpose.msra.mxu0 %v1102
        %1406 = vmatprep.subr.mxu0 0.0
        %1407 = vmatpush1.xpose.msra.mxu0 %v1103
        %1408 = vmatprep.subr.mxu0 0.0
        %1409 = vmatpush1.xpose.msra.mxu0 %v1104
        %1410 = vmatprep.subr.mxu0 0.0
        %1411 = vmatpush1.xpose.msra.mxu0 %v1105
        %1412 = vmatprep.subr.mxu0 0.0
        %1413 = vmatpush1.xpose.msra.mxu0 %v1106
        %1414 = vmatprep.subr.mxu0 0.0
        %1415 = vmatpush1.xpose.msra.mxu0 %v1107
        %1416 = vmatprep.mubr.f32.mxu0 0.0
        %1417 = vmatmul.mubr.f32.gmra.mrb[0].mxu0 %v1074
        %v1418 = vpop.f32.mrb[0].mxu0
        %v1419 = vadd.f32 %v1345, %v1418
        %v1420 = vpop.f32.mrb[0].mxu0
        %v1421 = vadd.f32 %v1349, %v1420
        %1422 = vmatprep.mubr.f32.mxu0 0.0
        %1423 = vmatmul.mubr.f32.gmra.mrb[0].mxu0 %v1075
        %v1424 = vpop.f32.mrb[0].mxu0
        %v1425 = vadd.f32 %v1345, %v1424
        %v1426 = vpop.f32.mrb[0].mxu0
        %v1427 = vadd.f32 %v1349, %v1426
        %1428 = vdwg.mxu0
        %v1430 = vlaneseq
        %v1431 = vshrl.u32 %v1430, 7
        %v1432 = vsub.s32 0, %v1431
        %v1433 = vrot.slane %v1109, %v1432
        %vm1435 = vcmask 64512
        %v1437 = vsel %vm1435, %v1070, 0
        %1439 = vmatprep.subr.mxu0 0.0
        %1440 = vmatpush1.msra.mxu0 %v1419
        %1441 = vmatprep.subr.mxu0 0.0
        %1442 = vmatpush1.msra.mxu0 0.0
        %1443 = vmatprep.subr.mxu0 0.0
        %1444 = vmatpush1.msra.mxu0 0.0
        %1445 = vmatprep.subr.mxu0 0.0
        %1446 = vmatpush1.msra.mxu0 0.0
        %1447 = vmatprep.subr.mxu0 0.0
        %1448 = vmatpush1.msra.mxu0 0.0
        %1449 = vmatprep.subr.mxu0 0.0
        %1450 = vmatpush1.msra.mxu0 0.0
        %1451 = vmatprep.subr.mxu0 0.0
        %1452 = vmatpush1.msra.mxu0 0.0
        %1453 = vmatprep.subr.mxu0 0.0
        %1454 = vmatpush1.msra.mxu0 0.0
        %1455 = vmatprep.subr.mxu0 0.0
        %1456 = vmatpush1.msra.mxu0 0.0
        %1457 = vmatprep.subr.mxu0 0.0
        %1458 = vmatpush1.msra.mxu0 0.0
        %1459 = vmatprep.subr.mxu0 0.0
        %1460 = vmatpush1.msra.mxu0 0.0
        %1461 = vmatprep.subr.mxu0 0.0
        %1462 = vmatpush1.msra.mxu0 0.0
        %1463 = vmatprep.subr.mxu0 0.0
        %1464 = vmatpush1.msra.mxu0 0.0
        %1465 = vmatprep.subr.mxu0 0.0
        %1466 = vmatpush1.msra.mxu0 0.0
        %1467 = vmatprep.subr.mxu0 0.0
        %1468 = vmatpush1.msra.mxu0 0.0
        %1469 = vmatprep.subr.mxu0 0.0
        %1470 = vmatpush1.msra.mxu0 0.0
        %1471 = vmatprep.subr.mxu0 0.0
        %1472 = vmatpush1.msra.mxu0 0.0
        %1473 = vmatprep.subr.mxu0 0.0
        %1474 = vmatpush1.msra.mxu0 0.0
        %1475 = vmatprep.subr.mxu0 0.0
        %1476 = vmatpush1.msra.mxu0 0.0
        %1477 = vmatprep.subr.mxu0 0.0
        %1478 = vmatpush1.msra.mxu0 0.0
        %1479 = vmatprep.subr.mxu0 0.0
        %1480 = vmatpush1.msra.mxu0 0.0
        %1481 = vmatprep.subr.mxu0 0.0
        %1482 = vmatpush1.msra.mxu0 0.0
        %1483 = vmatprep.subr.mxu0 0.0
        %1484 = vmatpush1.msra.mxu0 0.0
        %1485 = vmatprep.subr.mxu0 0.0
        %1486 = vmatpush1.msra.mxu0 0.0
        %1487 = vmatprep.subr.mxu0 0.0
        %1488 = vmatpush1.msra.mxu0 0.0
        %1489 = vmatprep.subr.mxu0 0.0
        %1490 = vmatpush1.msra.mxu0 0.0
        %1491 = vmatprep.subr.mxu0 0.0
        %1492 = vmatpush1.msra.mxu0 0.0
        %1493 = vmatprep.subr.mxu0 0.0
        %1494 = vmatpush1.msra.mxu0 0.0
        %1495 = vmatprep.subr.mxu0 0.0
        %1496 = vmatpush1.msra.mxu0 0.0
        %1497 = vmatprep.subr.mxu0 0.0
        %1498 = vmatpush1.msra.mxu0 0.0
        %1499 = vmatprep.subr.mxu0 0.0
        %1500 = vmatpush1.msra.mxu0 0.0
        %1501 = vmatprep.subr.mxu0 0.0
        %1502 = vmatpush1.msra.mxu0 0.0
        %1503 = vmatprep.mubr.f32.mxu0 0.0
        %1504 = vmatmul.mubr.f32.gmra.mrb[0].mxu0 %v1437
        %v1505 = vpop.f32.mrb[0].mxu0
        %v1506 = vadd.f32 %v1433, %v1505
        %v1507 = vpop.f32.mrb[0].mxu0
        %1508 = vdwg.mxu0
        %v1510 = vsel %vm1435, %v1071, 0
        %1512 = vmatprep.subr.mxu0 0.0
        %1513 = vmatpush1.msra.mxu0 %v1425
        %1514 = vmatprep.subr.mxu0 0.0
        %1515 = vmatpush1.msra.mxu0 0.0
        %1516 = vmatprep.subr.mxu0 0.0
        %1517 = vmatpush1.msra.mxu0 0.0
        %1518 = vmatprep.subr.mxu0 0.0
        %1519 = vmatpush1.msra.mxu0 0.0
        %1520 = vmatprep.subr.mxu0 0.0
        %1521 = vmatpush1.msra.mxu0 0.0
        %1522 = vmatprep.subr.mxu0 0.0
        %1523 = vmatpush1.msra.mxu0 0.0
        %1524 = vmatprep.subr.mxu0 0.0
        %1525 = vmatpush1.msra.mxu0 0.0
        %1526 = vmatprep.subr.mxu0 0.0
        %1527 = vmatpush1.msra.mxu0 0.0
        %1528 = vmatprep.subr.mxu0 0.0
        %1529 = vmatpush1.msra.mxu0 0.0
        %1530 = vmatprep.subr.mxu0 0.0
        %1531 = vmatpush1.msra.mxu0 0.0
        %1532 = vmatprep.subr.mxu0 0.0
        %1533 = vmatpush1.msra.mxu0 0.0
        %1534 = vmatprep.subr.mxu0 0.0
        %1535 = vmatpush1.msra.mxu0 0.0
        %1536 = vmatprep.subr.mxu0 0.0
        %1537 = vmatpush1.msra.mxu0 0.0
        %1538 = vmatprep.subr.mxu0 0.0
        %1539 = vmatpush1.msra.mxu0 0.0
        %1540 = vmatprep.subr.mxu0 0.0
        %1541 = vmatpush1.msra.mxu0 0.0
        %1542 = vmatprep.subr.mxu0 0.0
        %1543 = vmatpush1.msra.mxu0 0.0
        %1544 = vmatprep.subr.mxu0 0.0
        %1545 = vmatpush1.msra.mxu0 0.0
        %1546 = vmatprep.subr.mxu0 0.0
        %1547 = vmatpush1.msra.mxu0 0.0
        %1548 = vmatprep.subr.mxu0 0.0
        %1549 = vmatpush1.msra.mxu0 0.0
        %1550 = vmatprep.subr.mxu0 0.0
        %1551 = vmatpush1.msra.mxu0 0.0
        %1552 = vmatprep.subr.mxu0 0.0
        %1553 = vmatpush1.msra.mxu0 0.0
        %1554 = vmatprep.subr.mxu0 0.0
        %1555 = vmatpush1.msra.mxu0 0.0
        %1556 = vmatprep.subr.mxu0 0.0
        %1557 = vmatpush1.msra.mxu0 0.0
        %1558 = vmatprep.subr.mxu0 0.0
        %1559 = vmatpush1.msra.mxu0 0.0
        %1560 = vmatprep.subr.mxu0 0.0
        %1561 = vmatpush1.msra.mxu0 0.0
        %1562 = vmatprep.subr.mxu0 0.0
        %1563 = vmatpush1.msra.mxu0 0.0
        %1564 = vmatprep.subr.mxu0 0.0
        %1565 = vmatpush1.msra.mxu0 0.0
        %1566 = vmatprep.subr.mxu0 0.0
        %1567 = vmatpush1.msra.mxu0 0.0
        %1568 = vmatprep.subr.mxu0 0.0
        %1569 = vmatpush1.msra.mxu0 0.0
        %1570 = vmatprep.subr.mxu0 0.0
        %1571 = vmatpush1.msra.mxu0 0.0
        %1572 = vmatprep.subr.mxu0 0.0
        %1573 = vmatpush1.msra.mxu0 0.0
        %1574 = vmatprep.subr.mxu0 0.0
        %1575 = vmatpush1.msra.mxu0 0.0
        %1576 = vmatprep.mubr.f32.mxu0 0.0
        %1577 = vmatmul.mubr.f32.gmra.mrb[0].mxu0 %v1510
        %v1578 = vpop.f32.mrb[0].mxu0
        %v1579 = vadd.f32 %v1433, %v1578
        %v1580 = vpop.f32.mrb[0].mxu0
        %1581 = vdwg.mxu0
        %v1583 = vlaneseq
        %v1584 = vshrl.u32 %v1583, 7
        %v1585 = vsub.s32 0, %v1584
        %v1586 = vrot.slane %v1110, %v1585
        %v1589 = vsel %vm1435, %v1072, 0
        %1591 = vmatprep.subr.mxu0 0.0
        %1592 = vmatpush1.msra.mxu0 %v1421
        %1593 = vmatprep.subr.mxu0 0.0
        %1594 = vmatpush1.msra.mxu0 0.0
        %1595 = vmatprep.subr.mxu0 0.0
        %1596 = vmatpush1.msra.mxu0 0.0
        %1597 = vmatprep.subr.mxu0 0.0
        %1598 = vmatpush1.msra.mxu0 0.0
        %1599 = vmatprep.subr.mxu0 0.0
        %1600 = vmatpush1.msra.mxu0 0.0
        %1601 = vmatprep.subr.mxu0 0.0
        %1602 = vmatpush1.msra.mxu0 0.0
        %1603 = vmatprep.subr.mxu0 0.0
        %1604 = vmatpush1.msra.mxu0 0.0
        %1605 = vmatprep.subr.mxu0 0.0
        %1606 = vmatpush1.msra.mxu0 0.0
        %1607 = vmatprep.subr.mxu0 0.0
        %1608 = vmatpush1.msra.mxu0 0.0
        %1609 = vmatprep.subr.mxu0 0.0
        %1610 = vmatpush1.msra.mxu0 0.0
        %1611 = vmatprep.subr.mxu0 0.0
        %1612 = vmatpush1.msra.mxu0 0.0
        %1613 = vmatprep.subr.mxu0 0.0
        %1614 = vmatpush1.msra.mxu0 0.0
        %1615 = vmatprep.subr.mxu0 0.0
        %1616 = vmatpush1.msra.mxu0 0.0
        %1617 = vmatprep.subr.mxu0 0.0
        %1618 = vmatpush1.msra.mxu0 0.0
        %1619 = vmatprep.subr.mxu0 0.0
        %1620 = vmatpush1.msra.mxu0 0.0
        %1621 = vmatprep.subr.mxu0 0.0
        %1622 = vmatpush1.msra.mxu0 0.0
        %1623 = vmatprep.subr.mxu0 0.0
        %1624 = vmatpush1.msra.mxu0 0.0
        %1625 = vmatprep.subr.mxu0 0.0
        %1626 = vmatpush1.msra.mxu0 0.0
        %1627 = vmatprep.subr.mxu0 0.0
        %1628 = vmatpush1.msra.mxu0 0.0
        %1629 = vmatprep.subr.mxu0 0.0
        %1630 = vmatpush1.msra.mxu0 0.0
        %1631 = vmatprep.subr.mxu0 0.0
        %1632 = vmatpush1.msra.mxu0 0.0
        %1633 = vmatprep.subr.mxu0 0.0
        %1634 = vmatpush1.msra.mxu0 0.0
        %1635 = vmatprep.subr.mxu0 0.0
        %1636 = vmatpush1.msra.mxu0 0.0
        %1637 = vmatprep.subr.mxu0 0.0
        %1638 = vmatpush1.msra.mxu0 0.0
        %1639 = vmatprep.subr.mxu0 0.0
        %1640 = vmatpush1.msra.mxu0 0.0
        %1641 = vmatprep.subr.mxu0 0.0
        %1642 = vmatpush1.msra.mxu0 0.0
        %1643 = vmatprep.subr.mxu0 0.0
        %1644 = vmatpush1.msra.mxu0 0.0
        %1645 = vmatprep.subr.mxu0 0.0
        %1646 = vmatpush1.msra.mxu0 0.0
        %1647 = vmatprep.subr.mxu0 0.0
        %1648 = vmatpush1.msra.mxu0 0.0
        %1649 = vmatprep.subr.mxu0 0.0
        %1650 = vmatpush1.msra.mxu0 0.0
        %1651 = vmatprep.subr.mxu0 0.0
        %1652 = vmatpush1.msra.mxu0 0.0
        %1653 = vmatprep.subr.mxu0 0.0
        %1654 = vmatpush1.msra.mxu0 0.0
        %1655 = vmatprep.mubr.f32.mxu0 0.0
        %1656 = vmatmul.mubr.f32.gmra.mrb[0].mxu0 %v1589
        %v1657 = vpop.f32.mrb[0].mxu0
        %v1658 = vadd.f32 %v1586, %v1657
        %v1659 = vpop.f32.mrb[0].mxu0
        %1660 = vdwg.mxu0
        %v1662 = vsel %vm1435, %v1073, 0
        %1664 = vmatprep.subr.mxu0 0.0
        %1665 = vmatpush1.msra.mxu0 %v1427
        %1666 = vmatprep.subr.mxu0 0.0
        %1667 = vmatpush1.msra.mxu0 0.0
        %1668 = vmatprep.subr.mxu0 0.0
        %1669 = vmatpush1.msra.mxu0 0.0
        %1670 = vmatprep.subr.mxu0 0.0
        %1671 = vmatpush1.msra.mxu0 0.0
        %1672 = vmatprep.subr.mxu0 0.0
        %1673 = vmatpush1.msra.mxu0 0.0
        %1674 = vmatprep.subr.mxu0 0.0
        %1675 = vmatpush1.msra.mxu0 0.0
        %1676 = vmatprep.subr.mxu0 0.0
        %1677 = vmatpush1.msra.mxu0 0.0
        %1678 = vmatprep.subr.mxu0 0.0
        %1679 = vmatpush1.msra.mxu0 0.0
        %1680 = vmatprep.subr.mxu0 0.0
        %1681 = vmatpush1.msra.mxu0 0.0
        %1682 = vmatprep.subr.mxu0 0.0
        %1683 = vmatpush1.msra.mxu0 0.0
        %1684 = vmatprep.subr.mxu0 0.0
        %1685 = vmatpush1.msra.mxu0 0.0
        %1686 = vmatprep.subr.mxu0 0.0
        %1687 = vmatpush1.msra.mxu0 0.0
        %1688 = vmatprep.subr.mxu0 0.0
        %1689 = vmatpush1.msra.mxu0 0.0
        %1690 = vmatprep.subr.mxu0 0.0
        %1691 = vmatpush1.msra.mxu0 0.0
        %1692 = vmatprep.subr.mxu0 0.0
        %1693 = vmatpush1.msra.mxu0 0.0
        %1694 = vmatprep.subr.mxu0 0.0
        %1695 = vmatpush1.msra.mxu0 0.0
        %1696 = vmatprep.subr.mxu0 0.0
        %1697 = vmatpush1.msra.mxu0 0.0
        %1698 = vmatprep.subr.mxu0 0.0
        %1699 = vmatpush1.msra.mxu0 0.0
        %1700 = vmatprep.subr.mxu0 0.0
        %1701 = vmatpush1.msra.mxu0 0.0
        %1702 = vmatprep.subr.mxu0 0.0
        %1703 = vmatpush1.msra.mxu0 0.0
        %1704 = vmatprep.subr.mxu0 0.0
        %1705 = vmatpush1.msra.mxu0 0.0
        %1706 = vmatprep.subr.mxu0 0.0
        %1707 = vmatpush1.msra.mxu0 0.0
        %1708 = vmatprep.subr.mxu0 0.0
        %1709 = vmatpush1.msra.mxu0 0.0
        %1710 = vmatprep.subr.mxu0 0.0
        %1711 = vmatpush1.msra.mxu0 0.0
        %1712 = vmatprep.subr.mxu0 0.0
        %1713 = vmatpush1.msra.mxu0 0.0
        %1714 = vmatprep.subr.mxu0 0.0
        %1715 = vmatpush1.msra.mxu0 0.0
        %1716 = vmatprep.subr.mxu0 0.0
        %1717 = vmatpush1.msra.mxu0 0.0
        %1718 = vmatprep.subr.mxu0 0.0
        %1719 = vmatpush1.msra.mxu0 0.0
        %1720 = vmatprep.subr.mxu0 0.0
        %1721 = vmatpush1.msra.mxu0 0.0
        %1722 = vmatprep.subr.mxu0 0.0
        %1723 = vmatpush1.msra.mxu0 0.0
        %1724 = vmatprep.subr.mxu0 0.0
        %1725 = vmatpush1.msra.mxu0 0.0
        %1726 = vmatprep.subr.mxu0 0.0
        %1727 = vmatpush1.msra.mxu0 0.0
        %1728 = vmatprep.mubr.f32.mxu0 0.0
        %1729 = vmatmul.mubr.f32.gmra.mrb[0].mxu0 %v1662
        %v1730 = vpop.f32.mrb[0].mxu0
        %v1731 = vadd.f32 %v1586, %v1730
        %v1732 = vpop.f32.mrb[0].mxu0
        %1733 = vdwg.mxu0
        %1734 = vmatprep.subr.mxu0 0.0
        %1735 = vmatpush1.xpose.msra.mxu0 %v1159
        %1736 = vmatprep.subr.mxu0 0.0
        %1737 = vmatpush1.xpose.msra.mxu0 %v1160
        %1738 = vmatprep.subr.mxu0 0.0
        %1739 = vmatpush1.xpose.msra.mxu0 %v1161
        %1740 = vmatprep.subr.mxu0 0.0
        %1741 = vmatpush1.xpose.msra.mxu0 %v1162
        %1742 = vmatprep.subr.mxu0 0.0
        %1743 = vmatpush1.xpose.msra.mxu0 %v1163
        %1744 = vmatprep.subr.mxu0 0.0
        %1745 = vmatpush1.xpose.msra.mxu0 %v1164
        %1746 = vmatprep.subr.mxu0 0.0
        %1747 = vmatpush1.xpose.msra.mxu0 %v1165
        %1748 = vmatprep.subr.mxu0 0.0
        %1749 = vmatpush1.xpose.msra.mxu0 %v1166
        %1750 = vmatprep.subr.mxu0 0.0
        %1751 = vmatpush1.xpose.msra.mxu0 %v1167
        %1752 = vmatprep.subr.mxu0 0.0
        %1753 = vmatpush1.xpose.msra.mxu0 %v1168
        %1754 = vmatprep.subr.mxu0 0.0
        %1755 = vmatpush1.xpose.msra.mxu0 %v1169
        %1756 = vmatprep.subr.mxu0 0.0
        %1757 = vmatpush1.xpose.msra.mxu0 %v1170
        %1758 = vmatprep.subr.mxu0 0.0
        %1759 = vmatpush1.xpose.msra.mxu0 %v1171
        %1760 = vmatprep.subr.mxu0 0.0
        %1761 = vmatpush1.xpose.msra.mxu0 %v1172
        %1762 = vmatprep.subr.mxu0 0.0
        %1763 = vmatpush1.xpose.msra.mxu0 %v1173
        %1764 = vmatprep.subr.mxu0 0.0
        %1765 = vmatpush1.xpose.msra.mxu0 %v1174
        %1766 = vmatprep.subr.mxu0 0.0
        %1767 = vmatpush1.xpose.msra.mxu0 %v1175
        %1768 = vmatprep.subr.mxu0 0.0
        %1769 = vmatpush1.xpose.msra.mxu0 %v1176
        %1770 = vmatprep.subr.mxu0 0.0
        %1771 = vmatpush1.xpose.msra.mxu0 %v1177
        %1772 = vmatprep.subr.mxu0 0.0
        %1773 = vmatpush1.xpose.msra.mxu0 %v1178
        %1774 = vmatprep.subr.mxu0 0.0
        %1775 = vmatpush1.xpose.msra.mxu0 %v1179
        %1776 = vmatprep.subr.mxu0 0.0
        %1777 = vmatpush1.xpose.msra.mxu0 %v1180
        %1778 = vmatprep.subr.mxu0 0.0
        %1779 = vmatpush1.xpose.msra.mxu0 %v1181
        %1780 = vmatprep.subr.mxu0 0.0
        %1781 = vmatpush1.xpose.msra.mxu0 %v1182
        %1782 = vmatprep.subr.mxu0 0.0
        %1783 = vmatpush1.xpose.msra.mxu0 %v1183
        %1784 = vmatprep.subr.mxu0 0.0
        %1785 = vmatpush1.xpose.msra.mxu0 %v1184
        %1786 = vmatprep.subr.mxu0 0.0
        %1787 = vmatpush1.xpose.msra.mxu0 %v1185
        %1788 = vmatprep.subr.mxu0 0.0
        %1789 = vmatpush1.xpose.msra.mxu0 %v1186
        %1790 = vmatprep.subr.mxu0 0.0
        %1791 = vmatpush1.xpose.msra.mxu0 %v1187
        %1792 = vmatprep.subr.mxu0 0.0
        %1793 = vmatpush1.xpose.msra.mxu0 %v1188
        %1794 = vmatprep.subr.mxu0 0.0
        %1795 = vmatpush1.xpose.msra.mxu0 %v1189
        %1796 = vmatprep.subr.mxu0 0.0
        %1797 = vmatpush1.xpose.msra.mxu0 %v1190
        %1798 = vmatprep.mubr.f32.mxu0 0.0
        %1799 = vmatmul.mubr.f32.gmra.mrb[0].mxu0 %v1658
        %v1800 = vpop.f32.mrb[0].mxu0
        %v1801 = vadd.f32 0.0, %v1800
        %v1802 = vpop.f32.mrb[0].mxu0
        %v1803 = vadd.f32 0.0, %v1802
        %1804 = vmatprep.mubr.f32.mxu0 0.0
        %1805 = vmatmul.mubr.f32.gmra.mrb[0].mxu0 %v1731
        %v1806 = vpop.f32.mrb[0].mxu0
        %v1807 = vadd.f32 0.0, %v1806
        %v1808 = vpop.f32.mrb[0].mxu0
        %v1809 = vadd.f32 0.0, %v1808
        %1810 = vdwg.mxu0
        %1811 = vmatprep.subr.mxu0 0.0
        %1812 = vmatpush1.xpose.msra.mxu0 %v1191
        %1813 = vmatprep.subr.mxu0 0.0
        %1814 = vmatpush1.xpose.msra.mxu0 %v1192
        %1815 = vmatprep.subr.mxu0 0.0
        %1816 = vmatpush1.xpose.msra.mxu0 %v1193
        %1817 = vmatprep.subr.mxu0 0.0
        %1818 = vmatpush1.xpose.msra.mxu0 %v1194
        %1819 = vmatprep.subr.mxu0 0.0
        %1820 = vmatpush1.xpose.msra.mxu0 %v1195
        %1821 = vmatprep.subr.mxu0 0.0
        %1822 = vmatpush1.xpose.msra.mxu0 %v1196
        %1823 = vmatprep.subr.mxu0 0.0
        %1824 = vmatpush1.xpose.msra.mxu0 %v1197
        %1825 = vmatprep.subr.mxu0 0.0
        %1826 = vmatpush1.xpose.msra.mxu0 %v1198
        %1827 = vmatprep.subr.mxu0 0.0
        %1828 = vmatpush1.xpose.msra.mxu0 %v1199
        %1829 = vmatprep.subr.mxu0 0.0
        %1830 = vmatpush1.xpose.msra.mxu0 %v1200
        %1831 = vmatprep.subr.mxu0 0.0
        %1832 = vmatpush1.xpose.msra.mxu0 %v1201
        %1833 = vmatprep.subr.mxu0 0.0
        %1834 = vmatpush1.xpose.msra.mxu0 %v1202
        %1835 = vmatprep.subr.mxu0 0.0
        %1836 = vmatpush1.xpose.msra.mxu0 %v1203
        %1837 = vmatprep.subr.mxu0 0.0
        %1838 = vmatpush1.xpose.msra.mxu0 %v1204
        %1839 = vmatprep.subr.mxu0 0.0
        %1840 = vmatpush1.xpose.msra.mxu0 %v1205
        %1841 = vmatprep.subr.mxu0 0.0
        %1842 = vmatpush1.xpose.msra.mxu0 %v1206
        %1843 = vmatprep.subr.mxu0 0.0
        %1844 = vmatpush1.xpose.msra.mxu0 0.0
        %1845 = vmatprep.subr.mxu0 0.0
        %1846 = vmatpush1.xpose.msra.mxu0 0.0
        %1847 = vmatprep.subr.mxu0 0.0
        %1848 = vmatpush1.xpose.msra.mxu0 0.0
        %1849 = vmatprep.subr.mxu0 0.0
        %1850 = vmatpush1.xpose.msra.mxu0 0.0
        %1851 = vmatprep.subr.mxu0 0.0
        %1852 = vmatpush1.xpose.msra.mxu0 0.0
        %1853 = vmatprep.subr.mxu0 0.0
        %1854 = vmatpush1.xpose.msra.mxu0 0.0
        %1855 = vmatprep.subr.mxu0 0.0
        %1856 = vmatpush1.xpose.msra.mxu0 0.0
        %1857 = vmatprep.subr.mxu0 0.0
        %1858 = vmatpush1.xpose.msra.mxu0 0.0
        %1859 = vmatprep.subr.mxu0 0.0
        %1860 = vmatpush1.xpose.msra.mxu0 0.0
        %1861 = vmatprep.subr.mxu0 0.0
        %1862 = vmatpush1.xpose.msra.mxu0 0.0
        %1863 = vmatprep.subr.mxu0 0.0
        %1864 = vmatpush1.xpose.msra.mxu0 0.0
        %1865 = vmatprep.subr.mxu0 0.0
        %1866 = vmatpush1.xpose.msra.mxu0 0.0
        %1867 = vmatprep.subr.mxu0 0.0
        %1868 = vmatpush1.xpose.msra.mxu0 0.0
        %1869 = vmatprep.subr.mxu0 0.0
        %1870 = vmatpush1.xpose.msra.mxu0 0.0
        %1871 = vmatprep.subr.mxu0 0.0
        %1872 = vmatpush1.xpose.msra.mxu0 0.0
        %1873 = vmatprep.subr.mxu0 0.0
        %1874 = vmatpush1.xpose.msra.mxu0 0.0
        %1875 = vmatprep.mubr.f32.mxu0 0.0
        %1876 = vmatmul.mubr.f32.gmra.mrb[0].mxu0 %v1658
        %v1877 = vpop.f32.mrb[0].mxu0
        %v1878 = vadd.f32 0.0, %v1877
        %v1879 = vpop.f32.mrb[0].mxu0
        %1880 = vmatprep.mubr.f32.mxu0 0.0
        %1881 = vmatmul.mubr.f32.gmra.mrb[0].mxu0 %v1731
        %v1882 = vpop.f32.mrb[0].mxu0
        %v1883 = vadd.f32 0.0, %v1882
        %v1884 = vpop.f32.mrb[0].mxu0
        %1885 = vdwg.mxu0
        %1886 = vmatprep.subr.mxu0 0.0
        %1887 = vmatpush1.xpose.msra.mxu0 %v1111
        %1888 = vmatprep.subr.mxu0 0.0
        %1889 = vmatpush1.xpose.msra.mxu0 %v1112
        %1890 = vmatprep.subr.mxu0 0.0
        %1891 = vmatpush1.xpose.msra.mxu0 %v1113
        %1892 = vmatprep.subr.mxu0 0.0
        %1893 = vmatpush1.xpose.msra.mxu0 %v1114
        %1894 = vmatprep.subr.mxu0 0.0
        %1895 = vmatpush1.xpose.msra.mxu0 %v1115
        %1896 = vmatprep.subr.mxu0 0.0
        %1897 = vmatpush1.xpose.msra.mxu0 %v1116
        %1898 = vmatprep.subr.mxu0 0.0
        %1899 = vmatpush1.xpose.msra.mxu0 %v1117
        %1900 = vmatprep.subr.mxu0 0.0
        %1901 = vmatpush1.xpose.msra.mxu0 %v1118
        %1902 = vmatprep.subr.mxu0 0.0
        %1903 = vmatpush1.xpose.msra.mxu0 %v1119
        %1904 = vmatprep.subr.mxu0 0.0
        %1905 = vmatpush1.xpose.msra.mxu0 %v1120
        %1906 = vmatprep.subr.mxu0 0.0
        %1907 = vmatpush1.xpose.msra.mxu0 %v1121
        %1908 = vmatprep.subr.mxu0 0.0
        %1909 = vmatpush1.xpose.msra.mxu0 %v1122
        %1910 = vmatprep.subr.mxu0 0.0
        %1911 = vmatpush1.xpose.msra.mxu0 %v1123
        %1912 = vmatprep.subr.mxu0 0.0
        %1913 = vmatpush1.xpose.msra.mxu0 %v1124
        %1914 = vmatprep.subr.mxu0 0.0
        %1915 = vmatpush1.xpose.msra.mxu0 %v1125
        %1916 = vmatprep.subr.mxu0 0.0
        %1917 = vmatpush1.xpose.msra.mxu0 %v1126
        %1918 = vmatprep.subr.mxu0 0.0
        %1919 = vmatpush1.xpose.msra.mxu0 %v1127
        %1920 = vmatprep.subr.mxu0 0.0
        %1921 = vmatpush1.xpose.msra.mxu0 %v1128
        %1922 = vmatprep.subr.mxu0 0.0
        %1923 = vmatpush1.xpose.msra.mxu0 %v1129
        %1924 = vmatprep.subr.mxu0 0.0
        %1925 = vmatpush1.xpose.msra.mxu0 %v1130
        %1926 = vmatprep.subr.mxu0 0.0
        %1927 = vmatpush1.xpose.msra.mxu0 %v1131
        %1928 = vmatprep.subr.mxu0 0.0
        %1929 = vmatpush1.xpose.msra.mxu0 %v1132
        %1930 = vmatprep.subr.mxu0 0.0
        %1931 = vmatpush1.xpose.msra.mxu0 %v1133
        %1932 = vmatprep.subr.mxu0 0.0
        %1933 = vmatpush1.xpose.msra.mxu0 %v1134
        %1934 = vmatprep.subr.mxu0 0.0
        %1935 = vmatpush1.xpose.msra.mxu0 %v1135
        %1936 = vmatprep.subr.mxu0 0.0
        %1937 = vmatpush1.xpose.msra.mxu0 %v1136
        %1938 = vmatprep.subr.mxu0 0.0
        %1939 = vmatpush1.xpose.msra.mxu0 %v1137
        %1940 = vmatprep.subr.mxu0 0.0
        %1941 = vmatpush1.xpose.msra.mxu0 %v1138
        %1942 = vmatprep.subr.mxu0 0.0
        %1943 = vmatpush1.xpose.msra.mxu0 %v1139
        %1944 = vmatprep.subr.mxu0 0.0
        %1945 = vmatpush1.xpose.msra.mxu0 %v1140
        %1946 = vmatprep.subr.mxu0 0.0
        %1947 = vmatpush1.xpose.msra.mxu0 %v1141
        %1948 = vmatprep.subr.mxu0 0.0
        %1949 = vmatpush1.xpose.msra.mxu0 %v1142
        %1950 = vmatprep.mubr.f32.mxu0 0.0
        %1951 = vmatmul.mubr.f32.gmra.mrb[0].mxu0 %v1506
        %v1952 = vpop.f32.mrb[0].mxu0
        %v1953 = vadd.f32 %v1801, %v1952
        %v1954 = vpop.f32.mrb[0].mxu0
        %v1955 = vadd.f32 %v1803, %v1954
        %1956 = vmatprep.mubr.f32.mxu0 0.0
        %1957 = vmatmul.mubr.f32.gmra.mrb[0].mxu0 %v1579
        %v1958 = vpop.f32.mrb[0].mxu0
        %v1959 = vadd.f32 %v1807, %v1958
        %v1960 = vpop.f32.mrb[0].mxu0
        %v1961 = vadd.f32 %v1809, %v1960
        %1962 = vdwg.mxu0
        %1963 = vmatprep.subr.mxu0 0.0
        %1964 = vmatpush1.xpose.msra.mxu0 %v1143
        %1965 = vmatprep.subr.mxu0 0.0
        %1966 = vmatpush1.xpose.msra.mxu0 %v1144
        %1967 = vmatprep.subr.mxu0 0.0
        %1968 = vmatpush1.xpose.msra.mxu0 %v1145
        %1969 = vmatprep.subr.mxu0 0.0
        %1970 = vmatpush1.xpose.msra.mxu0 %v1146
        %1971 = vmatprep.subr.mxu0 0.0
        %1972 = vmatpush1.xpose.msra.mxu0 %v1147
        %1973 = vmatprep.subr.mxu0 0.0
        %1974 = vmatpush1.xpose.msra.mxu0 %v1148
        %1975 = vmatprep.subr.mxu0 0.0
        %1976 = vmatpush1.xpose.msra.mxu0 %v1149
        %1977 = vmatprep.subr.mxu0 0.0
        %1978 = vmatpush1.xpose.msra.mxu0 %v1150
        %1979 = vmatprep.subr.mxu0 0.0
        %1980 = vmatpush1.xpose.msra.mxu0 %v1151
        %1981 = vmatprep.subr.mxu0 0.0
        %1982 = vmatpush1.xpose.msra.mxu0 %v1152
        %1983 = vmatprep.subr.mxu0 0.0
        %1984 = vmatpush1.xpose.msra.mxu0 %v1153
        %1985 = vmatprep.subr.mxu0 0.0
        %1986 = vmatpush1.xpose.msra.mxu0 %v1154
        %1987 = vmatprep.subr.mxu0 0.0
        %1988 = vmatpush1.xpose.msra.mxu0 %v1155
        %1989 = vmatprep.subr.mxu0 0.0
        %1990 = vmatpush1.xpose.msra.mxu0 %v1156
        %1991 = vmatprep.subr.mxu0 0.0
        %1992 = vmatpush1.xpose.msra.mxu0 %v1157
        %1993 = vmatprep.subr.mxu0 0.0
        %1994 = vmatpush1.xpose.msra.mxu0 %v1158
        %1995 = vmatprep.subr.mxu0 0.0
        %1996 = vmatpush1.xpose.msra.mxu0 0.0
        %1997 = vmatprep.subr.mxu0 0.0
        %1998 = vmatpush1.xpose.msra.mxu0 0.0
        %1999 = vmatprep.subr.mxu0 0.0
        %2000 = vmatpush1.xpose.msra.mxu0 0.0
        %2001 = vmatprep.subr.mxu0 0.0
        %2002 = vmatpush1.xpose.msra.mxu0 0.0
        %2003 = vmatprep.subr.mxu0 0.0
        %2004 = vmatpush1.xpose.msra.mxu0 0.0
        %2005 = vmatprep.subr.mxu0 0.0
        %2006 = vmatpush1.xpose.msra.mxu0 0.0
        %2007 = vmatprep.subr.mxu0 0.0
        %2008 = vmatpush1.xpose.msra.mxu0 0.0
        %2009 = vmatprep.subr.mxu0 0.0
        %2010 = vmatpush1.xpose.msra.mxu0 0.0
        %2011 = vmatprep.subr.mxu0 0.0
        %2012 = vmatpush1.xpose.msra.mxu0 0.0
        %2013 = vmatprep.subr.mxu0 0.0
        %2014 = vmatpush1.xpose.msra.mxu0 0.0
        %2015 = vmatprep.subr.mxu0 0.0
        %2016 = vmatpush1.xpose.msra.mxu0 0.0
        %2017 = vmatprep.subr.mxu0 0.0
        %2018 = vmatpush1.xpose.msra.mxu0 0.0
        %2019 = vmatprep.subr.mxu0 0.0
        %2020 = vmatpush1.xpose.msra.mxu0 0.0
        %2021 = vmatprep.subr.mxu0 0.0
        %2022 = vmatpush1.xpose.msra.mxu0 0.0
        %2023 = vmatprep.subr.mxu0 0.0
        %2024 = vmatpush1.xpose.msra.mxu0 0.0
        %2025 = vmatprep.subr.mxu0 0.0
        %2026 = vmatpush1.xpose.msra.mxu0 0.0
        %2027 = vmatprep.mubr.f32.mxu0 0.0
        %2028 = vmatmul.mubr.f32.gmra.mrb[0].mxu0 %v1506
        %v2029 = vpop.f32.mrb[0].mxu0
        %v2030 = vadd.f32 %v1878, %v2029
        %v2031 = vpop.f32.mrb[0].mxu0
        %2032 = vmatprep.mubr.f32.mxu0 0.0
        %2033 = vmatmul.mubr.f32.gmra.mrb[0].mxu0 %v1579
        %v2034 = vpop.f32.mrb[0].mxu0
        %v2035 = vadd.f32 %v1883, %v2034
        %v2036 = vpop.f32.mrb[0].mxu0
        %2037 = vdwg.mxu0
        %v2039 = vlaneseq
        %v2040 = vshrl.u32 %v2039, 7
        %v2041 = vsub.s32 0, %v2040
        %v2042 = vrot.slane %v1207, %v2041
        %v2043 = vlaneseq
        %v2044 = vshrl.u32 %v2043, 7
        %v2045 = vsub.s32 1, %v2044
        %v2046 = vrot.slane %v1207, %v2045
        %v2047 = vlaneseq
        %v2048 = vshrl.u32 %v2047, 7
        %v2049 = vsub.s32 2, %v2048
        %v2050 = vrot.slane %v1207, %v2049
        %v2054 = vadd.f32 %v1953, %v2042
        %v2055 = vadd.f32 %v1955, %v2046
        %v2056 = vadd.f32 %v2030, %v2050
        %v2057 = vadd.f32 %v1959, %v2042
        %v2058 = vadd.f32 %v1961, %v2046
        %v2059 = vadd.f32 %v2035, %v2050
        %v2061 = vlaneseq
        %v2062 = vshrl.u32 %v2061, 7
        %v2063 = vsub.s32 0, %v2062
        %v2064 = vrot.slane %v1256, %v2063
        %v2065 = vlaneseq
        %v2066 = vshrl.u32 %v2065, 7
        %v2067 = vsub.s32 1, %v2066
        %v2068 = vrot.slane %v1256, %v2067
        %v2069 = vlaneseq
        %v2070 = vshrl.u32 %v2069, 7
        %v2071 = vsub.s32 2, %v2070
        %v2072 = vrot.slane %v1256, %v2071
        %2076 = vmatprep.subr.mxu0 0.0
        %2077 = vmatpush1.xpose.msra.mxu0 %v1208
        %2078 = vmatprep.subr.mxu0 0.0
        %2079 = vmatpush1.xpose.msra.mxu0 %v1209
        %2080 = vmatprep.subr.mxu0 0.0
        %2081 = vmatpush1.xpose.msra.mxu0 %v1210
        %2082 = vmatprep.subr.mxu0 0.0
        %2083 = vmatpush1.xpose.msra.mxu0 %v1211
        %2084 = vmatprep.subr.mxu0 0.0
        %2085 = vmatpush1.xpose.msra.mxu0 %v1212
        %2086 = vmatprep.subr.mxu0 0.0
        %2087 = vmatpush1.xpose.msra.mxu0 %v1213
        %2088 = vmatprep.subr.mxu0 0.0
        %2089 = vmatpush1.xpose.msra.mxu0 %v1214
        %2090 = vmatprep.subr.mxu0 0.0
        %2091 = vmatpush1.xpose.msra.mxu0 %v1215
        %2092 = vmatprep.subr.mxu0 0.0
        %2093 = vmatpush1.xpose.msra.mxu0 %v1216
        %2094 = vmatprep.subr.mxu0 0.0
        %2095 = vmatpush1.xpose.msra.mxu0 %v1217
        %2096 = vmatprep.subr.mxu0 0.0
        %2097 = vmatpush1.xpose.msra.mxu0 %v1218
        %2098 = vmatprep.subr.mxu0 0.0
        %2099 = vmatpush1.xpose.msra.mxu0 %v1219
        %2100 = vmatprep.subr.mxu0 0.0
        %2101 = vmatpush1.xpose.msra.mxu0 %v1220
        %2102 = vmatprep.subr.mxu0 0.0
        %2103 = vmatpush1.xpose.msra.mxu0 %v1221
        %2104 = vmatprep.subr.mxu0 0.0
        %2105 = vmatpush1.xpose.msra.mxu0 %v1222
        %2106 = vmatprep.subr.mxu0 0.0
        %2107 = vmatpush1.xpose.msra.mxu0 %v1223
        %2108 = vmatprep.subr.mxu0 0.0
        %2109 = vmatpush1.xpose.msra.mxu0 %v1224
        %2110 = vmatprep.subr.mxu0 0.0
        %2111 = vmatpush1.xpose.msra.mxu0 %v1225
        %2112 = vmatprep.subr.mxu0 0.0
        %2113 = vmatpush1.xpose.msra.mxu0 %v1226
        %2114 = vmatprep.subr.mxu0 0.0
        %2115 = vmatpush1.xpose.msra.mxu0 %v1227
        %2116 = vmatprep.subr.mxu0 0.0
        %2117 = vmatpush1.xpose.msra.mxu0 %v1228
        %2118 = vmatprep.subr.mxu0 0.0
        %2119 = vmatpush1.xpose.msra.mxu0 %v1229
        %2120 = vmatprep.subr.mxu0 0.0
        %2121 = vmatpush1.xpose.msra.mxu0 %v1230
        %2122 = vmatprep.subr.mxu0 0.0
        %2123 = vmatpush1.xpose.msra.mxu0 %v1231
        %2124 = vmatprep.subr.mxu0 0.0
        %2125 = vmatpush1.xpose.msra.mxu0 %v1232
        %2126 = vmatprep.subr.mxu0 0.0
        %2127 = vmatpush1.xpose.msra.mxu0 %v1233
        %2128 = vmatprep.subr.mxu0 0.0
        %2129 = vmatpush1.xpose.msra.mxu0 %v1234
        %2130 = vmatprep.subr.mxu0 0.0
        %2131 = vmatpush1.xpose.msra.mxu0 %v1235
        %2132 = vmatprep.subr.mxu0 0.0
        %2133 = vmatpush1.xpose.msra.mxu0 %v1236
        %2134 = vmatprep.subr.mxu0 0.0
        %2135 = vmatpush1.xpose.msra.mxu0 %v1237
        %2136 = vmatprep.subr.mxu0 0.0
        %2137 = vmatpush1.xpose.msra.mxu0 %v1238
        %2138 = vmatprep.subr.mxu0 0.0
        %2139 = vmatpush1.xpose.msra.mxu0 %v1239
        %2140 = vmatprep.mubr.f32.mxu0 0.0
        %2141 = vmatmul.mubr.f32.gmra.mrb[0].mxu0 %v1074
        %v2142 = vpop.f32.mrb[0].mxu0
        %v2143 = vadd.f32 %v2064, %v2142
        %v2144 = vpop.f32.mrb[0].mxu0
        %v2145 = vadd.f32 %v2068, %v2144
        %2146 = vmatprep.mubr.f32.mxu0 0.0
        %2147 = vmatmul.mubr.f32.gmra.mrb[0].mxu0 %v1075
        %v2148 = vpop.f32.mrb[0].mxu0
        %v2149 = vadd.f32 %v2064, %v2148
        %v2150 = vpop.f32.mrb[0].mxu0
        %v2151 = vadd.f32 %v2068, %v2150
        %2152 = vdwg.mxu0
        %2153 = vmatprep.subr.mxu0 0.0
        %2154 = vmatpush1.xpose.msra.mxu0 %v1240
        %2155 = vmatprep.subr.mxu0 0.0
        %2156 = vmatpush1.xpose.msra.mxu0 %v1241
        %2157 = vmatprep.subr.mxu0 0.0
        %2158 = vmatpush1.xpose.msra.mxu0 %v1242
        %2159 = vmatprep.subr.mxu0 0.0
        %2160 = vmatpush1.xpose.msra.mxu0 %v1243
        %2161 = vmatprep.subr.mxu0 0.0
        %2162 = vmatpush1.xpose.msra.mxu0 %v1244
        %2163 = vmatprep.subr.mxu0 0.0
        %2164 = vmatpush1.xpose.msra.mxu0 %v1245
        %2165 = vmatprep.subr.mxu0 0.0
        %2166 = vmatpush1.xpose.msra.mxu0 %v1246
        %2167 = vmatprep.subr.mxu0 0.0
        %2168 = vmatpush1.xpose.msra.mxu0 %v1247
        %2169 = vmatprep.subr.mxu0 0.0
        %2170 = vmatpush1.xpose.msra.mxu0 %v1248
        %2171 = vmatprep.subr.mxu0 0.0
        %2172 = vmatpush1.xpose.msra.mxu0 %v1249
        %2173 = vmatprep.subr.mxu0 0.0
        %2174 = vmatpush1.xpose.msra.mxu0 %v1250
        %2175 = vmatprep.subr.mxu0 0.0
        %2176 = vmatpush1.xpose.msra.mxu0 %v1251
        %2177 = vmatprep.subr.mxu0 0.0
        %2178 = vmatpush1.xpose.msra.mxu0 %v1252
        %2179 = vmatprep.subr.mxu0 0.0
        %2180 = vmatpush1.xpose.msra.mxu0 %v1253
        %2181 = vmatprep.subr.mxu0 0.0
        %2182 = vmatpush1.xpose.msra.mxu0 %v1254
        %2183 = vmatprep.subr.mxu0 0.0
        %2184 = vmatpush1.xpose.msra.mxu0 %v1255
        %2185 = vmatprep.subr.mxu0 0.0
        %2186 = vmatpush1.xpose.msra.mxu0 0.0
        %2187 = vmatprep.subr.mxu0 0.0
        %2188 = vmatpush1.xpose.msra.mxu0 0.0
        %2189 = vmatprep.subr.mxu0 0.0
        %2190 = vmatpush1.xpose.msra.mxu0 0.0
        %2191 = vmatprep.subr.mxu0 0.0
        %2192 = vmatpush1.xpose.msra.mxu0 0.0
        %2193 = vmatprep.subr.mxu0 0.0
        %2194 = vmatpush1.xpose.msra.mxu0 0.0
        %2195 = vmatprep.subr.mxu0 0.0
        %2196 = vmatpush1.xpose.msra.mxu0 0.0
        %2197 = vmatprep.subr.mxu0 0.0
        %2198 = vmatpush1.xpose.msra.mxu0 0.0
        %2199 = vmatprep.subr.mxu0 0.0
        %2200 = vmatpush1.xpose.msra.mxu0 0.0
        %2201 = vmatprep.subr.mxu0 0.0
        %2202 = vmatpush1.xpose.msra.mxu0 0.0
        %2203 = vmatprep.subr.mxu0 0.0
        %2204 = vmatpush1.xpose.msra.mxu0 0.0
        %2205 = vmatprep.subr.mxu0 0.0
        %2206 = vmatpush1.xpose.msra.mxu0 0.0
        %2207 = vmatprep.subr.mxu0 0.0
        %2208 = vmatpush1.xpose.msra.mxu0 0.0
        %2209 = vmatprep.subr.mxu0 0.0
        %2210 = vmatpush1.xpose.msra.mxu0 0.0
        %2211 = vmatprep.subr.mxu0 0.0
        %2212 = vmatpush1.xpose.msra.mxu0 0.0
        %2213 = vmatprep.subr.mxu0 0.0
        %2214 = vmatpush1.xpose.msra.mxu0 0.0
        %2215 = vmatprep.subr.mxu0 0.0
        %2216 = vmatpush1.xpose.msra.mxu0 0.0
        %2217 = vmatprep.mubr.f32.mxu0 0.0
        %2218 = vmatmul.mubr.f32.gmra.mrb[0].mxu0 %v1074
        %v2219 = vpop.f32.mrb[0].mxu0
        %v2220 = vadd.f32 %v2072, %v2219
        %v2221 = vpop.f32.mrb[0].mxu0
        %2222 = vmatprep.mubr.f32.mxu0 0.0
        %2223 = vmatmul.mubr.f32.gmra.mrb[0].mxu0 %v1075
        %v2224 = vpop.f32.mrb[0].mxu0
        %v2225 = vadd.f32 %v2072, %v2224
        %v2226 = vpop.f32.mrb[0].mxu0
        %2227 = vdwg.mxu0
        %v2228 = vadd.f32 %v2054, %v2143
        %v2229 = vadd.f32 %v2057, %v2149
        %v2230 = vxor.u32 %v2228, 2147483648
        %v2231 = vxor.u32 %v2229, 2147483648
        %v2232 = vmul.f32 %v2230, 1.442695
        %v2233 = vpow.pop %v2232
        %v2234 = vmul.f32 %v2231, 1.442695
        %v2235 = vpow.pop %v2234
        %v2236 = vadd.f32 %v2233, 1.0
        %v2237 = vadd.f32 %v2235, 1.0
        %v2238 = vrcp.pop %v2236
        %v2239 = vmul.f32 1.0, %v2238
        %v2240 = vrcp.pop %v2237
        %v2241 = vmul.f32 1.0, %v2240
        %v2242 = vadd.f32 %v2055, %v2145
        %v2243 = vadd.f32 %v2058, %v2151
        %v2244 = vxor.u32 %v2242, 2147483648
        %v2245 = vxor.u32 %v2243, 2147483648
        %v2246 = vmul.f32 %v2244, 1.442695
        %v2247 = vpow.pop %v2246
        %v2248 = vmul.f32 %v2245, 1.442695
        %v2249 = vpow.pop %v2248
        %v2250 = vadd.f32 %v2247, 1.0
        %v2251 = vadd.f32 %v2249, 1.0
        %v2252 = vrcp.pop %v2250
        %v2253 = vmul.f32 1.0, %v2252
        %v2254 = vrcp.pop %v2251
        %v2255 = vmul.f32 1.0, %v2254
        %v2256 = vmul.f32 %v2239, %v2220
        %v2257 = vmul.f32 %v2241, %v2225
        %v2258 = vadd.f32 %v2056, %v2256
        %v2259 = vadd.f32 %v2059, %v2257
        %v2260 = vtanh.pop %v2258
        %v2261 = vtanh.pop %v2259
        %v2262 = vsub.f32 %v1074, %v2260
        %v2263 = vsub.f32 %v1075, %v2261
        %v2264 = vmul.f32 %v2253, %v2262
        %v2265 = vmul.f32 %v2255, %v2263
        %v2266 = vadd.f32 %v2260, %v2264
        %v2267 = vadd.f32 %v2261, %v2265
        %v2268 = vld [vmem:[%s916] sm:$0xff]
        %v2269 = vld [vmem:[%s916 + $0x8] sm:$0xff]
        %v2271 = vsel %vm1435, %v2268, 0
        %2273 = vmatprep.subr.mxu0 0.0
        %2274 = vmatpush1.msra.mxu0 %v2266
        %2275 = vmatprep.subr.mxu0 0.0
        %2276 = vmatpush1.msra.mxu0 0.0
        %2277 = vmatprep.subr.mxu0 0.0
        %2278 = vmatpush1.msra.mxu0 0.0
        %2279 = vmatprep.subr.mxu0 0.0
        %2280 = vmatpush1.msra.mxu0 0.0
        %2281 = vmatprep.subr.mxu0 0.0
        %2282 = vmatpush1.msra.mxu0 0.0
        %2283 = vmatprep.subr.mxu0 0.0
        %2284 = vmatpush1.msra.mxu0 0.0
        %2285 = vmatprep.subr.mxu0 0.0
        %2286 = vmatpush1.msra.mxu0 0.0
        %2287 = vmatprep.subr.mxu0 0.0
        %2288 = vmatpush1.msra.mxu0 0.0
        %2289 = vmatprep.subr.mxu0 0.0
        %2290 = vmatpush1.msra.mxu0 0.0
        %2291 = vmatprep.subr.mxu0 0.0
        %2292 = vmatpush1.msra.mxu0 0.0
        %2293 = vmatprep.subr.mxu0 0.0
        %2294 = vmatpush1.msra.mxu0 0.0
        %2295 = vmatprep.subr.mxu0 0.0
        %2296 = vmatpush1.msra.mxu0 0.0
        %2297 = vmatprep.subr.mxu0 0.0
        %2298 = vmatpush1.msra.mxu0 0.0
        %2299 = vmatprep.subr.mxu0 0.0
        %2300 = vmatpush1.msra.mxu0 0.0
        %2301 = vmatprep.subr.mxu0 0.0
        %2302 = vmatpush1.msra.mxu0 0.0
        %2303 = vmatprep.subr.mxu0 0.0
        %2304 = vmatpush1.msra.mxu0 0.0
        %2305 = vmatprep.subr.mxu0 0.0
        %2306 = vmatpush1.msra.mxu0 0.0
        %2307 = vmatprep.subr.mxu0 0.0
        %2308 = vmatpush1.msra.mxu0 0.0
        %2309 = vmatprep.subr.mxu0 0.0
        %2310 = vmatpush1.msra.mxu0 0.0
        %2311 = vmatprep.subr.mxu0 0.0
        %2312 = vmatpush1.msra.mxu0 0.0
        %2313 = vmatprep.subr.mxu0 0.0
        %2314 = vmatpush1.msra.mxu0 0.0
        %2315 = vmatprep.subr.mxu0 0.0
        %2316 = vmatpush1.msra.mxu0 0.0
        %2317 = vmatprep.subr.mxu0 0.0
        %2318 = vmatpush1.msra.mxu0 0.0
        %2319 = vmatprep.subr.mxu0 0.0
        %2320 = vmatpush1.msra.mxu0 0.0
        %2321 = vmatprep.subr.mxu0 0.0
        %2322 = vmatpush1.msra.mxu0 0.0
        %2323 = vmatprep.subr.mxu0 0.0
        %2324 = vmatpush1.msra.mxu0 0.0
        %2325 = vmatprep.subr.mxu0 0.0
        %2326 = vmatpush1.msra.mxu0 0.0
        %2327 = vmatprep.subr.mxu0 0.0
        %2328 = vmatpush1.msra.mxu0 0.0
        %2329 = vmatprep.subr.mxu0 0.0
        %2330 = vmatpush1.msra.mxu0 0.0
        %2331 = vmatprep.subr.mxu0 0.0
        %2332 = vmatpush1.msra.mxu0 0.0
        %2333 = vmatprep.subr.mxu0 0.0
        %2334 = vmatpush1.msra.mxu0 0.0
        %2335 = vmatprep.subr.mxu0 0.0
        %2336 = vmatpush1.msra.mxu0 0.0
        %2337 = vmatprep.mubr.f32.mxu0 0.0
        %2338 = vmatmul.mubr.f32.gmra.mrb[0].mxu0 %v2271
        %v2339 = vpop.f32.mrb[0].mxu0
        %v2340 = vadd.f32 0.0, %v2339
        %v2341 = vpop.f32.mrb[0].mxu0
        %2342 = vdwg.mxu0
        %v2344 = vsel %vm1435, %v2269, 0
        %2346 = vmatprep.subr.mxu0 0.0
        %2347 = vmatpush1.msra.mxu0 %v2267
        %2348 = vmatprep.subr.mxu0 0.0
        %2349 = vmatpush1.msra.mxu0 0.0
        %2350 = vmatprep.subr.mxu0 0.0
        %2351 = vmatpush1.msra.mxu0 0.0
        %2352 = vmatprep.subr.mxu0 0.0
        %2353 = vmatpush1.msra.mxu0 0.0
        %2354 = vmatprep.subr.mxu0 0.0
        %2355 = vmatpush1.msra.mxu0 0.0
        %2356 = vmatprep.subr.mxu0 0.0
        %2357 = vmatpush1.msra.mxu0 0.0
        %2358 = vmatprep.subr.mxu0 0.0
        %2359 = vmatpush1.msra.mxu0 0.0
        %2360 = vmatprep.subr.mxu0 0.0
        %2361 = vmatpush1.msra.mxu0 0.0
        %2362 = vmatprep.subr.mxu0 0.0
        %2363 = vmatpush1.msra.mxu0 0.0
        %2364 = vmatprep.subr.mxu0 0.0
        %2365 = vmatpush1.msra.mxu0 0.0
        %2366 = vmatprep.subr.mxu0 0.0
        %2367 = vmatpush1.msra.mxu0 0.0
        %2368 = vmatprep.subr.mxu0 0.0
        %2369 = vmatpush1.msra.mxu0 0.0
        %2370 = vmatprep.subr.mxu0 0.0
        %2371 = vmatpush1.msra.mxu0 0.0
        %2372 = vmatprep.subr.mxu0 0.0
        %2373 = vmatpush1.msra.mxu0 0.0
        %2374 = vmatprep.subr.mxu0 0.0
        %2375 = vmatpush1.msra.mxu0 0.0
        %2376 = vmatprep.subr.mxu0 0.0
        %2377 = vmatpush1.msra.mxu0 0.0
        %2378 = vmatprep.subr.mxu0 0.0
        %2379 = vmatpush1.msra.mxu0 0.0
        %2380 = vmatprep.subr.mxu0 0.0
        %2381 = vmatpush1.msra.mxu0 0.0
        %2382 = vmatprep.subr.mxu0 0.0
        %2383 = vmatpush1.msra.mxu0 0.0
        %2384 = vmatprep.subr.mxu0 0.0
        %2385 = vmatpush1.msra.mxu0 0.0
        %2386 = vmatprep.subr.mxu0 0.0
        %2387 = vmatpush1.msra.mxu0 0.0
        %2388 = vmatprep.subr.mxu0 0.0
        %2389 = vmatpush1.msra.mxu0 0.0
        %2390 = vmatprep.subr.mxu0 0.0
        %2391 = vmatpush1.msra.mxu0 0.0
        %2392 = vmatprep.subr.mxu0 0.0
        %2393 = vmatpush1.msra.mxu0 0.0
        %2394 = vmatprep.subr.mxu0 0.0
        %2395 = vmatpush1.msra.mxu0 0.0
        %2396 = vmatprep.subr.mxu0 0.0
        %2397 = vmatpush1.msra.mxu0 0.0
        %2398 = vmatprep.subr.mxu0 0.0
        %2399 = vmatpush1.msra.mxu0 0.0
        %2400 = vmatprep.subr.mxu0 0.0
        %2401 = vmatpush1.msra.mxu0 0.0
        %2402 = vmatprep.subr.mxu0 0.0
        %2403 = vmatpush1.msra.mxu0 0.0
        %2404 = vmatprep.subr.mxu0 0.0
        %2405 = vmatpush1.msra.mxu0 0.0
        %2406 = vmatprep.subr.mxu0 0.0
        %2407 = vmatpush1.msra.mxu0 0.0
        %2408 = vmatprep.subr.mxu0 0.0
        %2409 = vmatpush1.msra.mxu0 0.0
        %2410 = vmatprep.mubr.f32.mxu0 0.0
        %2411 = vmatmul.mubr.f32.gmra.mrb[0].mxu0 %v2344
        %v2412 = vpop.f32.mrb[0].mxu0
        %v2413 = vadd.f32 0.0, %v2412
        %v2414 = vpop.f32.mrb[0].mxu0
        %2415 = vdwg.mxu0
        %v2416 = vld [vmem:[%s1060] sm:$0x1]
        %v2417 = vld [vmem:[%s1060 + $0x1] sm:$0x1]
        %v2419 = vsel %vm1435, %v2416, 0
        %2421 = vmatprep.subr.mxu0 0.0
        %2422 = vmatpush1.msra.mxu0 %v2340
        %2423 = vmatprep.subr.mxu0 0.0
        %2424 = vmatpush1.msra.mxu0 0.0
        %2425 = vmatprep.subr.mxu0 0.0
        %2426 = vmatpush1.msra.mxu0 0.0
        %2427 = vmatprep.subr.mxu0 0.0
        %2428 = vmatpush1.msra.mxu0 0.0
        %2429 = vmatprep.subr.mxu0 0.0
        %2430 = vmatpush1.msra.mxu0 0.0
        %2431 = vmatprep.subr.mxu0 0.0
        %2432 = vmatpush1.msra.mxu0 0.0
        %2433 = vmatprep.subr.mxu0 0.0
        %2434 = vmatpush1.msra.mxu0 0.0
        %2435 = vmatprep.subr.mxu0 0.0
        %2436 = vmatpush1.msra.mxu0 0.0
        %2437 = vmatprep.subr.mxu0 0.0
        %2438 = vmatpush1.msra.mxu0 0.0
        %2439 = vmatprep.subr.mxu0 0.0
        %2440 = vmatpush1.msra.mxu0 0.0
        %2441 = vmatprep.subr.mxu0 0.0
        %2442 = vmatpush1.msra.mxu0 0.0
        %2443 = vmatprep.subr.mxu0 0.0
        %2444 = vmatpush1.msra.mxu0 0.0
        %2445 = vmatprep.subr.mxu0 0.0
        %2446 = vmatpush1.msra.mxu0 0.0
        %2447 = vmatprep.subr.mxu0 0.0
        %2448 = vmatpush1.msra.mxu0 0.0
        %2449 = vmatprep.subr.mxu0 0.0
        %2450 = vmatpush1.msra.mxu0 0.0
        %2451 = vmatprep.subr.mxu0 0.0
        %2452 = vmatpush1.msra.mxu0 0.0
        %2453 = vmatprep.subr.mxu0 0.0
        %2454 = vmatpush1.msra.mxu0 0.0
        %2455 = vmatprep.subr.mxu0 0.0
        %2456 = vmatpush1.msra.mxu0 0.0
        %2457 = vmatprep.subr.mxu0 0.0
        %2458 = vmatpush1.msra.mxu0 0.0
        %2459 = vmatprep.subr.mxu0 0.0
        %2460 = vmatpush1.msra.mxu0 0.0
        %2461 = vmatprep.subr.mxu0 0.0
        %2462 = vmatpush1.msra.mxu0 0.0
        %2463 = vmatprep.subr.mxu0 0.0
        %2464 = vmatpush1.msra.mxu0 0.0
        %2465 = vmatprep.subr.mxu0 0.0
        %2466 = vmatpush1.msra.mxu0 0.0
        %2467 = vmatprep.subr.mxu0 0.0
        %2468 = vmatpush1.msra.mxu0 0.0
        %2469 = vmatprep.subr.mxu0 0.0
        %2470 = vmatpush1.msra.mxu0 0.0
        %2471 = vmatprep.subr.mxu0 0.0
        %2472 = vmatpush1.msra.mxu0 0.0
        %2473 = vmatprep.subr.mxu0 0.0
        %2474 = vmatpush1.msra.mxu0 0.0
        %2475 = vmatprep.subr.mxu0 0.0
        %2476 = vmatpush1.msra.mxu0 0.0
        %2477 = vmatprep.subr.mxu0 0.0
        %2478 = vmatpush1.msra.mxu0 0.0
        %2479 = vmatprep.subr.mxu0 0.0
        %2480 = vmatpush1.msra.mxu0 0.0
        %2481 = vmatprep.subr.mxu0 0.0
        %2482 = vmatpush1.msra.mxu0 0.0
        %2483 = vmatprep.subr.mxu0 0.0
        %2484 = vmatpush1.msra.mxu0 0.0
        %2485 = vmatprep.mubr.f32.mxu0 0.0
        %2486 = vmatmul.mubr.f32.gmra.mrb[0].mxu0 %v2419
        %v2487 = vpop.f32.mrb[0].mxu0
        %v2488 = vadd.f32 0.0, %v2487
        %v2489 = vpop.f32.mrb[0].mxu0
        %2490 = vdwg.mxu0
        %v2492 = vsel %vm1435, %v2417, 0
        %2494 = vmatprep.subr.mxu0 0.0
        %2495 = vmatpush1.msra.mxu0 %v2413
        %2496 = vmatprep.subr.mxu0 0.0
        %2497 = vmatpush1.msra.mxu0 0.0
        %2498 = vmatprep.subr.mxu0 0.0
        %2499 = vmatpush1.msra.mxu0 0.0
        %2500 = vmatprep.subr.mxu0 0.0
        %2501 = vmatpush1.msra.mxu0 0.0
        %2502 = vmatprep.subr.mxu0 0.0
        %2503 = vmatpush1.msra.mxu0 0.0
        %2504 = vmatprep.subr.mxu0 0.0
        %2505 = vmatpush1.msra.mxu0 0.0
        %2506 = vmatprep.subr.mxu0 0.0
        %2507 = vmatpush1.msra.mxu0 0.0
        %2508 = vmatprep.subr.mxu0 0.0
        %2509 = vmatpush1.msra.mxu0 0.0
        %2510 = vmatprep.subr.mxu0 0.0
        %2511 = vmatpush1.msra.mxu0 0.0
        %2512 = vmatprep.subr.mxu0 0.0
        %2513 = vmatpush1.msra.mxu0 0.0
        %2514 = vmatprep.subr.mxu0 0.0
        %2515 = vmatpush1.msra.mxu0 0.0
        %2516 = vmatprep.subr.mxu0 0.0
        %2517 = vmatpush1.msra.mxu0 0.0
        %2518 = vmatprep.subr.mxu0 0.0
        %2519 = vmatpush1.msra.mxu0 0.0
        %2520 = vmatprep.subr.mxu0 0.0
        %2521 = vmatpush1.msra.mxu0 0.0
        %2522 = vmatprep.subr.mxu0 0.0
        %2523 = vmatpush1.msra.mxu0 0.0
        %2524 = vmatprep.subr.mxu0 0.0
        %2525 = vmatpush1.msra.mxu0 0.0
        %2526 = vmatprep.subr.mxu0 0.0
        %2527 = vmatpush1.msra.mxu0 0.0
        %2528 = vmatprep.subr.mxu0 0.0
        %2529 = vmatpush1.msra.mxu0 0.0
        %2530 = vmatprep.subr.mxu0 0.0
        %2531 = vmatpush1.msra.mxu0 0.0
        %2532 = vmatprep.subr.mxu0 0.0
        %2533 = vmatpush1.msra.mxu0 0.0
        %2534 = vmatprep.subr.mxu0 0.0
        %2535 = vmatpush1.msra.mxu0 0.0
        %2536 = vmatprep.subr.mxu0 0.0
        %2537 = vmatpush1.msra.mxu0 0.0
        %2538 = vmatprep.subr.mxu0 0.0
        %2539 = vmatpush1.msra.mxu0 0.0
        %2540 = vmatprep.subr.mxu0 0.0
        %2541 = vmatpush1.msra.mxu0 0.0
        %2542 = vmatprep.subr.mxu0 0.0
        %2543 = vmatpush1.msra.mxu0 0.0
        %2544 = vmatprep.subr.mxu0 0.0
        %2545 = vmatpush1.msra.mxu0 0.0
        %2546 = vmatprep.subr.mxu0 0.0
        %2547 = vmatpush1.msra.mxu0 0.0
        %2548 = vmatprep.subr.mxu0 0.0
        %2549 = vmatpush1.msra.mxu0 0.0
        %2550 = vmatprep.subr.mxu0 0.0
        %2551 = vmatpush1.msra.mxu0 0.0
        %2552 = vmatprep.subr.mxu0 0.0
        %2553 = vmatpush1.msra.mxu0 0.0
        %2554 = vmatprep.subr.mxu0 0.0
        %2555 = vmatpush1.msra.mxu0 0.0
        %2556 = vmatprep.subr.mxu0 0.0
        %2557 = vmatpush1.msra.mxu0 0.0
        %2558 = vmatprep.mubr.f32.mxu0 0.0
        %2559 = vmatmul.mubr.f32.gmra.mrb[0].mxu0 %v2492
        %v2560 = vpop.f32.mrb[0].mxu0
        %v2561 = vadd.f32 0.0, %v2560
        %v2562 = vpop.f32.mrb[0].mxu0
        %2563 = vdwg.mxu0
        %v2565 = vlaneseq
        %v2566 = vshrl.u32 %v2565, 7
        %v2567 = vsub.s32 0, %v2566
        %v2568 = vrot.slane %v1273, %v2567
        %v2572 = vrot.slane %v2561, 7
        %vm2573 = vcmask 1041409
        %v2574 = vsel %vm2573, %v2572, %v2488
        %2576 = vmatprep.subr.mxu0 0.0
        %2577 = vmatpush1.xpose.msra.mxu0 %v1257
        %2578 = vmatprep.subr.mxu0 0.0
        %2579 = vmatpush1.xpose.msra.mxu0 %v1258
        %2580 = vmatprep.subr.mxu0 0.0
        %2581 = vmatpush1.xpose.msra.mxu0 %v1259
        %2582 = vmatprep.subr.mxu0 0.0
        %2583 = vmatpush1.xpose.msra.mxu0 %v1260
        %2584 = vmatprep.subr.mxu0 0.0
        %2585 = vmatpush1.xpose.msra.mxu0 %v1261
        %2586 = vmatprep.subr.mxu0 0.0
        %2587 = vmatpush1.xpose.msra.mxu0 %v1262
        %2588 = vmatprep.subr.mxu0 0.0
        %2589 = vmatpush1.xpose.msra.mxu0 %v1263
        %2590 = vmatprep.subr.mxu0 0.0
        %2591 = vmatpush1.xpose.msra.mxu0 %v1264
        %2592 = vmatprep.subr.mxu0 0.0
        %2593 = vmatpush1.xpose.msra.mxu0 %v1265
        %2594 = vmatprep.subr.mxu0 0.0
        %2595 = vmatpush1.xpose.msra.mxu0 %v1266
        %2596 = vmatprep.subr.mxu0 0.0
        %2597 = vmatpush1.xpose.msra.mxu0 %v1267
        %2598 = vmatprep.subr.mxu0 0.0
        %2599 = vmatpush1.xpose.msra.mxu0 %v1268
        %2600 = vmatprep.subr.mxu0 0.0
        %2601 = vmatpush1.xpose.msra.mxu0 %v1269
        %2602 = vmatprep.subr.mxu0 0.0
        %2603 = vmatpush1.xpose.msra.mxu0 %v1270
        %2604 = vmatprep.subr.mxu0 0.0
        %2605 = vmatpush1.xpose.msra.mxu0 %v1271
        %2606 = vmatprep.subr.mxu0 0.0
        %2607 = vmatpush1.xpose.msra.mxu0 %v1272
        %2608 = vmatprep.subr.mxu0 0.0
        %2609 = vmatpush1.xpose.msra.mxu0 0.0
        %2610 = vmatprep.subr.mxu0 0.0
        %2611 = vmatpush1.xpose.msra.mxu0 0.0
        %2612 = vmatprep.subr.mxu0 0.0
        %2613 = vmatpush1.xpose.msra.mxu0 0.0
        %2614 = vmatprep.subr.mxu0 0.0
        %2615 = vmatpush1.xpose.msra.mxu0 0.0
        %2616 = vmatprep.subr.mxu0 0.0
        %2617 = vmatpush1.xpose.msra.mxu0 0.0
        %2618 = vmatprep.subr.mxu0 0.0
        %2619 = vmatpush1.xpose.msra.mxu0 0.0
        %2620 = vmatprep.subr.mxu0 0.0
        %2621 = vmatpush1.xpose.msra.mxu0 0.0
        %2622 = vmatprep.subr.mxu0 0.0
        %2623 = vmatpush1.xpose.msra.mxu0 0.0
        %2624 = vmatprep.subr.mxu0 0.0
        %2625 = vmatpush1.xpose.msra.mxu0 0.0
        %2626 = vmatprep.subr.mxu0 0.0
        %2627 = vmatpush1.xpose.msra.mxu0 0.0
        %2628 = vmatprep.subr.mxu0 0.0
        %2629 = vmatpush1.xpose.msra.mxu0 0.0
        %2630 = vmatprep.subr.mxu0 0.0
        %2631 = vmatpush1.xpose.msra.mxu0 0.0
        %2632 = vmatprep.subr.mxu0 0.0
        %2633 = vmatpush1.xpose.msra.mxu0 0.0
        %2634 = vmatprep.subr.mxu0 0.0
        %2635 = vmatpush1.xpose.msra.mxu0 0.0
        %2636 = vmatprep.subr.mxu0 0.0
        %2637 = vmatpush1.xpose.msra.mxu0 0.0
        %2638 = vmatprep.subr.mxu0 0.0
        %2639 = vmatpush1.xpose.msra.mxu0 0.0
        %2640 = vmatprep.mubr.f32.mxu0 0.0
        %2641 = vmatmul.mubr.f32.gmra.mrb[0].mxu0 %v2574
        %v2642 = vpop.f32.mrb[0].mxu0
        %v2643 = vadd.f32 %v2568, %v2642
        %v2644 = vpop.f32.mrb[0].mxu0
        %2645 = vdwg.mxu0
        %v2647 = vlaneseq
        %v2648 = vshrl.u32 %v2647, 7
        %v2649 = vsub.s32 0, %v2648
        %v2650 = vrot.slane %v1290, %v2649
        %2652 = vmatprep.subr.mxu0 0.0
        %2653 = vmatpush1.xpose.msra.mxu0 %v1274
        %2654 = vmatprep.subr.mxu0 0.0
        %2655 = vmatpush1.xpose.msra.mxu0 %v1275
        %2656 = vmatprep.subr.mxu0 0.0
        %2657 = vmatpush1.xpose.msra.mxu0 %v1276
        %2658 = vmatprep.subr.mxu0 0.0
        %2659 = vmatpush1.xpose.msra.mxu0 %v1277
        %2660 = vmatprep.subr.mxu0 0.0
        %2661 = vmatpush1.xpose.msra.mxu0 %v1278
        %2662 = vmatprep.subr.mxu0 0.0
        %2663 = vmatpush1.xpose.msra.mxu0 %v1279
        %2664 = vmatprep.subr.mxu0 0.0
        %2665 = vmatpush1.xpose.msra.mxu0 %v1280
        %2666 = vmatprep.subr.mxu0 0.0
        %2667 = vmatpush1.xpose.msra.mxu0 %v1281
        %2668 = vmatprep.subr.mxu0 0.0
        %2669 = vmatpush1.xpose.msra.mxu0 %v1282
        %2670 = vmatprep.subr.mxu0 0.0
        %2671 = vmatpush1.xpose.msra.mxu0 %v1283
        %2672 = vmatprep.subr.mxu0 0.0
        %2673 = vmatpush1.xpose.msra.mxu0 %v1284
        %2674 = vmatprep.subr.mxu0 0.0
        %2675 = vmatpush1.xpose.msra.mxu0 %v1285
        %2676 = vmatprep.subr.mxu0 0.0
        %2677 = vmatpush1.xpose.msra.mxu0 %v1286
        %2678 = vmatprep.subr.mxu0 0.0
        %2679 = vmatpush1.xpose.msra.mxu0 %v1287
        %2680 = vmatprep.subr.mxu0 0.0
        %2681 = vmatpush1.xpose.msra.mxu0 %v1288
        %2682 = vmatprep.subr.mxu0 0.0
        %2683 = vmatpush1.xpose.msra.mxu0 %v1289
        %2684 = vmatprep.subr.mxu0 0.0
        %2685 = vmatpush1.xpose.msra.mxu0 0.0
        %2686 = vmatprep.subr.mxu0 0.0
        %2687 = vmatpush1.xpose.msra.mxu0 0.0
        %2688 = vmatprep.subr.mxu0 0.0
        %2689 = vmatpush1.xpose.msra.mxu0 0.0
        %2690 = vmatprep.subr.mxu0 0.0
        %2691 = vmatpush1.xpose.msra.mxu0 0.0
        %2692 = vmatprep.subr.mxu0 0.0
        %2693 = vmatpush1.xpose.msra.mxu0 0.0
        %2694 = vmatprep.subr.mxu0 0.0
        %2695 = vmatpush1.xpose.msra.mxu0 0.0
        %2696 = vmatprep.subr.mxu0 0.0
        %2697 = vmatpush1.xpose.msra.mxu0 0.0
        %2698 = vmatprep.subr.mxu0 0.0
        %2699 = vmatpush1.xpose.msra.mxu0 0.0
        %2700 = vmatprep.subr.mxu0 0.0
        %2701 = vmatpush1.xpose.msra.mxu0 0.0
        %2702 = vmatprep.subr.mxu0 0.0
        %2703 = vmatpush1.xpose.msra.mxu0 0.0
        %2704 = vmatprep.subr.mxu0 0.0
        %2705 = vmatpush1.xpose.msra.mxu0 0.0
        %2706 = vmatprep.subr.mxu0 0.0
        %2707 = vmatpush1.xpose.msra.mxu0 0.0
        %2708 = vmatprep.subr.mxu0 0.0
        %2709 = vmatpush1.xpose.msra.mxu0 0.0
        %2710 = vmatprep.subr.mxu0 0.0
        %2711 = vmatpush1.xpose.msra.mxu0 0.0
        %2712 = vmatprep.subr.mxu0 0.0
        %2713 = vmatpush1.xpose.msra.mxu0 0.0
        %2714 = vmatprep.subr.mxu0 0.0
        %2715 = vmatpush1.xpose.msra.mxu0 0.0
        %2716 = vmatprep.mubr.f32.mxu0 0.0
        %2717 = vmatmul.mubr.f32.gmra.mrb[0].mxu0 %v2340
        %v2718 = vpop.f32.mrb[0].mxu0
        %v2719 = vadd.f32 %v2650, %v2718
        %v2720 = vpop.f32.mrb[0].mxu0
        %2721 = vmatprep.mubr.f32.mxu0 0.0
        %2722 = vmatmul.mubr.f32.gmra.mrb[0].mxu0 %v2413
        %v2723 = vpop.f32.mrb[0].mxu0
        %v2724 = vadd.f32 %v2650, %v2723
        %v2725 = vpop.f32.mrb[0].mxu0
        %2726 = vdwg.mxu0
        %v2729 = vunpack.c.l.s4 1966171168
        %v2730 = vunpack.c.0.s8 %v2729
        %v2731 = vlaneseq
        %v2732 = vshrl.u32 %v2731, 7
        %v2733 = vsub.s32 %v2730, %v2732
        %v2734 = vrot.slane %v2643, %v2733
        %v2735 = vcombine.high %v2734, %v2734
        %v2737 = vunpack.c.l.s4 1966171168
        %v2738 = vunpack.c.0.s8 %v2737
        %v2739 = vlaneseq
        %v2740 = vshrl.u32 %v2739, 7
        %v2741 = vsub.s32 %v2738, %v2740
        %v2742 = vrot.slane %v2734, %v2741
        %v2744 = vunpack.c.l.s4 1966171168
        %v2745 = vunpack.c.0.s8 %v2744
        %v2746 = vlaneseq
        %v2747 = vshrl.u32 %v2746, 7
        %v2748 = vsub.s32 %v2745, %v2747
        %v2749 = vrot.slane %v2735, %v2748
        %v2750 = vlaneseq
        %v2751 = vshrl.u32 %v2750, 7
        %v2752 = vsub.s32 0, %v2751
        %v2753 = vrot.slane %v2742, %v2752
        %v2754 = vlaneseq
        %v2755 = vshrl.u32 %v2754, 7
        %v2756 = vsub.s32 0, %v2755
        %v2757 = vrot.slane %v2749, %v2756
        %v2760 = vadd.f32 %v2753, %v2719
        %v2761 = vadd.f32 %v2757, %v2724
        %v2762 = vxor.u32 %v2760, 2147483648
        %v2763 = vxor.u32 %v2761, 2147483648
        %v2764 = vmul.f32 %v2762, 1.442695
        %v2765 = vpow.pop %v2764
        %v2766 = vmul.f32 %v2763, 1.442695
        %v2767 = vpow.pop %v2766
        %v2768 = vadd.f32 %v2765, 1.0
        %v2769 = vadd.f32 %v2767, 1.0
        %v2770 = vrcp.pop %v2768
        %v2771 = vmul.f32 1.0, %v2770
        %v2772 = vrcp.pop %v2769
        %v2773 = vmul.f32 1.0, %v2772
        %v2775 = vlaneseq
        %v2776 = vshrl.u32 %v2775, 7
        %v2777 = vsub.s32 0, %v2776
        %v2778 = vrot.slane %v1307, %v2777
        %2780 = vmatprep.subr.mxu0 0.0
        %2781 = vmatpush1.xpose.msra.mxu0 %v1291
        %2782 = vmatprep.subr.mxu0 0.0
        %2783 = vmatpush1.xpose.msra.mxu0 %v1292
        %2784 = vmatprep.subr.mxu0 0.0
        %2785 = vmatpush1.xpose.msra.mxu0 %v1293
        %2786 = vmatprep.subr.mxu0 0.0
        %2787 = vmatpush1.xpose.msra.mxu0 %v1294
        %2788 = vmatprep.subr.mxu0 0.0
        %2789 = vmatpush1.xpose.msra.mxu0 %v1295
        %2790 = vmatprep.subr.mxu0 0.0
        %2791 = vmatpush1.xpose.msra.mxu0 %v1296
        %2792 = vmatprep.subr.mxu0 0.0
        %2793 = vmatpush1.xpose.msra.mxu0 %v1297
        %2794 = vmatprep.subr.mxu0 0.0
        %2795 = vmatpush1.xpose.msra.mxu0 %v1298
        %2796 = vmatprep.subr.mxu0 0.0
        %2797 = vmatpush1.xpose.msra.mxu0 %v1299
        %2798 = vmatprep.subr.mxu0 0.0
        %2799 = vmatpush1.xpose.msra.mxu0 %v1300
        %2800 = vmatprep.subr.mxu0 0.0
        %2801 = vmatpush1.xpose.msra.mxu0 %v1301
        %2802 = vmatprep.subr.mxu0 0.0
        %2803 = vmatpush1.xpose.msra.mxu0 %v1302
        %2804 = vmatprep.subr.mxu0 0.0
        %2805 = vmatpush1.xpose.msra.mxu0 %v1303
        %2806 = vmatprep.subr.mxu0 0.0
        %2807 = vmatpush1.xpose.msra.mxu0 %v1304
        %2808 = vmatprep.subr.mxu0 0.0
        %2809 = vmatpush1.xpose.msra.mxu0 %v1305
        %2810 = vmatprep.subr.mxu0 0.0
        %2811 = vmatpush1.xpose.msra.mxu0 %v1306
        %2812 = vmatprep.subr.mxu0 0.0
        %2813 = vmatpush1.xpose.msra.mxu0 0.0
        %2814 = vmatprep.subr.mxu0 0.0
        %2815 = vmatpush1.xpose.msra.mxu0 0.0
        %2816 = vmatprep.subr.mxu0 0.0
        %2817 = vmatpush1.xpose.msra.mxu0 0.0
        %2818 = vmatprep.subr.mxu0 0.0
        %2819 = vmatpush1.xpose.msra.mxu0 0.0
        %2820 = vmatprep.subr.mxu0 0.0
        %2821 = vmatpush1.xpose.msra.mxu0 0.0
        %2822 = vmatprep.subr.mxu0 0.0
        %2823 = vmatpush1.xpose.msra.mxu0 0.0
        %2824 = vmatprep.subr.mxu0 0.0
        %2825 = vmatpush1.xpose.msra.mxu0 0.0
        %2826 = vmatprep.subr.mxu0 0.0
        %2827 = vmatpush1.xpose.msra.mxu0 0.0
        %2828 = vmatprep.subr.mxu0 0.0
        %2829 = vmatpush1.xpose.msra.mxu0 0.0
        %2830 = vmatprep.subr.mxu0 0.0
        %2831 = vmatpush1.xpose.msra.mxu0 0.0
        %2832 = vmatprep.subr.mxu0 0.0
        %2833 = vmatpush1.xpose.msra.mxu0 0.0
        %2834 = vmatprep.subr.mxu0 0.0
        %2835 = vmatpush1.xpose.msra.mxu0 0.0
        %2836 = vmatprep.subr.mxu0 0.0
        %2837 = vmatpush1.xpose.msra.mxu0 0.0
        %2838 = vmatprep.subr.mxu0 0.0
        %2839 = vmatpush1.xpose.msra.mxu0 0.0
        %2840 = vmatprep.subr.mxu0 0.0
        %2841 = vmatpush1.xpose.msra.mxu0 0.0
        %2842 = vmatprep.subr.mxu0 0.0
        %2843 = vmatpush1.xpose.msra.mxu0 0.0
        %2844 = vmatprep.mubr.f32.mxu0 0.0
        %2845 = vmatmul.mubr.f32.gmra.mrb[0].mxu0 %v2771
        %v2846 = vpop.f32.mrb[0].mxu0
        %v2847 = vadd.f32 %v2778, %v2846
        %v2848 = vpop.f32.mrb[0].mxu0
        %2849 = vmatprep.mubr.f32.mxu0 0.0
        %2850 = vmatmul.mubr.f32.gmra.mrb[0].mxu0 %v2773
        %v2851 = vpop.f32.mrb[0].mxu0
        %v2852 = vadd.f32 %v2778, %v2851
        %v2853 = vpop.f32.mrb[0].mxu0
        %2854 = vdwg.mxu0
        %v2855 = vmul.f32 %v2847, %v2340
        %v2856 = vmul.f32 %v2852, %v2413
        %v2857 = vld [vmem:[%s1066] sm:$0xff]
        %v2858 = vld [vmem:[%s1066 + $0x8] sm:$0xff]
        %2860 = vset.pattern.permute.xlu0 0
        %2861 = vperm.xlu0 %2860, %v2857
        %v2862 = vpop.permute.xlu0 %2861
        %2865 = vset.pattern.permute.xlu0 0
        %2866 = vperm.xlu0 %2865, %v2858
        %v2867 = vpop.permute.xlu0 %2866
        %v2869 = vmul.f32 %v2855, %v2862
        %v2870 = vmul.f32 %v2856, %v2867
        %v2871 = vrot.slane %v2869, 4
        %v2872 = vadd.f32 %v2869, %v2871
        %v2873 = vrot.slane %v2872, 2
        %v2874 = vadd.f32 %v2872, %v2873
        %v2875 = vrot.slane %v2874, 1
        %v2876 = vadd.f32 %v2874, %v2875
        %v2877 = vrot.slane %v2870, 4
        %v2878 = vadd.f32 %v2870, %v2877
        %v2879 = vrot.slane %v2878, 2
        %v2880 = vadd.f32 %v2878, %v2879
        %v2881 = vrot.slane %v2880, 1
        %v2882 = vadd.f32 %v2880, %v2881
        %2883 = vmatprep.subr.mxu0 0.0
        %2884 = vmatpush1.xpose.msra.mxu0 %v1324
        %2885 = vmatprep.subr.mxu0 0.0
        %2886 = vmatpush1.xpose.msra.mxu0 %v1325
        %2887 = vmatprep.subr.mxu0 0.0
        %2888 = vmatpush1.xpose.msra.mxu0 %v1326
        %2889 = vmatprep.subr.mxu0 0.0
        %2890 = vmatpush1.xpose.msra.mxu0 %v1327
        %2891 = vmatprep.subr.mxu0 0.0
        %2892 = vmatpush1.xpose.msra.mxu0 %v1328
        %2893 = vmatprep.subr.mxu0 0.0
        %2894 = vmatpush1.xpose.msra.mxu0 %v1329
        %2895 = vmatprep.subr.mxu0 0.0
        %2896 = vmatpush1.xpose.msra.mxu0 %v1330
        %2897 = vmatprep.subr.mxu0 0.0
        %2898 = vmatpush1.xpose.msra.mxu0 %v1331
        %2899 = vmatprep.subr.mxu0 0.0
        %2900 = vmatpush1.xpose.msra.mxu0 %v1332
        %2901 = vmatprep.subr.mxu0 0.0
        %2902 = vmatpush1.xpose.msra.mxu0 %v1333
        %2903 = vmatprep.subr.mxu0 0.0
        %2904 = vmatpush1.xpose.msra.mxu0 %v1334
        %2905 = vmatprep.subr.mxu0 0.0
        %2906 = vmatpush1.xpose.msra.mxu0 %v1335
        %2907 = vmatprep.subr.mxu0 0.0
        %2908 = vmatpush1.xpose.msra.mxu0 %v1336
        %2909 = vmatprep.subr.mxu0 0.0
        %2910 = vmatpush1.xpose.msra.mxu0 %v1337
        %2911 = vmatprep.subr.mxu0 0.0
        %2912 = vmatpush1.xpose.msra.mxu0 %v1338
        %2913 = vmatprep.subr.mxu0 0.0
        %2914 = vmatpush1.xpose.msra.mxu0 %v1339
        %2915 = vmatprep.subr.mxu0 0.0
        %2916 = vmatpush1.xpose.msra.mxu0 0.0
        %2917 = vmatprep.subr.mxu0 0.0
        %2918 = vmatpush1.xpose.msra.mxu0 0.0
        %2919 = vmatprep.subr.mxu0 0.0
        %2920 = vmatpush1.xpose.msra.mxu0 0.0
        %2921 = vmatprep.subr.mxu0 0.0
        %2922 = vmatpush1.xpose.msra.mxu0 0.0
        %2923 = vmatprep.subr.mxu0 0.0
        %2924 = vmatpush1.xpose.msra.mxu0 0.0
        %2925 = vmatprep.subr.mxu0 0.0
        %2926 = vmatpush1.xpose.msra.mxu0 0.0
        %2927 = vmatprep.subr.mxu0 0.0
        %2928 = vmatpush1.xpose.msra.mxu0 0.0
        %2929 = vmatprep.subr.mxu0 0.0
        %2930 = vmatpush1.xpose.msra.mxu0 0.0
        %2931 = vmatprep.subr.mxu0 0.0
        %2932 = vmatpush1.xpose.msra.mxu0 0.0
        %2933 = vmatprep.subr.mxu0 0.0
        %2934 = vmatpush1.xpose.msra.mxu0 0.0
        %2935 = vmatprep.subr.mxu0 0.0
        %2936 = vmatpush1.xpose.msra.mxu0 0.0
        %2937 = vmatprep.subr.mxu0 0.0
        %2938 = vmatpush1.xpose.msra.mxu0 0.0
        %2939 = vmatprep.subr.mxu0 0.0
        %2940 = vmatpush1.xpose.msra.mxu0 0.0
        %2941 = vmatprep.subr.mxu0 0.0
        %2942 = vmatpush1.xpose.msra.mxu0 0.0
        %2943 = vmatprep.subr.mxu0 0.0
        %2944 = vmatpush1.xpose.msra.mxu0 0.0
        %2945 = vmatprep.subr.mxu0 0.0
        %2946 = vmatpush1.xpose.msra.mxu0 0.0
        %2947 = vmatprep.mubr.f32.mxu0 0.0
        %2948 = vmatmul.mubr.f32.gmra.mrb[0].mxu0 %v2574
        %v2949 = vpop.f32.mrb[0].mxu0
        %v2950 = vadd.f32 0.0, %v2949
        %v2951 = vpop.f32.mrb[0].mxu0
        %2952 = vdwg.mxu0
        %v2955 = vsel %vm2573, %v2882, %v2876
        %2957 = vmatprep.subr.mxu0 0.0
        %2958 = vmatpush1.xpose.msra.mxu0 %v1308
        %2959 = vmatprep.subr.mxu0 0.0
        %2960 = vmatpush1.xpose.msra.mxu0 %v1309
        %2961 = vmatprep.subr.mxu0 0.0
        %2962 = vmatpush1.xpose.msra.mxu0 %v1310
        %2963 = vmatprep.subr.mxu0 0.0
        %2964 = vmatpush1.xpose.msra.mxu0 %v1311
        %2965 = vmatprep.subr.mxu0 0.0
        %2966 = vmatpush1.xpose.msra.mxu0 %v1312
        %2967 = vmatprep.subr.mxu0 0.0
        %2968 = vmatpush1.xpose.msra.mxu0 %v1313
        %2969 = vmatprep.subr.mxu0 0.0
        %2970 = vmatpush1.xpose.msra.mxu0 %v1314
        %2971 = vmatprep.subr.mxu0 0.0
        %2972 = vmatpush1.xpose.msra.mxu0 %v1315
        %2973 = vmatprep.subr.mxu0 0.0
        %2974 = vmatpush1.xpose.msra.mxu0 %v1316
        %2975 = vmatprep.subr.mxu0 0.0
        %2976 = vmatpush1.xpose.msra.mxu0 %v1317
        %2977 = vmatprep.subr.mxu0 0.0
        %2978 = vmatpush1.xpose.msra.mxu0 %v1318
        %2979 = vmatprep.subr.mxu0 0.0
        %2980 = vmatpush1.xpose.msra.mxu0 %v1319
        %2981 = vmatprep.subr.mxu0 0.0
        %2982 = vmatpush1.xpose.msra.mxu0 %v1320
        %2983 = vmatprep.subr.mxu0 0.0
        %2984 = vmatpush1.xpose.msra.mxu0 %v1321
        %2985 = vmatprep.subr.mxu0 0.0
        %2986 = vmatpush1.xpose.msra.mxu0 %v1322
        %2987 = vmatprep.subr.mxu0 0.0
        %2988 = vmatpush1.xpose.msra.mxu0 %v1323
        %2989 = vmatprep.subr.mxu0 0.0
        %2990 = vmatpush1.xpose.msra.mxu0 0.0
        %2991 = vmatprep.subr.mxu0 0.0
        %2992 = vmatpush1.xpose.msra.mxu0 0.0
        %2993 = vmatprep.subr.mxu0 0.0
        %2994 = vmatpush1.xpose.msra.mxu0 0.0
        %2995 = vmatprep.subr.mxu0 0.0
        %2996 = vmatpush1.xpose.msra.mxu0 0.0
        %2997 = vmatprep.subr.mxu0 0.0
        %2998 = vmatpush1.xpose.msra.mxu0 0.0
        %2999 = vmatprep.subr.mxu0 0.0
        %3000 = vmatpush1.xpose.msra.mxu0 0.0
        %3001 = vmatprep.subr.mxu0 0.0
        %3002 = vmatpush1.xpose.msra.mxu0 0.0
        %3003 = vmatprep.subr.mxu0 0.0
        %3004 = vmatpush1.xpose.msra.mxu0 0.0
        %3005 = vmatprep.subr.mxu0 0.0
        %3006 = vmatpush1.xpose.msra.mxu0 0.0
        %3007 = vmatprep.subr.mxu0 0.0
        %3008 = vmatpush1.xpose.msra.mxu0 0.0
        %3009 = vmatprep.subr.mxu0 0.0
        %3010 = vmatpush1.xpose.msra.mxu0 0.0
        %3011 = vmatprep.subr.mxu0 0.0
        %3012 = vmatpush1.xpose.msra.mxu0 0.0
        %3013 = vmatprep.subr.mxu0 0.0
        %3014 = vmatpush1.xpose.msra.mxu0 0.0
        %3015 = vmatprep.subr.mxu0 0.0
        %3016 = vmatpush1.xpose.msra.mxu0 0.0
        %3017 = vmatprep.subr.mxu0 0.0
        %3018 = vmatpush1.xpose.msra.mxu0 0.0
        %3019 = vmatprep.subr.mxu0 0.0
        %3020 = vmatpush1.xpose.msra.mxu0 0.0
        %3021 = vmatprep.mubr.f32.mxu0 0.0
        %3022 = vmatmul.mubr.f32.gmra.mrb[0].mxu0 %v2955
        %v3023 = vpop.f32.mrb[0].mxu0
        %v3024 = vadd.f32 %v2950, %v3023
        %v3025 = vpop.f32.mrb[0].mxu0
        %3026 = vdwg.mxu0
        %v3028 = vlaneseq
        %v3029 = vshrl.u32 %v3028, 7
        %v3030 = vsub.s32 0, %v3029
        %v3031 = vrot.slane %v1340, %v3030
        %v3033 = vadd.f32 %v3024, %v3031
        %3034 = vst [vmem:[%s1040] sm:$0xff] %v2340
        %3035 = vst [vmem:[%s1040 + $0x8] sm:$0xff] %v2413
        %v3038 = vunpack.c.l.s4 1966171168
        %v3039 = vunpack.c.0.s8 %v3038
        %v3040 = vlaneseq
        %v3041 = vshrl.u32 %v3040, 7
        %v3042 = vsub.s32 %v3039, %v3041
        %v3043 = vrot.slane %v3033, %v3042
        %v3044 = vcombine.high %v3043, %v3043
        %v3046 = vunpack.c.l.s4 1966171168
        %v3047 = vunpack.c.0.s8 %v3046
        %v3048 = vlaneseq
        %v3049 = vshrl.u32 %v3048, 7
        %v3050 = vsub.s32 %v3047, %v3049
        %v3051 = vrot.slane %v3043, %v3050
        %v3053 = vunpack.c.l.s4 1966171168
        %v3054 = vunpack.c.0.s8 %v3053
        %v3055 = vlaneseq
        %v3056 = vshrl.u32 %v3055, 7
        %v3057 = vsub.s32 %v3054, %v3056
        %v3058 = vrot.slane %v3044, %v3057
        %3061 = vst [vmem:[%s1047] sm:$0x1] %v3051
        %3062 = vst [vmem:[%s1047 + $0x1] sm:$0x1] %v3058
        %s3063 = sand.u32 %s596, 1
        %s3064 = scalar_lea.sflag [#allocation4], %s3063
        %s3065 = sand.u32 %s596, 1
        %s3066 = smul.addr %s3065, 16
        %s3067 = scalar_lea.vmem [#allocation22], %s3066
        %s3068 = sand.u32 %s622, 1
        %s3069 = scalar_lea.sflag [#allocation24], %s3068
        %s3070 = sand.u32 %s622, 1
        %s3071 = smul.addr %s3070, 2
        %s3072 = scalar_lea.vmem [#allocation23], %s3071
        // Predicated region
        $region165: #{tpu_custom_call.1} parent=115 // pred_check
          %p3073 = pneg %p606
        $region166: #{tpu_custom_call.1} parent=115 // pred_check_branch
          %3075 = sbr.rel (%p3073) target = $region168
        $region167: #{tpu_custom_call.1} parent=115 // pred_region
          %s3076 = smul.u32 2, %s54
          %s3078 = ssub.s32 256, 256
          %3079 = vsyncadd %s3064, %s3078
          %s3080 = smul.addr %s3076, 128
          %s3081 = scalar_lea.hbm %s24, %s3080
          %s3082 = sshll.u32 %s3067, 4
          %s3083 = int_to_ptr.vmem [resolvable:$true] %s3082
          %3088 = dma.vmem_to_hbm [thread:$0]  %s3083, 256, %s3081, %s3064, 128, 128, 8
        $region168: #{tpu_custom_call.1} parent=115 // pred_fallthru
          _
        // Predicated region
        $region169: #{tpu_custom_call.1} parent=115 // pred_check
          %p3089 = pneg %p632
        $region170: #{tpu_custom_call.1} parent=115 // pred_check_branch
          %3091 = sbr.rel (%p3089) target = $region172
        $region171: #{tpu_custom_call.1} parent=115 // pred_region
          %s3092 = smul.u32 2, %s54
          %s3094 = ssub.s32 32, 32
          %3095 = vsyncadd %s3069, %s3094
          %s3096 = smul.addr %s3092, 16
          %s3097 = scalar_lea.hbm %s25, %s3096
          %s3098 = sshll.u32 %s3072, 4
          %s3099 = int_to_ptr.vmem [resolvable:$true] %s3098
          %3104 = dma.vmem_to_hbm [thread:$0]  %s3099, 32, %s3097, %s3069, 16, 16, 1
        $region172: #{tpu_custom_call.1} parent=115 // pred_fallthru
          _
      $region116: #{tpu_custom_call.1} parent=5 // pred_fallthru
        _
      %p3105 = scmp.le.s32.totalorder 2, %s49
      // Predicated region
      $region173: #{tpu_custom_call.1} parent=5 // pred_check
        %p3106 = pneg %p3105
      $region174: #{tpu_custom_call.1} parent=5 // pred_check_branch
        %3108 = sbr.rel (%p3106) target = $region176
      $region175: #{tpu_custom_call.1} parent=5 // pred_region
        %s3109 = ssub.s32 %s49, 2
        // Predicated region
        $region177: #{tpu_custom_call.1} parent=175 // pred_check
          %p3110 = pneg %p612
        $region178: #{tpu_custom_call.1} parent=175 // pred_check_branch
          %3112 = sbr.rel (%p3110) target = $region180
        $region179: #{tpu_custom_call.1} parent=175 // pred_region
          %s3113 = sand.u32 %s597, 1
          %s3114 = scalar_lea.sflag [#allocation4], %s3113
          %s3115 = sand.u32 %s597, 1
          %s3116 = smul.addr %s3115, 16
          %s3117 = scalar_lea.vmem [#allocation22], %s3116
          %3118 = dma.done %s3114, 256
        $region180: #{tpu_custom_call.1} parent=175 // pred_fallthru
          _
        // Predicated region
        $region181: #{tpu_custom_call.1} parent=175 // pred_check
          %p3119 = pneg %p638
        $region182: #{tpu_custom_call.1} parent=175 // pred_check_branch
          %3121 = sbr.rel (%p3119) target = $region184
        $region183: #{tpu_custom_call.1} parent=175 // pred_region
          %s3122 = sand.u32 %s623, 1
          %s3123 = scalar_lea.sflag [#allocation24], %s3122
          %s3124 = sand.u32 %s623, 1
          %s3125 = smul.addr %s3124, 2
          %s3126 = scalar_lea.vmem [#allocation23], %s3125
          %3127 = dma.done %s3123, 32
        $region184: #{tpu_custom_call.1} parent=175 // pred_fallthru
          _
      $region176: #{tpu_custom_call.1} parent=5 // pred_fallthru
        _
    $region6: #{tpu_custom_call.1} parent=1 // loop_footer
      %s53 = sadd.s32 1, %s49
    $region7: #{tpu_custom_call.1} parent=1 // loop_footer_branch
      %48 = sbr.rel target = $region3
    $region8: #{tpu_custom_call.1} parent=1 // loop_exit
      _
    %3128 = vsyncpa [#allocation3], 1
    %s3129 = scalar_lea.sflag [#allocation3], 1
    %3130 = vsyncpa %s3129, 1
    %3131 = vsyncpa [#allocation6], 1
    %s3132 = scalar_lea.sflag [#allocation6], 1
    %3133 = vsyncpa %s3132, 1
    %3134 = vsyncpa [#allocation9], 1
    %3135 = vsyncpa [#allocation12], 1
    %3136 = vsyncpa [#allocation15], 1
    %3137 = vsyncpa [#allocation18], 1
    %3138 = vsyncpa [#allocation21], 1
    %3139 = vsyncpa [#allocation4], 1
    %s3140 = scalar_lea.sflag [#allocation4], 1
    %3141 = vsyncpa %s3140, 1
    %3142 = vsyncpa [#allocation24], 1
    %s3143 = scalar_lea.sflag [#allocation24], 1
    %3144 = vsyncpa %s3143, 1

</llo_original>
